<compile_context>
chip_gen: v7x
topology: tpu7x:2x2x1
jax: 0.10.0
libtpu: 0.0.40
codegen_flags: <defaults>
</compile_context>

<pallas_src>
import functools
import math

import jax
import jax.numpy as jnp
from jax.experimental import pallas as pl
from jax.experimental.pallas import tpu as pltpu


def _vmem_capacity_bytes():
    """Per-core VMEM capacity (v7x: 64 MiB, v5e/v6e: 128 MiB); conservative fallback."""
    try:
        return int(pltpu.get_tpu_info().vmem_capacity_bytes)
    except Exception:
        return 64 * 1024 * 1024


def _choose_batch_tile(B, ns, no, cost_r, cost_c, E, cap):
    """Batch elements per grid step: push the flattened matmul M-dim toward the MXU
    granule, keep >=2 grid steps (v7x: two TensorCores), fit comfortably in VMEM
    (double-buffered blocks) and bound the in-kernel unroll."""
    per_b = 4 * (ns * E + no * E + cost_r * cost_c + ns * E)   # f32 bytes / batch element
    bt = max(1, 256 // max(ns, 1))
    bt = min(bt, 8, B)                                          # bound trace-time unroll
    budget = max(per_b, cap // 4)                               # blocks get ~1/4 of VMEM
    while bt > 1 and 2 * bt * per_b > budget:
        bt //= 2
    if B >= 2:
        bt = min(bt, B // 2)                                    # >=2 parallel grid steps
    bt = max(bt, 1)
    while B % bt != 0:                                          # clean tiling
        bt -= 1
    return bt


def _matnet_block_kernel(x1_ref, x2_ref, cost_ref, w_in_ref, mix_ref,
                         w_mid_ref, w_out_ref, vecs_ref, b1_ref,
                         out_ref, oc_ref,
                         *, head_num, ms_hidden, transpose_cost):
    """One MatNetBlock forward for Bt batch elements (one grid step).

    x1_ref:   [Bt, ns, E]  "self" embeddings (queries / residual stream)
    x2_ref:   [Bt, no, E]  "other" embeddings (keys / values)
    cost_ref: [Bt, r0, c0] original cost slice (transposed in-kernel if transpose_cost)
    w_in_ref: [E, 3E]  bf16  [Wq^T | Wk^T | Wv^T]
    mix_ref:  [H, 4M]  f32 SMEM table: [w1_dot*(1/sqrt(D)) | w1_cost | b1 | w2]
    w_mid_ref:[E, E+F] bf16  [Wmhc^T | W1^T]
    w_out_ref:[F, E]   bf16  W2^T
    vecs_ref: [6, E]   f32 rows: b_mhc, b2_ffn, gamma1, beta1, gamma2, beta2
    b1_ref:   [1, F]   f32 FFN hidden bias
    out_ref:  [Bt, ns, E]
    oc_ref:   [Bt*ns, E] f32 VMEM scratch (per-head outputs at lane offsets h*D)
    """
    f32, bf16 = jnp.float32, jnp.bfloat16
    Bt, ns, E = x1_ref.shape
    no = x2_ref.shape[1]
    H, M = head_num, ms_hidden
    D = E // H
    rows_s = Bt * ns
    rows_o = Bt * no

    # --- fused projections on flattened rows (big-M MXU matmuls, bf16 operands) --------
    x1 = x1_ref[...].reshape(rows_s, E)                          # f32 (residual stream)
    x2 = x2_ref[...].reshape(rows_o, E)
    q = jnp.dot(x1.astype(bf16), w_in_ref[:, :E], preferred_element_type=f32)  # [rows_s,E]
    kv = jnp.dot(x2.astype(bf16), w_in_ref[:, E:], preferred_element_type=f32)  # [rows_o,2E]

    # --- per batch element: mixed-score MLP (SMEM scalars) + softmax + weights @ V -----
    for bi in range(Bt):
        cost_b = cost_ref[bi]                                    # [r0, c0] f32
        if transpose_cost:
            cost_b = cost_b.T                                    # col block: cost^T, in-kernel
        q_b = q[bi * ns:(bi + 1) * ns, :].astype(bf16)           # [ns, E]
        k_bt = kv[bi * no:(bi + 1) * no, :E].T.astype(bf16)      # [E, no] one transpose / b
        v_b = kv[bi * no:(bi + 1) * no, E:].astype(bf16)         # [no, E]
        for h in range(H):                                       # H small & static -> unrolled
            dot = jnp.dot(q_b[:, h * D:(h + 1) * D], k_bt[h * D:(h + 1) * D, :],
                          preferred_element_type=f32)            # [ns, no]; 1/sqrt(D) in mix
            score = jnp.zeros((ns, no), f32)
            for m in range(M):
                hid = jnp.maximum(dot * mix_ref[h, m]
                                  + cost_b * mix_ref[h, M + m]
                                  + mix_ref[h, 2 * M + m], 0.0)
                score = score + hid * mix_ref[h, 3 * M + m]
            # mix2 bias dropped: softmax is shift-invariant per row.
            mx = jnp.max(score, axis=-1, keepdims=True)
            e = jnp.exp(score - mx)
            denom = jnp.sum(e, axis=-1, keepdims=True)
            inv = pl.reciprocal(denom, approx=True)              # EUP seed
            inv = inv * (2.0 - denom * inv)                      # one Newton step
            w = (e * inv).astype(bf16)
            oc_ref[bi * ns:(bi + 1) * ns, h * D:(h + 1) * D] = jnp.dot(
                w, v_b[:, h * D:(h + 1) * D], preferred_element_type=f32)

    # --- multi_head_combine + TransformerFFN (instance norm over the seq axis) ---------
    b_mhc, b2_ff = vecs_ref[0:1, :], vecs_ref[1:2, :]
    gamma1, beta1 = vecs_ref[2:3, :], vecs_ref[3:4, :]
    gamma2, beta2 = vecs_ref[4:5, :], vecs_ref[5:6, :]

    # TODO(synk): Normalization class body not in the spec; implemented as rl4co's
    # 'instance' norm = affine InstanceNorm1d over the sequence axis (eps=1e-5, biased var).
    def inst_norm(x3, gamma, beta):                              # x3: [Bt, ns, E]
        mean = jnp.sum(x3, axis=1, keepdims=True) * (1.0 / ns)
        cen = x3 - mean
        var = jnp.sum(cen * cen, axis=1, keepdims=True) * (1.0 / ns)
        return cen * jax.lax.rsqrt(var + 1e-5) * gamma + beta

    mho = jnp.dot(oc_ref[...].astype(bf16), w_mid_ref[:, :E],
                  preferred_element_type=f32) + b_mhc            # [rows_s, E]
    n1 = inst_norm((x1 + mho).reshape(Bt, ns, E), gamma1, beta1).reshape(rows_s, E)
    hid_ff = jnp.maximum(
        jnp.dot(n1.astype(bf16), w_mid_ref[:, E:], preferred_element_type=f32)
        + b1_ref[...], 0.0)                                      # [rows_s, F]
    ffn = jnp.dot(hid_ff.astype(bf16), w_out_ref[...], preferred_element_type=f32) + b2_ff
    out_ref[...] = inst_norm((n1 + ffn).reshape(Bt, ns, E), gamma2, beta2)


def _pack_block_params(p, head_dim):
    """Parameter re-layout (done ONCE, outside the jitted forward): fuse/transpose
    weights into bf16 slabs, fold 1/sqrt(head_dim) into the mix1 dot coefficients."""
    bf16 = jnp.bfloat16
    w_in = jnp.concatenate([p["Wq"].T, p["Wk"].T, p["Wv"].T], axis=1).astype(bf16)  # [E,3E]
    mix = jnp.concatenate([
        p["mix1_weight"][:, 0, :] * (1.0 / math.sqrt(head_dim)),  # dot coeffs (scale folded)
        p["mix1_weight"][:, 1, :],                                # cost coeffs
        p["mix1_bias"],                                           # hidden bias
        p["mix2_weight"][:, :, 0],                                # output coeffs
    ], axis=1).astype(jnp.float32)                                # [H, 4M]; mix2 bias dropped
    w_mid = jnp.concatenate([p["Wmhc"].T, p["W1"].T], axis=1).astype(bf16)          # [E,E+F]
    w_out = p["W2"].T.astype(bf16)                                                  # [F, E]
    vecs = jnp.stack([p["b_mhc"], p["b2"], p["gamma1"], p["beta1"],
                      p["gamma2"], p["beta2"]], axis=0).astype(jnp.float32)         # [6, E]
    b1 = p["b1"][None, :].astype(jnp.float32)                                       # [1, F]
    return {"w_in": w_in, "mix": mix, "w_mid": w_mid, "w_out": w_out,
            "vecs": vecs, "b1": b1}


def pack_layer_params(params, head_num):
    E = params["row"]["Wq"].shape[0]
    assert E % head_num == 0, "embed_dim must be divisible by head_num"
    D = E // head_num
    return {"row": _pack_block_params(params["row"], D),
            "col": _pack_block_params(params["col"], D)}


def matnet_block_forward(packed, x_self, x_other, cost_mat, head_num, *, transpose_cost):
    """One MatNetBlock (MHA + combine + FFN + 2 instance norms) as a single pallas_call."""
    B, ns, E = x_self.shape
    no = x_other.shape[1]
    cr, cc = cost_mat.shape[1], cost_mat.shape[2]
    assert E % head_num == 0, "embed_dim must be divisible by head_num"

    w_in, mix = packed["w_in"], packed["mix"]
    w_mid, w_out = packed["w_mid"], packed["w_out"]
    vecs, b1 = packed["vecs"], packed["b1"]
    M = mix.shape[1] // 4
    F = w_out.shape[0]
    D = E // head_num

    cap = _vmem_capacity_bytes()
    Bt = _choose_batch_tile(B, ns, no, cr, cc, E, cap)
    nsteps = B // Bt

    kern = functools.partial(_matnet_block_kernel, head_num=head_num,
                             ms_hidden=M, transpose_cost=transpose_cost)

    whole_vmem = pl.BlockSpec(memory_space=pltpu.MemorySpace.VMEM)
    whole_smem = pl.BlockSpec(memory_space=pltpu.MemorySpace.SMEM)

    flops = 2 * B * (ns * E * E + no * E * 2 * E          # fused projections
                     + head_num * 2 * ns * no * D         # per-head scores + weights@V
                     + ns * E * E                         # multi_head_combine
                     + 2 * ns * E * F)                    # FFN
    transcendentals = B * (head_num * ns * (no + 1) + 4 * ns * E)
    bytes_accessed = int(sum(int(a.size) * a.dtype.itemsize for a in
                             (x_self, x_other, cost_mat, w_in, mix, w_mid, w_out, vecs, b1))
                         + 4 * B * ns * E)

    block_bytes = 4 * Bt * (ns * E + no * E + cr * cc + ns * E)
    weight_bytes = int(sum(int(a.size) * a.dtype.itemsize
                           for a in (w_in, w_mid, w_out, vecs, b1)))
    scratch_bytes = 4 * Bt * ns * E
    vmem_need = 2 * block_bytes + 2 * weight_bytes + scratch_bytes
    vmem_limit = int(min(cap, max(32 << 20, vmem_need + (8 << 20))))

    return pl.pallas_call(
        kern,
        out_shape=jax.ShapeDtypeStruct((B, ns, E), jnp.float32),
        grid=(nsteps,),
        in_specs=[
            pl.BlockSpec((Bt, ns, E), lambda i: (i, 0, 0)),   # x_self
            pl.BlockSpec((Bt, no, E), lambda i: (i, 0, 0)),   # x_other
            pl.BlockSpec((Bt, cr, cc), lambda i: (i, 0, 0)),  # cost (untransposed)
            whole_vmem,                                       # w_in  [E, 3E] bf16
            whole_smem,                                       # mix   [H, 4M] scalar table
            whole_vmem,                                       # w_mid [E, E+F] bf16
            whole_vmem,                                       # w_out [F, E] bf16
            whole_vmem,                                       # vecs  [6, E]
            whole_vmem,                                       # b1    [1, F]
        ],
        out_specs=pl.BlockSpec((Bt, ns, E), lambda i: (i, 0, 0)),
        scratch_shapes=[pltpu.VMEM((Bt * ns, E), jnp.float32)],
        compiler_params=pltpu.CompilerParams(
            dimension_semantics=("parallel",),
            vmem_limit_bytes=vmem_limit),
        cost_estimate=pl.CostEstimate(flops=flops, transcendentals=transcendentals,
                                      bytes_accessed=bytes_accessed),
    )(x_self, x_other, cost_mat, w_in, mix, w_mid, w_out, vecs, b1)


@functools.partial(jax.jit, static_argnames=("head_num",))
def matnet_layer_forward(packed, row_emb, col_emb, cost_mat, head_num):
    row_out = matnet_block_forward(packed["row"], row_emb, col_emb, cost_mat,
                                   head_num, transpose_cost=False)
    # col block gets the UNtransposed cost matrix; the [r, c] tile is transposed in-kernel.
    col_out = matnet_block_forward(packed["col"], col_emb, row_emb, cost_mat,
                                   head_num, transpose_cost=True)
    return row_out, col_out


def init_params(key, embed_dim, head_num, ms_hidden_dim, ff_hidden):
    """Deterministic init with the torch module's weight shapes/ranges."""
    E, H, M, F = embed_dim, head_num, ms_hidden_dim, ff_hidden

    def uni(k, shape, bound):
        return jax.random.uniform(k, shape, jnp.float32, -bound, bound)

    def block_params(k):
        ks = jax.random.split(k, 17)
        lb = 1.0 / math.sqrt(E)
        fb = 1.0 / math.sqrt(F)
        m1 = math.sqrt(0.5)
        m2 = math.sqrt(1.0 / 16.0)
        return {
            "Wq": uni(ks[0], (E, E), lb),
            "Wk": uni(ks[1], (E, E), lb),
            "Wv": uni(ks[2], (E, E), lb),
            "mix1_weight": uni(ks[3], (H, 2, M), m1),
            "mix1_bias": uni(ks[4], (H, M), m1),
            "mix2_weight": uni(ks[5], (H, M, 1), m2),
            "mix2_bias": uni(ks[6], (H, 1), m2),
            "Wmhc": uni(ks[7], (E, E), lb),
            "b_mhc": uni(ks[8], (E,), lb),
            "W1": uni(ks[9], (F, E), lb),
            "b1": uni(ks[10], (F,), lb),
            "W2": uni(ks[11], (E, F), fb),
            "b2": uni(ks[12], (E,), fb),
            "gamma1": 1.0 + 0.1 * jax.random.normal(ks[13], (E,), jnp.float32),
            "beta1": 0.1 * jax.random.normal(ks[14], (E,), jnp.float32),
            "gamma2": 1.0 + 0.1 * jax.random.normal(ks[15], (E,), jnp.float32),
            "beta2": 0.1 * jax.random.normal(ks[16], (E,), jnp.float32),
        }

    kr, kc = jax.random.split(key)
    return {"row": block_params(kr), "col": block_params(kc)}


# ------------------------- pure-JAX reference (validation only) -------------------------
def _mha_reference(p, row_emb, col_emb, cost_mat, H):
    B, r, E = row_emb.shape
    c = col_emb.shape[1]
    D = E // H

    def heads(x):  # rearrange '... g (h s) -> ... h g s'
        b, g, _ = x.shape
        return jnp.transpose(x.reshape(b, g, H, D), (0, 2, 1, 3))

    q = heads(row_emb @ p["Wq"].T)
    k = heads(col_emb @ p["Wk"].T)
    v = heads(col_emb @ p["Wv"].T)
    dot = jnp.einsum('bhrd,bhcd->bhrc', q, k) / math.sqrt(D)
    cost = jnp.broadcast_to(cost_mat[:, None], (B, H, r, c))
    two = jnp.stack([dot, cost], axis=4)                  # [B,H,r,c,2]
    two_t = jnp.swapaxes(two, 1, 2)                       # [B,r,H,c,2]
    ms1 = jnp.einsum('brhct,htm->brhcm', two_t, p["mix1_weight"])
    ms1 = jnp.maximum(ms1 + p["mix1_bias"][None, None, :, None, :], 0.0)
    ms2 = jnp.einsum('brhcm,hmo->brhco', ms1, p["mix2_weight"])
    ms2 = ms2 + p["mix2_bias"][None, None, :, None, :]
    mixed = jnp.swapaxes(ms2, 1, 2)[..., 0]               # [B,H,r,c]
    w = jax.nn.softmax(mixed, axis=3)
    out = jnp.einsum('bhrc,bhcd->bhrd', w, v)
    return jnp.swapaxes(out, 1, 2).reshape(B, r, E)


def _block_reference(p, x_self, x_other, cost_mat, H):
    oc = _mha_reference(p, x_self, x_other, cost_mat, H)
    mho = oc @ p["Wmhc"].T + p["b_mhc"]

    def inorm(x, gamma, beta):
        mean = x.mean(axis=1, keepdims=True)
        var = x.var(axis=1, keepdims=True)                # biased, like InstanceNorm1d
        return (x - mean) / jnp.sqrt(var + 1e-5) * gamma + beta

    n1 = inorm(x_self + mho, p["gamma1"], p["beta1"])
    ffn = jnp.maximum(n1 @ p["W1"].T + p["b1"], 0.0) @ p["W2"].T + p["b2"]
    return inorm(n1 + ffn, p["gamma2"], p["beta2"])


def matnet_layer_reference(params, row_emb, col_emb, cost_mat, H):
    row_out = _block_reference(params["row"], row_emb, col_emb, cost_mat, H)
    col_out = _block_reference(params["col"], col_emb, row_emb,
                               jnp.swapaxes(cost_mat, 1, 2), H)
    return row_out, col_out


if __name__ == "__main__":
    # Small shapes consistent with the module: embed_dim=32, head_num=4, ms_hidden_dim=4,
    # feedforward_hidden=64, batch=2, row_cnt=8, col_cnt=16.
    B, r, c = 2, 8, 16
    E, H, M, F = 32, 4, 4, 64

    key = jax.random.PRNGKey(0)
    k1, k2, k3, kp = jax.random.split(key, 4)
    row_emb = jax.random.normal(k1, (B, r, E), jnp.float32)
    col_emb = jax.random.normal(k2, (B, c, E), jnp.float32)
    cost_mat = jax.random.uniform(k3, (B, r, c), jnp.float32)
    params = init_params(kp, E, H, M, F)

    # Packing is hoisted: done once here, reused by every forward call.
    packed = pack_layer_params(params, H)

    row_out, col_out = matnet_layer_forward(packed, row_emb, col_emb, cost_mat, head_num=H)
    row_out, col_out = jax.block_until_ready((row_out, col_out))

    with jax.default_matmul_precision("highest"):
        ref_row, ref_col = matnet_layer_reference(params, row_emb, col_emb, cost_mat, H)
        ref_row, ref_col = jax.block_until_ready((ref_row, ref_col))

    assert row_out.shape == (B, r, E) and col_out.shape == (B, c, E)
    # Kernel uses bf16 MXU operands (f32 accumulate) -> compare with bf16-level tolerance.
    assert jnp.allclose(row_out, ref_row, atol=5e-2, rtol=5e-2), "row_emb_out mismatch"
    assert jnp.allclose(col_out, ref_col, atol=5e-2, rtol=5e-2), "col_emb_out mismatch"
    print("KERNEL_OK")
</pallas_src>

<mosaic_0001>
module attributes {stable_mosaic.version = 11 : i64} {
  func.func @_matnet_block_kernel(%arg0: i32, %arg1: memref<1x8x32xf32, #tpu.memory_space<vmem>>, %arg2: memref<1x16x32xf32, #tpu.memory_space<vmem>>, %arg3: memref<1x8x16xf32, #tpu.memory_space<vmem>>, %arg4: memref<32x96xbf16, #tpu.memory_space<vmem>>, %arg5: memref<4x16xf32, #tpu.memory_space<smem>>, %arg6: memref<32x96xbf16, #tpu.memory_space<vmem>>, %arg7: memref<64x32xbf16, #tpu.memory_space<vmem>>, %arg8: memref<6x32xf32, #tpu.memory_space<vmem>>, %arg9: memref<1x64xf32, #tpu.memory_space<vmem>>, %arg10: memref<1x8x32xf32, #tpu.memory_space<vmem>>, %arg11: memref<8x32xf32, #tpu.memory_space<vmem>>) attributes {dimension_semantics = [#tpu.dimension_semantics<parallel>], iteration_bounds = array<i64: 2>, scalar_prefetch = 0 : i64, scratch_operands = 1 : i64, tpu.core_type = #tpu.core_type<tc>, window_params = [{transform_indices = @transform_0, window_bounds = array<i64: 1, 8, 32>}, {transform_indices = @transform_1, window_bounds = array<i64: 1, 16, 32>}, {transform_indices = @transform_2, window_bounds = array<i64: 1, 8, 16>}, {pipeline_mode = #tpu.pipeline_mode<synchronous>, transform_indices = @transform_3, window_bounds = array<i64: 32, 96>}, {transform_indices = @transform_4, window_bounds = array<i64: 4, 16>}, {pipeline_mode = #tpu.pipeline_mode<synchronous>, transform_indices = @transform_5, window_bounds = array<i64: 32, 96>}, {pipeline_mode = #tpu.pipeline_mode<synchronous>, transform_indices = @transform_6, window_bounds = array<i64: 64, 32>}, {pipeline_mode = #tpu.pipeline_mode<synchronous>, transform_indices = @transform_7, window_bounds = array<i64: 6, 32>}, {pipeline_mode = #tpu.pipeline_mode<synchronous>, transform_indices = @transform_8, window_bounds = array<i64: 1, 64>}, {transform_indices = @transform_9, window_bounds = array<i64: 1, 8, 32>}]} {
    %c0 = arith.constant 0 : index
    %c0_0 = arith.constant 0 : index
    %c0_1 = arith.constant 0 : index
    %0 = vector.load %arg1[%c0, %c0_0, %c0_1] : memref<1x8x32xf32, #tpu.memory_space<vmem>>, vector<1x8x32xf32>
    %1 = vector.shape_cast %0 : vector<1x8x32xf32> to vector<8x32xf32>
    %c0_2 = arith.constant 0 : index
    %c0_3 = arith.constant 0 : index
    %c0_4 = arith.constant 0 : index
    %2 = vector.load %arg2[%c0_2, %c0_3, %c0_4] : memref<1x16x32xf32, #tpu.memory_space<vmem>>, vector<1x16x32xf32>
    %3 = vector.shape_cast %2 : vector<1x16x32xf32> to vector<16x32xf32>
    %4 = arith.truncf %1 : vector<8x32xf32> to vector<8x32xbf16>
    %c0_5 = arith.constant 0 : index
    %c0_6 = arith.constant 0 : index
    %5 = vector.load %arg4[%c0_5, %c0_6] : memref<32x96xbf16, #tpu.memory_space<vmem>>, vector<32x32xbf16>
    %cst = arith.constant dense<0.000000e+00> : vector<8x32xf32>
    %6 = tpu.matmul %4, %5, %cst {dimension_numbers = #tpu.dot_dimension_numbers<[1], [0], [0], [1], [0, 0, 1, 1], [], []>} : vector<8x32xbf16>, vector<32x32xbf16>, vector<8x32xf32> -> vector<8x32xf32>
    %7 = arith.truncf %3 : vector<16x32xf32> to vector<16x32xbf16>
    %c0_7 = arith.constant 0 : index
    %c32 = arith.constant 32 : index
    %8 = vector.load %arg4[%c0_7, %c32] : memref<32x96xbf16, #tpu.memory_space<vmem>>, vector<32x64xbf16>
    %cst_8 = arith.constant dense<0.000000e+00> : vector<16x64xf32>
    %9 = tpu.matmul %7, %8, %cst_8 {dimension_numbers = #tpu.dot_dimension_numbers<[1], [0], [0], [1], [0, 0, 1, 1], [], []>} : vector<16x32xbf16>, vector<32x64xbf16>, vector<16x64xf32> -> vector<16x64xf32>
    %c0_9 = arith.constant 0 : index
    %c0_10 = arith.constant 0 : index
    %c0_11 = arith.constant 0 : index
    %10 = vector.load %arg3[%c0_9, %c0_10, %c0_11] : memref<1x8x16xf32, #tpu.memory_space<vmem>>, vector<1x8x16xf32>
    %11 = vector.shape_cast %10 : vector<1x8x16xf32> to vector<8x16xf32>
    %12 = arith.truncf %6 : vector<8x32xf32> to vector<8x32xbf16>
    %13 = vector.extract_strided_slice %9 {offsets = [0, 0], sizes = [16, 32], strides = [1, 1]} : vector<16x64xf32> to vector<16x32xf32>
    %14 = tpu.transpose %13, [1, 0] : vector<16x32xf32> -> vector<32x16xf32>
    %15 = arith.truncf %14 : vector<32x16xf32> to vector<32x16xbf16>
    %16 = vector.extract_strided_slice %9 {offsets = [0, 32], sizes = [16, 32], strides = [1, 1]} : vector<16x64xf32> to vector<16x32xf32>
    %17 = arith.truncf %16 : vector<16x32xf32> to vector<16x32xbf16>
    %18 = vector.extract_strided_slice %12 {offsets = [0, 0], sizes = [8, 8], strides = [1, 1]} : vector<8x32xbf16> to vector<8x8xbf16>
    %19 = vector.extract_strided_slice %15 {offsets = [0, 0], sizes = [8, 16], strides = [1, 1]} : vector<32x16xbf16> to vector<8x16xbf16>
    %cst_12 = arith.constant dense<0.000000e+00> : vector<8x16xf32>
    %20 = tpu.matmul %18, %19, %cst_12 {dimension_numbers = #tpu.dot_dimension_numbers<[1], [0], [0], [1], [0, 0, 1, 1], [], []>} : vector<8x8xbf16>, vector<8x16xbf16>, vector<8x16xf32> -> vector<8x16xf32>
    %cst_13 = arith.constant 0.000000e+00 : f32
    %21 = vector.broadcast %cst_13 : f32 to vector<8x16xf32>
    %c0_14 = arith.constant 0 : index
    %c0_15 = arith.constant 0 : index
    %22 = memref.load %arg5[%c0_14, %c0_15] : memref<4x16xf32, #tpu.memory_space<smem>>
    %23 = vector.broadcast %22 : f32 to vector<8x16xf32>
    %24 = arith.mulf %20, %23 : vector<8x16xf32>
    %c0_16 = arith.constant 0 : index
    %c4 = arith.constant 4 : index
    %25 = memref.load %arg5[%c0_16, %c4] : memref<4x16xf32, #tpu.memory_space<smem>>
    %26 = vector.broadcast %25 : f32 to vector<8x16xf32>
    %27 = arith.mulf %11, %26 : vector<8x16xf32>
    %28 = arith.addf %24, %27 : vector<8x16xf32>
    %c0_17 = arith.constant 0 : index
    %c8 = arith.constant 8 : index
    %29 = memref.load %arg5[%c0_17, %c8] : memref<4x16xf32, #tpu.memory_space<smem>>
    %30 = vector.broadcast %29 : f32 to vector<8x16xf32>
    %31 = arith.addf %28, %30 : vector<8x16xf32>
    %cst_18 = arith.constant 0.000000e+00 : f32
    %32 = vector.broadcast %cst_18 : f32 to vector<8x16xf32>
    %33 = arith.maximumf %31, %32 : vector<8x16xf32>
    %c0_19 = arith.constant 0 : index
    %c12 = arith.constant 12 : index
    %34 = memref.load %arg5[%c0_19, %c12] : memref<4x16xf32, #tpu.memory_space<smem>>
    %35 = vector.broadcast %34 : f32 to vector<8x16xf32>
    %36 = arith.mulf %33, %35 : vector<8x16xf32>
    %37 = arith.addf %21, %36 : vector<8x16xf32>
    %c0_20 = arith.constant 0 : index
    %c1 = arith.constant 1 : index
    %38 = memref.load %arg5[%c0_20, %c1] : memref<4x16xf32, #tpu.memory_space<smem>>
    %39 = vector.broadcast %38 : f32 to vector<8x16xf32>
    %40 = arith.mulf %20, %39 : vector<8x16xf32>
    %c0_21 = arith.constant 0 : index
    %c5 = arith.constant 5 : index
    %41 = memref.load %arg5[%c0_21, %c5] : memref<4x16xf32, #tpu.memory_space<smem>>
    %42 = vector.broadcast %41 : f32 to vector<8x16xf32>
    %43 = arith.mulf %11, %42 : vector<8x16xf32>
    %44 = arith.addf %40, %43 : vector<8x16xf32>
    %c0_22 = arith.constant 0 : index
    %c9 = arith.constant 9 : index
    %45 = memref.load %arg5[%c0_22, %c9] : memref<4x16xf32, #tpu.memory_space<smem>>
    %46 = vector.broadcast %45 : f32 to vector<8x16xf32>
    %47 = arith.addf %44, %46 : vector<8x16xf32>
    %cst_23 = arith.constant 0.000000e+00 : f32
    %48 = vector.broadcast %cst_23 : f32 to vector<8x16xf32>
    %49 = arith.maximumf %47, %48 : vector<8x16xf32>
    %c0_24 = arith.constant 0 : index
    %c13 = arith.constant 13 : index
    %50 = memref.load %arg5[%c0_24, %c13] : memref<4x16xf32, #tpu.memory_space<smem>>
    %51 = vector.broadcast %50 : f32 to vector<8x16xf32>
    %52 = arith.mulf %49, %51 : vector<8x16xf32>
    %53 = arith.addf %37, %52 : vector<8x16xf32>
    %c0_25 = arith.constant 0 : index
    %c2 = arith.constant 2 : index
    %54 = memref.load %arg5[%c0_25, %c2] : memref<4x16xf32, #tpu.memory_space<smem>>
    %55 = vector.broadcast %54 : f32 to vector<8x16xf32>
    %56 = arith.mulf %20, %55 : vector<8x16xf32>
    %c0_26 = arith.constant 0 : index
    %c6 = arith.constant 6 : index
    %57 = memref.load %arg5[%c0_26, %c6] : memref<4x16xf32, #tpu.memory_space<smem>>
    %58 = vector.broadcast %57 : f32 to vector<8x16xf32>
    %59 = arith.mulf %11, %58 : vector<8x16xf32>
    %60 = arith.addf %56, %59 : vector<8x16xf32>
    %c0_27 = arith.constant 0 : index
    %c10 = arith.constant 10 : index
    %61 = memref.load %arg5[%c0_27, %c10] : memref<4x16xf32, #tpu.memory_space<smem>>
    %62 = vector.broadcast %61 : f32 to vector<8x16xf32>
    %63 = arith.addf %60, %62 : vector<8x16xf32>
    %cst_28 = arith.constant 0.000000e+00 : f32
    %64 = vector.broadcast %cst_28 : f32 to vector<8x16xf32>
    %65 = arith.maximumf %63, %64 : vector<8x16xf32>
    %c0_29 = arith.constant 0 : index
    %c14 = arith.constant 14 : index
    %66 = memref.load %arg5[%c0_29, %c14] : memref<4x16xf32, #tpu.memory_space<smem>>
    %67 = vector.broadcast %66 : f32 to vector<8x16xf32>
    %68 = arith.mulf %65, %67 : vector<8x16xf32>
    %69 = arith.addf %53, %68 : vector<8x16xf32>
    %c0_30 = arith.constant 0 : index
    %c3 = arith.constant 3 : index
    %70 = memref.load %arg5[%c0_30, %c3] : memref<4x16xf32, #tpu.memory_space<smem>>
    %71 = vector.broadcast %70 : f32 to vector<8x16xf32>
    %72 = arith.mulf %20, %71 : vector<8x16xf32>
    %c0_31 = arith.constant 0 : index
    %c7 = arith.constant 7 : index
    %73 = memref.load %arg5[%c0_31, %c7] : memref<4x16xf32, #tpu.memory_space<smem>>
    %74 = vector.broadcast %73 : f32 to vector<8x16xf32>
    %75 = arith.mulf %11, %74 : vector<8x16xf32>
    %76 = arith.addf %72, %75 : vector<8x16xf32>
    %c0_32 = arith.constant 0 : index
    %c11 = arith.constant 11 : index
    %77 = memref.load %arg5[%c0_32, %c11] : memref<4x16xf32, #tpu.memory_space<smem>>
    %78 = vector.broadcast %77 : f32 to vector<8x16xf32>
    %79 = arith.addf %76, %78 : vector<8x16xf32>
    %cst_33 = arith.constant 0.000000e+00 : f32
    %80 = vector.broadcast %cst_33 : f32 to vector<8x16xf32>
    %81 = arith.maximumf %79, %80 : vector<8x16xf32>
    %c0_34 = arith.constant 0 : index
    %c15 = arith.constant 15 : index
    %82 = memref.load %arg5[%c0_34, %c15] : memref<4x16xf32, #tpu.memory_space<smem>>
    %83 = vector.broadcast %82 : f32 to vector<8x16xf32>
    %84 = arith.mulf %81, %83 : vector<8x16xf32>
    %85 = arith.addf %69, %84 : vector<8x16xf32>
    %cst_35 = arith.constant dense<0xFF800000> : vector<8xf32>
    %86 = vector.multi_reduction <maximumf>, %85, %cst_35 [1] : vector<8x16xf32> to vector<8xf32>
    %87 = vector.shape_cast %86 : vector<8xf32> to vector<8x1xf32>
    %88 = vector.broadcast %87 : vector<8x1xf32> to vector<8x16xf32>
    %89 = arith.subf %85, %88 : vector<8x16xf32>
    %90 = math.exp %89 : vector<8x16xf32>
    %cst_36 = arith.constant dense<0.000000e+00> : vector<8xf32>
    %91 = vector.multi_reduction <add>, %90, %cst_36 [1] : vector<8x16xf32> to vector<8xf32>
    %92 = vector.shape_cast %91 : vector<8xf32> to vector<8x1xf32>
    %93 = tpu.reciprocal %92 {approx = true} : vector<8x1xf32> -> vector<8x1xf32>
    %94 = arith.mulf %92, %93 : vector<8x1xf32>
    %cst_37 = arith.constant 2.000000e+00 : f32
    %95 = vector.broadcast %cst_37 : f32 to vector<8x1xf32>
    %96 = arith.subf %95, %94 : vector<8x1xf32>
    %97 = arith.mulf %93, %96 : vector<8x1xf32>
    %98 = vector.broadcast %97 : vector<8x1xf32> to vector<8x16xf32>
    %99 = arith.mulf %90, %98 : vector<8x16xf32>
    %100 = arith.truncf %99 : vector<8x16xf32> to vector<8x16xbf16>
    %101 = vector.extract_strided_slice %17 {offsets = [0, 0], sizes = [16, 8], strides = [1, 1]} : vector<16x32xbf16> to vector<16x8xbf16>
    %cst_38 = arith.constant dense<0.000000e+00> : vector<8x8xf32>
    %102 = tpu.matmul %100, %101, %cst_38 {dimension_numbers = #tpu.dot_dimension_numbers<[1], [0], [0], [1], [0, 0, 1, 1], [], []>} : vector<8x16xbf16>, vector<16x8xbf16>, vector<8x8xf32> -> vector<8x8xf32>
    %c0_39 = arith.constant 0 : index
    %c0_40 = arith.constant 0 : index
    %103 = vector.load %arg11[%c0_39, %c0_40] : memref<8x32xf32, #tpu.memory_space<vmem>>, vector<8x8xf32>
    tpu.vector_store %arg11[%c0_39, %c0_40], %102 {strides = array<i32>} : memref<8x32xf32, #tpu.memory_space<vmem>>, vector<8x8xf32>,
    %104 = vector.extract_strided_slice %12 {offsets = [0, 8], sizes = [8, 8], strides = [1, 1]} : vector<8x32xbf16> to vector<8x8xbf16>
    %105 = vector.extract_strided_slice %15 {offsets = [8, 0], sizes = [8, 16], strides = [1, 1]} : vector<32x16xbf16> to vector<8x16xbf16>
    %cst_41 = arith.constant dense<0.000000e+00> : vector<8x16xf32>
    %106 = tpu.matmul %104, %105, %cst_41 {dimension_numbers = #tpu.dot_dimension_numbers<[1], [0], [0], [1], [0, 0, 1, 1], [], []>} : vector<8x8xbf16>, vector<8x16xbf16>, vector<8x16xf32> -> vector<8x16xf32>
    %cst_42 = arith.constant 0.000000e+00 : f32
    %107 = vector.broadcast %cst_42 : f32 to vector<8x16xf32>
    %c1_43 = arith.constant 1 : index
    %c0_44 = arith.constant 0 : index
    %108 = memref.load %arg5[%c1_43, %c0_44] : memref<4x16xf32, #tpu.memory_space<smem>>
    %109 = vector.broadcast %108 : f32 to vector<8x16xf32>
    %110 = arith.mulf %106, %109 : vector<8x16xf32>
    %c1_45 = arith.constant 1 : index
    %c4_46 = arith.constant 4 : index
    %111 = memref.load %arg5[%c1_45, %c4_46] : memref<4x16xf32, #tpu.memory_space<smem>>
    %112 = vector.broadcast %111 : f32 to vector<8x16xf32>
    %113 = arith.mulf %11, %112 : vector<8x16xf32>
    %114 = arith.addf %110, %113 : vector<8x16xf32>
    %c1_47 = arith.constant 1 : index
    %c8_48 = arith.constant 8 : index
    %115 = memref.load %arg5[%c1_47, %c8_48] : memref<4x16xf32, #tpu.memory_space<smem>>
    %116 = vector.broadcast %115 : f32 to vector<8x16xf32>
    %117 = arith.addf %114, %116 : vector<8x16xf32>
    %cst_49 = arith.constant 0.000000e+00 : f32
    %118 = vector.broadcast %cst_49 : f32 to vector<8x16xf32>
    %119 = arith.maximumf %117, %118 : vector<8x16xf32>
    %c1_50 = arith.constant 1 : index
    %c12_51 = arith.constant 12 : index
    %120 = memref.load %arg5[%c1_50, %c12_51] : memref<4x16xf32, #tpu.memory_space<smem>>
    %121 = vector.broadcast %120 : f32 to vector<8x16xf32>
    %122 = arith.mulf %119, %121 : vector<8x16xf32>
    %123 = arith.addf %107, %122 : vector<8x16xf32>
    %c1_52 = arith.constant 1 : index
    %c1_53 = arith.constant 1 : index
    %124 = memref.load %arg5[%c1_52, %c1_53] : memref<4x16xf32, #tpu.memory_space<smem>>
    %125 = vector.broadcast %124 : f32 to vector<8x16xf32>
    %126 = arith.mulf %106, %125 : vector<8x16xf32>
    %c1_54 = arith.constant 1 : index
    %c5_55 = arith.constant 5 : index
    %127 = memref.load %arg5[%c1_54, %c5_55] : memref<4x16xf32, #tpu.memory_space<smem>>
    %128 = vector.broadcast %127 : f32 to vector<8x16xf32>
    %129 = arith.mulf %11, %128 : vector<8x16xf32>
    %130 = arith.addf %126, %129 : vector<8x16xf32>
    %c1_56 = arith.constant 1 : index
    %c9_57 = arith.constant 9 : index
    %131 = memref.load %arg5[%c1_56, %c9_57] : memref<4x16xf32, #tpu.memory_space<smem>>
    %132 = vector.broadcast %131 : f32 to vector<8x16xf32>
    %133 = arith.addf %130, %132 : vector<8x16xf32>
    %cst_58 = arith.constant 0.000000e+00 : f32
    %134 = vector.broadcast %cst_58 : f32 to vector<8x16xf32>
    %135 = arith.maximumf %133, %134 : vector<8x16xf32>
    %c1_59 = arith.constant 1 : index
    %c13_60 = arith.constant 13 : index
    %136 = memref.load %arg5[%c1_59, %c13_60] : memref<4x16xf32, #tpu.memory_space<smem>>
    %137 = vector.broadcast %136 : f32 to vector<8x16xf32>
    %138 = arith.mulf %135, %137 : vector<8x16xf32>
    %139 = arith.addf %123, %138 : vector<8x16xf32>
    %c1_61 = arith.constant 1 : index
    %c2_62 = arith.constant 2 : index
    %140 = memref.load %arg5[%c1_61, %c2_62] : memref<4x16xf32, #tpu.memory_space<smem>>
    %141 = vector.broadcast %140 : f32 to vector<8x16xf32>
    %142 = arith.mulf %106, %141 : vector<8x16xf32>
    %c1_63 = arith.constant 1 : index
    %c6_64 = arith.constant 6 : index
    %143 = memref.load %arg5[%c1_63, %c6_64] : memref<4x16xf32, #tpu.memory_space<smem>>
    %144 = vector.broadcast %143 : f32 to vector<8x16xf32>
    %145 = arith.mulf %11, %144 : vector<8x16xf32>
    %146 = arith.addf %142, %145 : vector<8x16xf32>
    %c1_65 = arith.constant 1 : index
    %c10_66 = arith.constant 10 : index
    %147 = memref.load %arg5[%c1_65, %c10_66] : memref<4x16xf32, #tpu.memory_space<smem>>
    %148 = vector.broadcast %147 : f32 to vector<8x16xf32>
    %149 = arith.addf %146, %148 : vector<8x16xf32>
    %cst_67 = arith.constant 0.000000e+00 : f32
    %150 = vector.broadcast %cst_67 : f32 to vector<8x16xf32>
    %151 = arith.maximumf %149, %150 : vector<8x16xf32>
    %c1_68 = arith.constant 1 : index
    %c14_69 = arith.constant 14 : index
    %152 = memref.load %arg5[%c1_68, %c14_69] : memref<4x16xf32, #tpu.memory_space<smem>>
    %153 = vector.broadcast %152 : f32 to vector<8x16xf32>
    %154 = arith.mulf %151, %153 : vector<8x16xf32>
    %155 = arith.addf %139, %154 : vector<8x16xf32>
    %c1_70 = arith.constant 1 : index
    %c3_71 = arith.constant 3 : index
    %156 = memref.load %arg5[%c1_70, %c3_71] : memref<4x16xf32, #tpu.memory_space<smem>>
    %157 = vector.broadcast %156 : f32 to vector<8x16xf32>
    %158 = arith.mulf %106, %157 : vector<8x16xf32>
    %c1_72 = arith.constant 1 : index
    %c7_73 = arith.constant 7 : index
    %159 = memref.load %arg5[%c1_72, %c7_73] : memref<4x16xf32, #tpu.memory_space<smem>>
    %160 = vector.broadcast %159 : f32 to vector<8x16xf32>
    %161 = arith.mulf %11, %160 : vector<8x16xf32>
    %162 = arith.addf %158, %161 : vector<8x16xf32>
    %c1_74 = arith.constant 1 : index
    %c11_75 = arith.constant 11 : index
    %163 = memref.load %arg5[%c1_74, %c11_75] : memref<4x16xf32, #tpu.memory_space<smem>>
    %164 = vector.broadcast %163 : f32 to vector<8x16xf32>
    %165 = arith.addf %162, %164 : vector<8x16xf32>
    %cst_76 = arith.constant 0.000000e+00 : f32
    %166 = vector.broadcast %cst_76 : f32 to vector<8x16xf32>
    %167 = arith.maximumf %165, %166 : vector<8x16xf32>
    %c1_77 = arith.constant 1 : index
    %c15_78 = arith.constant 15 : index
    %168 = memref.load %arg5[%c1_77, %c15_78] : memref<4x16xf32, #tpu.memory_space<smem>>
    %169 = vector.broadcast %168 : f32 to vector<8x16xf32>
    %170 = arith.mulf %167, %169 : vector<8x16xf32>
    %171 = arith.addf %155, %170 : vector<8x16xf32>
    %cst_79 = arith.constant dense<0xFF800000> : vector<8xf32>
    %172 = vector.multi_reduction <maximumf>, %171, %cst_79 [1] : vector<8x16xf32> to vector<8xf32>
    %173 = vector.shape_cast %172 : vector<8xf32> to vector<8x1xf32>
    %174 = vector.broadcast %173 : vector<8x1xf32> to vector<8x16xf32>
    %175 = arith.subf %171, %174 : vector<8x16xf32>
    %176 = math.exp %175 : vector<8x16xf32>
    %cst_80 = arith.constant dense<0.000000e+00> : vector<8xf32>
    %177 = vector.multi_reduction <add>, %176, %cst_80 [1] : vector<8x16xf32> to vector<8xf32>
    %178 = vector.shape_cast %177 : vector<8xf32> to vector<8x1xf32>
    %179 = tpu.reciprocal %178 {approx = true} : vector<8x1xf32> -> vector<8x1xf32>
    %180 = arith.mulf %178, %179 : vector<8x1xf32>
    %cst_81 = arith.constant 2.000000e+00 : f32
    %181 = vector.broadcast %cst_81 : f32 to vector<8x1xf32>
    %182 = arith.subf %181, %180 : vector<8x1xf32>
    %183 = arith.mulf %179, %182 : vector<8x1xf32>
    %184 = vector.broadcast %183 : vector<8x1xf32> to vector<8x16xf32>
    %185 = arith.mulf %176, %184 : vector<8x16xf32>
    %186 = arith.truncf %185 : vector<8x16xf32> to vector<8x16xbf16>
    %187 = vector.extract_strided_slice %17 {offsets = [0, 8], sizes = [16, 8], strides = [1, 1]} : vector<16x32xbf16> to vector<16x8xbf16>
    %cst_82 = arith.constant dense<0.000000e+00> : vector<8x8xf32>
    %188 = tpu.matmul %186, %187, %cst_82 {dimension_numbers = #tpu.dot_dimension_numbers<[1], [0], [0], [1], [0, 0, 1, 1], [], []>} : vector<8x16xbf16>, vector<16x8xbf16>, vector<8x8xf32> -> vector<8x8xf32>
    %c0_83 = arith.constant 0 : index
    %c8_84 = arith.constant 8 : index
    %189 = vector.load %arg11[%c0_83, %c8_84] : memref<8x32xf32, #tpu.memory_space<vmem>>, vector<8x8xf32>
    tpu.vector_store %arg11[%c0_83, %c8_84], %188 {strides = array<i32>} : memref<8x32xf32, #tpu.memory_space<vmem>>, vector<8x8xf32>,
    %190 = vector.extract_strided_slice %12 {offsets = [0, 16], sizes = [8, 8], strides = [1, 1]} : vector<8x32xbf16> to vector<8x8xbf16>
    %191 = vector.extract_strided_slice %15 {offsets = [16, 0], sizes = [8, 16], strides = [1, 1]} : vector<32x16xbf16> to vector<8x16xbf16>
    %cst_85 = arith.constant dense<0.000000e+00> : vector<8x16xf32>
    %192 = tpu.matmul %190, %191, %cst_85 {dimension_numbers = #tpu.dot_dimension_numbers<[1], [0], [0], [1], [0, 0, 1, 1], [], []>} : vector<8x8xbf16>, vector<8x16xbf16>, vector<8x16xf32> -> vector<8x16xf32>
    %cst_86 = arith.constant 0.000000e+00 : f32
    %193 = vector.broadcast %cst_86 : f32 to vector<8x16xf32>
    %c2_87 = arith.constant 2 : index
    %c0_88 = arith.constant 0 : index
    %194 = memref.load %arg5[%c2_87, %c0_88] : memref<4x16xf32, #tpu.memory_space<smem>>
    %195 = vector.broadcast %194 : f32 to vector<8x16xf32>
    %196 = arith.mulf %192, %195 : vector<8x16xf32>
    %c2_89 = arith.constant 2 : index
    %c4_90 = arith.constant 4 : index
    %197 = memref.load %arg5[%c2_89, %c4_90] : memref<4x16xf32, #tpu.memory_space<smem>>
    %198 = vector.broadcast %197 : f32 to vector<8x16xf32>
    %199 = arith.mulf %11, %198 : vector<8x16xf32>
    %200 = arith.addf %196, %199 : vector<8x16xf32>
    %c2_91 = arith.constant 2 : index
    %c8_92 = arith.constant 8 : index
    %201 = memref.load %arg5[%c2_91, %c8_92] : memref<4x16xf32, #tpu.memory_space<smem>>
    %202 = vector.broadcast %201 : f32 to vector<8x16xf32>
    %203 = arith.addf %200, %202 : vector<8x16xf32>
    %cst_93 = arith.constant 0.000000e+00 : f32
    %204 = vector.broadcast %cst_93 : f32 to vector<8x16xf32>
    %205 = arith.maximumf %203, %204 : vector<8x16xf32>
    %c2_94 = arith.constant 2 : index
    %c12_95 = arith.constant 12 : index
    %206 = memref.load %arg5[%c2_94, %c12_95] : memref<4x16xf32, #tpu.memory_space<smem>>
    %207 = vector.broadcast %206 : f32 to vector<8x16xf32>
    %208 = arith.mulf %205, %207 : vector<8x16xf32>
    %209 = arith.addf %193, %208 : vector<8x16xf32>
    %c2_96 = arith.constant 2 : index
    %c1_97 = arith.constant 1 : index
    %210 = memref.load %arg5[%c2_96, %c1_97] : memref<4x16xf32, #tpu.memory_space<smem>>
    %211 = vector.broadcast %210 : f32 to vector<8x16xf32>
    %212 = arith.mulf %192, %211 : vector<8x16xf32>
    %c2_98 = arith.constant 2 : index
    %c5_99 = arith.constant 5 : index
    %213 = memref.load %arg5[%c2_98, %c5_99] : memref<4x16xf32, #tpu.memory_space<smem>>
    %214 = vector.broadcast %213 : f32 to vector<8x16xf32>
    %215 = arith.mulf %11, %214 : vector<8x16xf32>
    %216 = arith.addf %212, %215 : vector<8x16xf32>
    %c2_100 = arith.constant 2 : index
    %c9_101 = arith.constant 9 : index
    %217 = memref.load %arg5[%c2_100, %c9_101] : memref<4x16xf32, #tpu.memory_space<smem>>
    %218 = vector.broadcast %217 : f32 to vector<8x16xf32>
    %219 = arith.addf %216, %218 : vector<8x16xf32>
    %cst_102 = arith.constant 0.000000e+00 : f32
    %220 = vector.broadcast %cst_102 : f32 to vector<8x16xf32>
    %221 = arith.maximumf %219, %220 : vector<8x16xf32>
    %c2_103 = arith.constant 2 : index
    %c13_104 = arith.constant 13 : index
    %222 = memref.load %arg5[%c2_103, %c13_104] : memref<4x16xf32, #tpu.memory_space<smem>>
    %223 = vector.broadcast %222 : f32 to vector<8x16xf32>
    %224 = arith.mulf %221, %223 : vector<8x16xf32>
    %225 = arith.addf %209, %224 : vector<8x16xf32>
    %c2_105 = arith.constant 2 : index
    %c2_106 = arith.constant 2 : index
    %226 = memref.load %arg5[%c2_105, %c2_106] : memref<4x16xf32, #tpu.memory_space<smem>>
    %227 = vector.broadcast %226 : f32 to vector<8x16xf32>
    %228 = arith.mulf %192, %227 : vector<8x16xf32>
    %c2_107 = arith.constant 2 : index
    %c6_108 = arith.constant 6 : index
    %229 = memref.load %arg5[%c2_107, %c6_108] : memref<4x16xf32, #tpu.memory_space<smem>>
    %230 = vector.broadcast %229 : f32 to vector<8x16xf32>
    %231 = arith.mulf %11, %230 : vector<8x16xf32>
    %232 = arith.addf %228, %231 : vector<8x16xf32>
    %c2_109 = arith.constant 2 : index
    %c10_110 = arith.constant 10 : index
    %233 = memref.load %arg5[%c2_109, %c10_110] : memref<4x16xf32, #tpu.memory_space<smem>>
    %234 = vector.broadcast %233 : f32 to vector<8x16xf32>
    %235 = arith.addf %232, %234 : vector<8x16xf32>
    %cst_111 = arith.constant 0.000000e+00 : f32
    %236 = vector.broadcast %cst_111 : f32 to vector<8x16xf32>
    %237 = arith.maximumf %235, %236 : vector<8x16xf32>
    %c2_112 = arith.constant 2 : index
    %c14_113 = arith.constant 14 : index
    %238 = memref.load %arg5[%c2_112, %c14_113] : memref<4x16xf32, #tpu.memory_space<smem>>
    %239 = vector.broadcast %238 : f32 to vector<8x16xf32>
    %240 = arith.mulf %237, %239 : vector<8x16xf32>
    %241 = arith.addf %225, %240 : vector<8x16xf32>
    %c2_114 = arith.constant 2 : index
    %c3_115 = arith.constant 3 : index
    %242 = memref.load %arg5[%c2_114, %c3_115] : memref<4x16xf32, #tpu.memory_space<smem>>
    %243 = vector.broadcast %242 : f32 to vector<8x16xf32>
    %244 = arith.mulf %192, %243 : vector<8x16xf32>
    %c2_116 = arith.constant 2 : index
    %c7_117 = arith.constant 7 : index
    %245 = memref.load %arg5[%c2_116, %c7_117] : memref<4x16xf32, #tpu.memory_space<smem>>
    %246 = vector.broadcast %245 : f32 to vector<8x16xf32>
    %247 = arith.mulf %11, %246 : vector<8x16xf32>
    %248 = arith.addf %244, %247 : vector<8x16xf32>
    %c2_118 = arith.constant 2 : index
    %c11_119 = arith.constant 11 : index
    %249 = memref.load %arg5[%c2_118, %c11_119] : memref<4x16xf32, #tpu.memory_space<smem>>
    %250 = vector.broadcast %249 : f32 to vector<8x16xf32>
    %251 = arith.addf %248, %250 : vector<8x16xf32>
    %cst_120 = arith.constant 0.000000e+00 : f32
    %252 = vector.broadcast %cst_120 : f32 to vector<8x16xf32>
    %253 = arith.maximumf %251, %252 : vector<8x16xf32>
    %c2_121 = arith.constant 2 : index
    %c15_122 = arith.constant 15 : index
    %254 = memref.load %arg5[%c2_121, %c15_122] : memref<4x16xf32, #tpu.memory_space<smem>>
    %255 = vector.broadcast %254 : f32 to vector<8x16xf32>
    %256 = arith.mulf %253, %255 : vector<8x16xf32>
    %257 = arith.addf %241, %256 : vector<8x16xf32>
    %cst_123 = arith.constant dense<0xFF800000> : vector<8xf32>
    %258 = vector.multi_reduction <maximumf>, %257, %cst_123 [1] : vector<8x16xf32> to vector<8xf32>
    %259 = vector.shape_cast %258 : vector<8xf32> to vector<8x1xf32>
    %260 = vector.broadcast %259 : vector<8x1xf32> to vector<8x16xf32>
    %261 = arith.subf %257, %260 : vector<8x16xf32>
    %262 = math.exp %261 : vector<8x16xf32>
    %cst_124 = arith.constant dense<0.000000e+00> : vector<8xf32>
    %263 = vector.multi_reduction <add>, %262, %cst_124 [1] : vector<8x16xf32> to vector<8xf32>
    %264 = vector.shape_cast %263 : vector<8xf32> to vector<8x1xf32>
    %265 = tpu.reciprocal %264 {approx = true} : vector<8x1xf32> -> vector<8x1xf32>
    %266 = arith.mulf %264, %265 : vector<8x1xf32>
    %cst_125 = arith.constant 2.000000e+00 : f32
    %267 = vector.broadcast %cst_125 : f32 to vector<8x1xf32>
    %268 = arith.subf %267, %266 : vector<8x1xf32>
    %269 = arith.mulf %265, %268 : vector<8x1xf32>
    %270 = vector.broadcast %269 : vector<8x1xf32> to vector<8x16xf32>
    %271 = arith.mulf %262, %270 : vector<8x16xf32>
    %272 = arith.truncf %271 : vector<8x16xf32> to vector<8x16xbf16>
    %273 = vector.extract_strided_slice %17 {offsets = [0, 16], sizes = [16, 8], strides = [1, 1]} : vector<16x32xbf16> to vector<16x8xbf16>
    %cst_126 = arith.constant dense<0.000000e+00> : vector<8x8xf32>
    %274 = tpu.matmul %272, %273, %cst_126 {dimension_numbers = #tpu.dot_dimension_numbers<[1], [0], [0], [1], [0, 0, 1, 1], [], []>} : vector<8x16xbf16>, vector<16x8xbf16>, vector<8x8xf32> -> vector<8x8xf32>
    %c0_127 = arith.constant 0 : index
    %c16 = arith.constant 16 : index
    %275 = vector.load %arg11[%c0_127, %c16] : memref<8x32xf32, #tpu.memory_space<vmem>>, vector<8x8xf32>
    tpu.vector_store %arg11[%c0_127, %c16], %274 {strides = array<i32>} : memref<8x32xf32, #tpu.memory_space<vmem>>, vector<8x8xf32>,
    %276 = vector.extract_strided_slice %12 {offsets = [0, 24], sizes = [8, 8], strides = [1, 1]} : vector<8x32xbf16> to vector<8x8xbf16>
    %277 = vector.extract_strided_slice %15 {offsets = [24, 0], sizes = [8, 16], strides = [1, 1]} : vector<32x16xbf16> to vector<8x16xbf16>
    %cst_128 = arith.constant dense<0.000000e+00> : vector<8x16xf32>
    %278 = tpu.matmul %276, %277, %cst_128 {dimension_numbers = #tpu.dot_dimension_numbers<[1], [0], [0], [1], [0, 0, 1, 1], [], []>} : vector<8x8xbf16>, vector<8x16xbf16>, vector<8x16xf32> -> vector<8x16xf32>
    %cst_129 = arith.constant 0.000000e+00 : f32
    %279 = vector.broadcast %cst_129 : f32 to vector<8x16xf32>
    %c3_130 = arith.constant 3 : index
    %c0_131 = arith.constant 0 : index
    %280 = memref.load %arg5[%c3_130, %c0_131] : memref<4x16xf32, #tpu.memory_space<smem>>
    %281 = vector.broadcast %280 : f32 to vector<8x16xf32>
    %282 = arith.mulf %278, %281 : vector<8x16xf32>
    %c3_132 = arith.constant 3 : index
    %c4_133 = arith.constant 4 : index
    %283 = memref.load %arg5[%c3_132, %c4_133] : memref<4x16xf32, #tpu.memory_space<smem>>
    %284 = vector.broadcast %283 : f32 to vector<8x16xf32>
    %285 = arith.mulf %11, %284 : vector<8x16xf32>
    %286 = arith.addf %282, %285 : vector<8x16xf32>
    %c3_134 = arith.constant 3 : index
    %c8_135 = arith.constant 8 : index
    %287 = memref.load %arg5[%c3_134, %c8_135] : memref<4x16xf32, #tpu.memory_space<smem>>
    %288 = vector.broadcast %287 : f32 to vector<8x16xf32>
    %289 = arith.addf %286, %288 : vector<8x16xf32>
    %cst_136 = arith.constant 0.000000e+00 : f32
    %290 = vector.broadcast %cst_136 : f32 to vector<8x16xf32>
    %291 = arith.maximumf %289, %290 : vector<8x16xf32>
    %c3_137 = arith.constant 3 : index
    %c12_138 = arith.constant 12 : index
    %292 = memref.load %arg5[%c3_137, %c12_138] : memref<4x16xf32, #tpu.memory_space<smem>>
    %293 = vector.broadcast %292 : f32 to vector<8x16xf32>
    %294 = arith.mulf %291, %293 : vector<8x16xf32>
    %295 = arith.addf %279, %294 : vector<8x16xf32>
    %c3_139 = arith.constant 3 : index
    %c1_140 = arith.constant 1 : index
    %296 = memref.load %arg5[%c3_139, %c1_140] : memref<4x16xf32, #tpu.memory_space<smem>>
    %297 = vector.broadcast %296 : f32 to vector<8x16xf32>
    %298 = arith.mulf %278, %297 : vector<8x16xf32>
    %c3_141 = arith.constant 3 : index
    %c5_142 = arith.constant 5 : index
    %299 = memref.load %arg5[%c3_141, %c5_142] : memref<4x16xf32, #tpu.memory_space<smem>>
    %300 = vector.broadcast %299 : f32 to vector<8x16xf32>
    %301 = arith.mulf %11, %300 : vector<8x16xf32>
    %302 = arith.addf %298, %301 : vector<8x16xf32>
    %c3_143 = arith.constant 3 : index
    %c9_144 = arith.constant 9 : index
    %303 = memref.load %arg5[%c3_143, %c9_144] : memref<4x16xf32, #tpu.memory_space<smem>>
    %304 = vector.broadcast %303 : f32 to vector<8x16xf32>
    %305 = arith.addf %302, %304 : vector<8x16xf32>
    %cst_145 = arith.constant 0.000000e+00 : f32
    %306 = vector.broadcast %cst_145 : f32 to vector<8x16xf32>
    %307 = arith.maximumf %305, %306 : vector<8x16xf32>
    %c3_146 = arith.constant 3 : index
    %c13_147 = arith.constant 13 : index
    %308 = memref.load %arg5[%c3_146, %c13_147] : memref<4x16xf32, #tpu.memory_space<smem>>
    %309 = vector.broadcast %308 : f32 to vector<8x16xf32>
    %310 = arith.mulf %307, %309 : vector<8x16xf32>
    %311 = arith.addf %295, %310 : vector<8x16xf32>
    %c3_148 = arith.constant 3 : index
    %c2_149 = arith.constant 2 : index
    %312 = memref.load %arg5[%c3_148, %c2_149] : memref<4x16xf32, #tpu.memory_space<smem>>
    %313 = vector.broadcast %312 : f32 to vector<8x16xf32>
    %314 = arith.mulf %278, %313 : vector<8x16xf32>
    %c3_150 = arith.constant 3 : index
    %c6_151 = arith.constant 6 : index
    %315 = memref.load %arg5[%c3_150, %c6_151] : memref<4x16xf32, #tpu.memory_space<smem>>
    %316 = vector.broadcast %315 : f32 to vector<8x16xf32>
    %317 = arith.mulf %11, %316 : vector<8x16xf32>
    %318 = arith.addf %314, %317 : vector<8x16xf32>
    %c3_152 = arith.constant 3 : index
    %c10_153 = arith.constant 10 : index
    %319 = memref.load %arg5[%c3_152, %c10_153] : memref<4x16xf32, #tpu.memory_space<smem>>
    %320 = vector.broadcast %319 : f32 to vector<8x16xf32>
    %321 = arith.addf %318, %320 : vector<8x16xf32>
    %cst_154 = arith.constant 0.000000e+00 : f32
    %322 = vector.broadcast %cst_154 : f32 to vector<8x16xf32>
    %323 = arith.maximumf %321, %322 : vector<8x16xf32>
    %c3_155 = arith.constant 3 : index
    %c14_156 = arith.constant 14 : index
    %324 = memref.load %arg5[%c3_155, %c14_156] : memref<4x16xf32, #tpu.memory_space<smem>>
    %325 = vector.broadcast %324 : f32 to vector<8x16xf32>
    %326 = arith.mulf %323, %325 : vector<8x16xf32>
    %327 = arith.addf %311, %326 : vector<8x16xf32>
    %c3_157 = arith.constant 3 : index
    %c3_158 = arith.constant 3 : index
    %328 = memref.load %arg5[%c3_157, %c3_158] : memref<4x16xf32, #tpu.memory_space<smem>>
    %329 = vector.broadcast %328 : f32 to vector<8x16xf32>
    %330 = arith.mulf %278, %329 : vector<8x16xf32>
    %c3_159 = arith.constant 3 : index
    %c7_160 = arith.constant 7 : index
    %331 = memref.load %arg5[%c3_159, %c7_160] : memref<4x16xf32, #tpu.memory_space<smem>>
    %332 = vector.broadcast %331 : f32 to vector<8x16xf32>
    %333 = arith.mulf %11, %332 : vector<8x16xf32>
    %334 = arith.addf %330, %333 : vector<8x16xf32>
    %c3_161 = arith.constant 3 : index
    %c11_162 = arith.constant 11 : index
    %335 = memref.load %arg5[%c3_161, %c11_162] : memref<4x16xf32, #tpu.memory_space<smem>>
    %336 = vector.broadcast %335 : f32 to vector<8x16xf32>
    %337 = arith.addf %334, %336 : vector<8x16xf32>
    %cst_163 = arith.constant 0.000000e+00 : f32
    %338 = vector.broadcast %cst_163 : f32 to vector<8x16xf32>
    %339 = arith.maximumf %337, %338 : vector<8x16xf32>
    %c3_164 = arith.constant 3 : index
    %c15_165 = arith.constant 15 : index
    %340 = memref.load %arg5[%c3_164, %c15_165] : memref<4x16xf32, #tpu.memory_space<smem>>
    %341 = vector.broadcast %340 : f32 to vector<8x16xf32>
    %342 = arith.mulf %339, %341 : vector<8x16xf32>
    %343 = arith.addf %327, %342 : vector<8x16xf32>
    %cst_166 = arith.constant dense<0xFF800000> : vector<8xf32>
    %344 = vector.multi_reduction <maximumf>, %343, %cst_166 [1] : vector<8x16xf32> to vector<8xf32>
    %345 = vector.shape_cast %344 : vector<8xf32> to vector<8x1xf32>
    %346 = vector.broadcast %345 : vector<8x1xf32> to vector<8x16xf32>
    %347 = arith.subf %343, %346 : vector<8x16xf32>
    %348 = math.exp %347 : vector<8x16xf32>
    %cst_167 = arith.constant dense<0.000000e+00> : vector<8xf32>
    %349 = vector.multi_reduction <add>, %348, %cst_167 [1] : vector<8x16xf32> to vector<8xf32>
    %350 = vector.shape_cast %349 : vector<8xf32> to vector<8x1xf32>
    %351 = tpu.reciprocal %350 {approx = true} : vector<8x1xf32> -> vector<8x1xf32>
    %352 = arith.mulf %350, %351 : vector<8x1xf32>
    %cst_168 = arith.constant 2.000000e+00 : f32
    %353 = vector.broadcast %cst_168 : f32 to vector<8x1xf32>
    %354 = arith.subf %353, %352 : vector<8x1xf32>
    %355 = arith.mulf %351, %354 : vector<8x1xf32>
    %356 = vector.broadcast %355 : vector<8x1xf32> to vector<8x16xf32>
    %357 = arith.mulf %348, %356 : vector<8x16xf32>
    %358 = arith.truncf %357 : vector<8x16xf32> to vector<8x16xbf16>
    %359 = vector.extract_strided_slice %17 {offsets = [0, 24], sizes = [16, 8], strides = [1, 1]} : vector<16x32xbf16> to vector<16x8xbf16>
    %cst_169 = arith.constant dense<0.000000e+00> : vector<8x8xf32>
    %360 = tpu.matmul %358, %359, %cst_169 {dimension_numbers = #tpu.dot_dimension_numbers<[1], [0], [0], [1], [0, 0, 1, 1], [], []>} : vector<8x16xbf16>, vector<16x8xbf16>, vector<8x8xf32> -> vector<8x8xf32>
    %c0_170 = arith.constant 0 : index
    %c24 = arith.constant 24 : index
    %361 = vector.load %arg11[%c0_170, %c24] : memref<8x32xf32, #tpu.memory_space<vmem>>, vector<8x8xf32>
    tpu.vector_store %arg11[%c0_170, %c24], %360 {strides = array<i32>} : memref<8x32xf32, #tpu.memory_space<vmem>>, vector<8x8xf32>,
    %c0_171 = arith.constant 0 : index
    %c0_172 = arith.constant 0 : index
    %362 = vector.load %arg8[%c0_171, %c0_172] : memref<6x32xf32, #tpu.memory_space<vmem>>, vector<1x32xf32>
    %c1_173 = arith.constant 1 : index
    %c0_174 = arith.constant 0 : index
    %363 = vector.load %arg8[%c1_173, %c0_174] : memref<6x32xf32, #tpu.memory_space<vmem>>, vector<1x32xf32>
    %c2_175 = arith.constant 2 : index
    %c0_176 = arith.constant 0 : index
    %364 = vector.load %arg8[%c2_175, %c0_176] : memref<6x32xf32, #tpu.memory_space<vmem>>, vector<1x32xf32>
    %c3_177 = arith.constant 3 : index
    %c0_178 = arith.constant 0 : index
    %365 = vector.load %arg8[%c3_177, %c0_178] : memref<6x32xf32, #tpu.memory_space<vmem>>, vector<1x32xf32>
    %c4_179 = arith.constant 4 : index
    %c0_180 = arith.constant 0 : index
    %366 = vector.load %arg8[%c4_179, %c0_180] : memref<6x32xf32, #tpu.memory_space<vmem>>, vector<1x32xf32>
    %c5_181 = arith.constant 5 : index
    %c0_182 = arith.constant 0 : index
    %367 = vector.load %arg8[%c5_181, %c0_182] : memref<6x32xf32, #tpu.memory_space<vmem>>, vector<1x32xf32>
    %c0_183 = arith.constant 0 : index
    %c0_184 = arith.constant 0 : index
    %368 = vector.load %arg11[%c0_183, %c0_184] : memref<8x32xf32, #tpu.memory_space<vmem>>, vector<8x32xf32>
    %369 = arith.truncf %368 : vector<8x32xf32> to vector<8x32xbf16>
    %c0_185 = arith.constant 0 : index
    %c0_186 = arith.constant 0 : index
    %370 = vector.load %arg6[%c0_185, %c0_186] : memref<32x96xbf16, #tpu.memory_space<vmem>>, vector<32x32xbf16>
    %cst_187 = arith.constant dense<0.000000e+00> : vector<8x32xf32>
    %371 = tpu.matmul %369, %370, %cst_187 {dimension_numbers = #tpu.dot_dimension_numbers<[1], [0], [0], [1], [0, 0, 1, 1], [], []>} : vector<8x32xbf16>, vector<32x32xbf16>, vector<8x32xf32> -> vector<8x32xf32>
    %372 = vector.broadcast %362 : vector<1x32xf32> to vector<8x32xf32>
    %373 = arith.addf %371, %372 : vector<8x32xf32>
    %374 = arith.addf %1, %373 : vector<8x32xf32>
    %375 = vector.shape_cast %374 : vector<8x32xf32> to vector<1x8x32xf32>
    %cst_188 = arith.constant dense<0.000000e+00> : vector<1x32xf32>
    %376 = vector.multi_reduction <add>, %375, %cst_188 [1] : vector<1x8x32xf32> to vector<1x32xf32>
    %377 = vector.shape_cast %376 : vector<1x32xf32> to vector<1x1x32xf32>
    %cst_189 = arith.constant 1.250000e-01 : f32
    %378 = vector.broadcast %cst_189 : f32 to vector<1x1x32xf32>
    %379 = arith.mulf %377, %378 : vector<1x1x32xf32>
    %380 = vector.broadcast %379 : vector<1x1x32xf32> to vector<1x8x32xf32>
    %381 = arith.subf %375, %380 : vector<1x8x32xf32>
    %382 = arith.mulf %381, %381 : vector<1x8x32xf32>
    %cst_190 = arith.constant dense<0.000000e+00> : vector<1x32xf32>
    %383 = vector.multi_reduction <add>, %382, %cst_190 [1] : vector<1x8x32xf32> to vector<1x32xf32>
    %384 = vector.shape_cast %383 : vector<1x32xf32> to vector<1x1x32xf32>
    %cst_191 = arith.constant 1.250000e-01 : f32
    %385 = vector.broadcast %cst_191 : f32 to vector<1x1x32xf32>
    %386 = arith.mulf %384, %385 : vector<1x1x32xf32>
    %cst_192 = arith.constant 9.99999974E-6 : f32
    %387 = vector.broadcast %cst_192 : f32 to vector<1x1x32xf32>
    %388 = arith.addf %386, %387 : vector<1x1x32xf32>
    %389 = math.rsqrt %388 : vector<1x1x32xf32>
    %390 = vector.broadcast %389 : vector<1x1x32xf32> to vector<1x8x32xf32>
    %391 = arith.mulf %381, %390 : vector<1x8x32xf32>
    %392 = vector.shape_cast %364 : vector<1x32xf32> to vector<1x1x32xf32>
    %393 = vector.broadcast %392 : vector<1x1x32xf32> to vector<1x8x32xf32>
    %394 = arith.mulf %391, %393 : vector<1x8x32xf32>
    %395 = vector.shape_cast %365 : vector<1x32xf32> to vector<1x1x32xf32>
    %396 = vector.broadcast %395 : vector<1x1x32xf32> to vector<1x8x32xf32>
    %397 = arith.addf %394, %396 : vector<1x8x32xf32>
    %398 = vector.shape_cast %397 : vector<1x8x32xf32> to vector<8x32xf32>
    %399 = arith.truncf %398 : vector<8x32xf32> to vector<8x32xbf16>
    %c0_193 = arith.constant 0 : index
    %c32_194 = arith.constant 32 : index
    %400 = vector.load %arg6[%c0_193, %c32_194] : memref<32x96xbf16, #tpu.memory_space<vmem>>, vector<32x64xbf16>
    %cst_195 = arith.constant dense<0.000000e+00> : vector<8x64xf32>
    %401 = tpu.matmul %399, %400, %cst_195 {dimension_numbers = #tpu.dot_dimension_numbers<[1], [0], [0], [1], [0, 0, 1, 1], [], []>} : vector<8x32xbf16>, vector<32x64xbf16>, vector<8x64xf32> -> vector<8x64xf32>
    %c0_196 = arith.constant 0 : index
    %c0_197 = arith.constant 0 : index
    %402 = vector.load %arg9[%c0_196, %c0_197] : memref<1x64xf32, #tpu.memory_space<vmem>>, vector<1x64xf32>
    %403 = vector.broadcast %402 : vector<1x64xf32> to vector<8x64xf32>
    %404 = arith.addf %401, %403 : vector<8x64xf32>
    %cst_198 = arith.constant 0.000000e+00 : f32
    %405 = vector.broadcast %cst_198 : f32 to vector<8x64xf32>
    %406 = arith.maximumf %404, %405 : vector<8x64xf32>
    %407 = arith.truncf %406 : vector<8x64xf32> to vector<8x64xbf16>
    %c0_199 = arith.constant 0 : index
    %c0_200 = arith.constant 0 : index
    %408 = vector.load %arg7[%c0_199, %c0_200] : memref<64x32xbf16, #tpu.memory_space<vmem>>, vector<64x32xbf16>
    %cst_201 = arith.constant dense<0.000000e+00> : vector<8x32xf32>
    %409 = tpu.matmul %407, %408, %cst_201 {dimension_numbers = #tpu.dot_dimension_numbers<[1], [0], [0], [1], [0, 0, 1, 1], [], []>} : vector<8x64xbf16>, vector<64x32xbf16>, vector<8x32xf32> -> vector<8x32xf32>
    %410 = vector.broadcast %363 : vector<1x32xf32> to vector<8x32xf32>
    %411 = arith.addf %409, %410 : vector<8x32xf32>
    %412 = arith.addf %398, %411 : vector<8x32xf32>
    %413 = vector.shape_cast %412 : vector<8x32xf32> to vector<1x8x32xf32>
    %cst_202 = arith.constant dense<0.000000e+00> : vector<1x32xf32>
    %414 = vector.multi_reduction <add>, %413, %cst_202 [1] : vector<1x8x32xf32> to vector<1x32xf32>
    %415 = vector.shape_cast %414 : vector<1x32xf32> to vector<1x1x32xf32>
    %cst_203 = arith.constant 1.250000e-01 : f32
    %416 = vector.broadcast %cst_203 : f32 to vector<1x1x32xf32>
    %417 = arith.mulf %415, %416 : vector<1x1x32xf32>
    %418 = vector.broadcast %417 : vector<1x1x32xf32> to vector<1x8x32xf32>
    %419 = arith.subf %413, %418 : vector<1x8x32xf32>
    %420 = arith.mulf %419, %419 : vector<1x8x32xf32>
    %cst_204 = arith.constant dense<0.000000e+00> : vector<1x32xf32>
    %421 = vector.multi_reduction <add>, %420, %cst_204 [1] : vector<1x8x32xf32> to vector<1x32xf32>
    %422 = vector.shape_cast %421 : vector<1x32xf32> to vector<1x1x32xf32>
    %cst_205 = arith.constant 1.250000e-01 : f32
    %423 = vector.broadcast %cst_205 : f32 to vector<1x1x32xf32>
    %424 = arith.mulf %422, %423 : vector<1x1x32xf32>
    %cst_206 = arith.constant 9.99999974E-6 : f32
    %425 = vector.broadcast %cst_206 : f32 to vector<1x1x32xf32>
    %426 = arith.addf %424, %425 : vector<1x1x32xf32>
    %427 = math.rsqrt %426 : vector<1x1x32xf32>
    %428 = vector.broadcast %427 : vector<1x1x32xf32> to vector<1x8x32xf32>
    %429 = arith.mulf %419, %428 : vector<1x8x32xf32>
    %430 = vector.shape_cast %366 : vector<1x32xf32> to vector<1x1x32xf32>
    %431 = vector.broadcast %430 : vector<1x1x32xf32> to vector<1x8x32xf32>
    %432 = arith.mulf %429, %431 : vector<1x8x32xf32>
    %433 = vector.shape_cast %367 : vector<1x32xf32> to vector<1x1x32xf32>
    %434 = vector.broadcast %433 : vector<1x1x32xf32> to vector<1x8x32xf32>
    %435 = arith.addf %432, %434 : vector<1x8x32xf32>
    %c0_207 = arith.constant 0 : index
    %c0_208 = arith.constant 0 : index
    %c0_209 = arith.constant 0 : index
    %436 = vector.load %arg10[%c0_207, %c0_208, %c0_209] : memref<1x8x32xf32, #tpu.memory_space<vmem>>, vector<1x8x32xf32>
    tpu.vector_store %arg10[%c0_207, %c0_208, %c0_209], %435 {strides = array<i32>} : memref<1x8x32xf32, #tpu.memory_space<vmem>>, vector<1x8x32xf32>,
    return
  }
  func.func @transform_0(%arg0: i32) -> (i32, i32, i32) {
    %c0_i32 = arith.constant 0 : i32
    %c0_i32_0 = arith.constant 0 : i32
    %c0_i32_1 = arith.constant 0 : i32
    return %arg0, %c0_i32, %c0_i32_0 : i32, i32, i32
  }
  func.func @transform_1(%arg0: i32) -> (i32, i32, i32) {
    %c0_i32 = arith.constant 0 : i32
    %c0_i32_0 = arith.constant 0 : i32
    %c0_i32_1 = arith.constant 0 : i32
    return %arg0, %c0_i32, %c0_i32_0 : i32, i32, i32
  }
  func.func @transform_2(%arg0: i32) -> (i32, i32, i32) {
    %c0_i32 = arith.constant 0 : i32
    %c0_i32_0 = arith.constant 0 : i32
    %c0_i32_1 = arith.constant 0 : i32
    return %arg0, %c0_i32, %c0_i32_0 : i32, i32, i32
  }
  func.func @transform_3(%arg0: i32) -> (i32, i32) {
    %c0_i32 = arith.constant 0 : i32
    %c0_i32_0 = arith.constant 0 : i32
    %c0_i32_1 = arith.constant 0 : i32
    return %c0_i32, %c0_i32_0 : i32, i32
  }
  func.func @transform_4(%arg0: i32) -> (i32, i32) {
    %c0_i32 = arith.constant 0 : i32
    %c0_i32_0 = arith.constant 0 : i32
    %c0_i32_1 = arith.constant 0 : i32
    return %c0_i32, %c0_i32_0 : i32, i32
  }
  func.func @transform_5(%arg0: i32) -> (i32, i32) {
    %c0_i32 = arith.constant 0 : i32
    %c0_i32_0 = arith.constant 0 : i32
    %c0_i32_1 = arith.constant 0 : i32
    return %c0_i32, %c0_i32_0 : i32, i32
  }
  func.func @transform_6(%arg0: i32) -> (i32, i32) {
    %c0_i32 = arith.constant 0 : i32
    %c0_i32_0 = arith.constant 0 : i32
    %c0_i32_1 = arith.constant 0 : i32
    return %c0_i32, %c0_i32_0 : i32, i32
  }
  func.func @transform_7(%arg0: i32) -> (i32, i32) {
    %c0_i32 = arith.constant 0 : i32
    %c0_i32_0 = arith.constant 0 : i32
    %c0_i32_1 = arith.constant 0 : i32
    return %c0_i32, %c0_i32_0 : i32, i32
  }
  func.func @transform_8(%arg0: i32) -> (i32, i32) {
    %c0_i32 = arith.constant 0 : i32
    %c0_i32_0 = arith.constant 0 : i32
    %c0_i32_1 = arith.constant 0 : i32
    return %c0_i32, %c0_i32_0 : i32, i32
  }
  func.func @transform_9(%arg0: i32) -> (i32, i32, i32) {
    %c0_i32 = arith.constant 0 : i32
    %c0_i32_0 = arith.constant 0 : i32
    %c0_i32_1 = arith.constant 0 : i32
    return %arg0, %c0_i32, %c0_i32_0 : i32, i32, i32
  }
}

module attributes {stable_mosaic.version = 11 : i64} {
  func.func @_matnet_block_kernel(%arg0: i32, %arg1: memref<1x16x32xf32, #tpu.memory_space<vmem>>, %arg2: memref<1x8x32xf32, #tpu.memory_space<vmem>>, %arg3: memref<1x8x16xf32, #tpu.memory_space<vmem>>, %arg4: memref<32x96xbf16, #tpu.memory_space<vmem>>, %arg5: memref<4x16xf32, #tpu.memory_space<smem>>, %arg6: memref<32x96xbf16, #tpu.memory_space<vmem>>, %arg7: memref<64x32xbf16, #tpu.memory_space<vmem>>, %arg8: memref<6x32xf32, #tpu.memory_space<vmem>>, %arg9: memref<1x64xf32, #tpu.memory_space<vmem>>, %arg10: memref<1x16x32xf32, #tpu.memory_space<vmem>>, %arg11: memref<16x32xf32, #tpu.memory_space<vmem>>) attributes {dimension_semantics = [#tpu.dimension_semantics<parallel>], iteration_bounds = array<i64: 2>, scalar_prefetch = 0 : i64, scratch_operands = 1 : i64, tpu.core_type = #tpu.core_type<tc>, window_params = [{transform_indices = @transform_0, window_bounds = array<i64: 1, 16, 32>}, {transform_indices = @transform_1, window_bounds = array<i64: 1, 8, 32>}, {transform_indices = @transform_2, window_bounds = array<i64: 1, 8, 16>}, {pipeline_mode = #tpu.pipeline_mode<synchronous>, transform_indices = @transform_3, window_bounds = array<i64: 32, 96>}, {transform_indices = @transform_4, window_bounds = array<i64: 4, 16>}, {pipeline_mode = #tpu.pipeline_mode<synchronous>, transform_indices = @transform_5, window_bounds = array<i64: 32, 96>}, {pipeline_mode = #tpu.pipeline_mode<synchronous>, transform_indices = @transform_6, window_bounds = array<i64: 64, 32>}, {pipeline_mode = #tpu.pipeline_mode<synchronous>, transform_indices = @transform_7, window_bounds = array<i64: 6, 32>}, {pipeline_mode = #tpu.pipeline_mode<synchronous>, transform_indices = @transform_8, window_bounds = array<i64: 1, 64>}, {transform_indices = @transform_9, window_bounds = array<i64: 1, 16, 32>}]} {
    %c0 = arith.constant 0 : index
    %c0_0 = arith.constant 0 : index
    %c0_1 = arith.constant 0 : index
    %0 = vector.load %arg1[%c0, %c0_0, %c0_1] : memref<1x16x32xf32, #tpu.memory_space<vmem>>, vector<1x16x32xf32>
    %1 = vector.shape_cast %0 : vector<1x16x32xf32> to vector<16x32xf32>
    %c0_2 = arith.constant 0 : index
    %c0_3 = arith.constant 0 : index
    %c0_4 = arith.constant 0 : index
    %2 = vector.load %arg2[%c0_2, %c0_3, %c0_4] : memref<1x8x32xf32, #tpu.memory_space<vmem>>, vector<1x8x32xf32>
    %3 = vector.shape_cast %2 : vector<1x8x32xf32> to vector<8x32xf32>
    %4 = arith.truncf %1 : vector<16x32xf32> to vector<16x32xbf16>
    %c0_5 = arith.constant 0 : index
    %c0_6 = arith.constant 0 : index
    %5 = vector.load %arg4[%c0_5, %c0_6] : memref<32x96xbf16, #tpu.memory_space<vmem>>, vector<32x32xbf16>
    %cst = arith.constant dense<0.000000e+00> : vector<16x32xf32>
    %6 = tpu.matmul %4, %5, %cst {dimension_numbers = #tpu.dot_dimension_numbers<[1], [0], [0], [1], [0, 0, 1, 1], [], []>} : vector<16x32xbf16>, vector<32x32xbf16>, vector<16x32xf32> -> vector<16x32xf32>
    %7 = arith.truncf %3 : vector<8x32xf32> to vector<8x32xbf16>
    %c0_7 = arith.constant 0 : index
    %c32 = arith.constant 32 : index
    %8 = vector.load %arg4[%c0_7, %c32] : memref<32x96xbf16, #tpu.memory_space<vmem>>, vector<32x64xbf16>
    %cst_8 = arith.constant dense<0.000000e+00> : vector<8x64xf32>
    %9 = tpu.matmul %7, %8, %cst_8 {dimension_numbers = #tpu.dot_dimension_numbers<[1], [0], [0], [1], [0, 0, 1, 1], [], []>} : vector<8x32xbf16>, vector<32x64xbf16>, vector<8x64xf32> -> vector<8x64xf32>
    %c0_9 = arith.constant 0 : index
    %c0_10 = arith.constant 0 : index
    %c0_11 = arith.constant 0 : index
    %10 = vector.load %arg3[%c0_9, %c0_10, %c0_11] : memref<1x8x16xf32, #tpu.memory_space<vmem>>, vector<1x8x16xf32>
    %11 = vector.shape_cast %10 : vector<1x8x16xf32> to vector<8x16xf32>
    %12 = tpu.transpose %11, [1, 0] : vector<8x16xf32> -> vector<16x8xf32>
    %13 = arith.truncf %6 : vector<16x32xf32> to vector<16x32xbf16>
    %14 = vector.extract_strided_slice %9 {offsets = [0, 0], sizes = [8, 32], strides = [1, 1]} : vector<8x64xf32> to vector<8x32xf32>
    %15 = tpu.transpose %14, [1, 0] : vector<8x32xf32> -> vector<32x8xf32>
    %16 = arith.truncf %15 : vector<32x8xf32> to vector<32x8xbf16>
    %17 = vector.extract_strided_slice %9 {offsets = [0, 32], sizes = [8, 32], strides = [1, 1]} : vector<8x64xf32> to vector<8x32xf32>
    %18 = arith.truncf %17 : vector<8x32xf32> to vector<8x32xbf16>
    %19 = vector.extract_strided_slice %13 {offsets = [0, 0], sizes = [16, 8], strides = [1, 1]} : vector<16x32xbf16> to vector<16x8xbf16>
    %20 = vector.extract_strided_slice %16 {offsets = [0, 0], sizes = [8, 8], strides = [1, 1]} : vector<32x8xbf16> to vector<8x8xbf16>
    %cst_12 = arith.constant dense<0.000000e+00> : vector<16x8xf32>
    %21 = tpu.matmul %19, %20, %cst_12 {dimension_numbers = #tpu.dot_dimension_numbers<[1], [0], [0], [1], [0, 0, 1, 1], [], []>} : vector<16x8xbf16>, vector<8x8xbf16>, vector<16x8xf32> -> vector<16x8xf32>
    %cst_13 = arith.constant 0.000000e+00 : f32
    %22 = vector.broadcast %cst_13 : f32 to vector<16x8xf32>
    %c0_14 = arith.constant 0 : index
    %c0_15 = arith.constant 0 : index
    %23 = memref.load %arg5[%c0_14, %c0_15] : memref<4x16xf32, #tpu.memory_space<smem>>
    %24 = vector.broadcast %23 : f32 to vector<16x8xf32>
    %25 = arith.mulf %21, %24 : vector<16x8xf32>
    %c0_16 = arith.constant 0 : index
    %c4 = arith.constant 4 : index
    %26 = memref.load %arg5[%c0_16, %c4] : memref<4x16xf32, #tpu.memory_space<smem>>
    %27 = vector.broadcast %26 : f32 to vector<16x8xf32>
    %28 = arith.mulf %12, %27 : vector<16x8xf32>
    %29 = arith.addf %25, %28 : vector<16x8xf32>
    %c0_17 = arith.constant 0 : index
    %c8 = arith.constant 8 : index
    %30 = memref.load %arg5[%c0_17, %c8] : memref<4x16xf32, #tpu.memory_space<smem>>
    %31 = vector.broadcast %30 : f32 to vector<16x8xf32>
    %32 = arith.addf %29, %31 : vector<16x8xf32>
    %cst_18 = arith.constant 0.000000e+00 : f32
    %33 = vector.broadcast %cst_18 : f32 to vector<16x8xf32>
    %34 = arith.maximumf %32, %33 : vector<16x8xf32>
    %c0_19 = arith.constant 0 : index
    %c12 = arith.constant 12 : index
    %35 = memref.load %arg5[%c0_19, %c12] : memref<4x16xf32, #tpu.memory_space<smem>>
    %36 = vector.broadcast %35 : f32 to vector<16x8xf32>
    %37 = arith.mulf %34, %36 : vector<16x8xf32>
    %38 = arith.addf %22, %37 : vector<16x8xf32>
    %c0_20 = arith.constant 0 : index
    %c1 = arith.constant 1 : index
    %39 = memref.load %arg5[%c0_20, %c1] : memref<4x16xf32, #tpu.memory_space<smem>>
    %40 = vector.broadcast %39 : f32 to vector<16x8xf32>
    %41 = arith.mulf %21, %40 : vector<16x8xf32>
    %c0_21 = arith.constant 0 : index
    %c5 = arith.constant 5 : index
    %42 = memref.load %arg5[%c0_21, %c5] : memref<4x16xf32, #tpu.memory_space<smem>>
    %43 = vector.broadcast %42 : f32 to vector<16x8xf32>
    %44 = arith.mulf %12, %43 : vector<16x8xf32>
    %45 = arith.addf %41, %44 : vector<16x8xf32>
    %c0_22 = arith.constant 0 : index
    %c9 = arith.constant 9 : index
    %46 = memref.load %arg5[%c0_22, %c9] : memref<4x16xf32, #tpu.memory_space<smem>>
    %47 = vector.broadcast %46 : f32 to vector<16x8xf32>
    %48 = arith.addf %45, %47 : vector<16x8xf32>
    %cst_23 = arith.constant 0.000000e+00 : f32
    %49 = vector.broadcast %cst_23 : f32 to vector<16x8xf32>
    %50 = arith.maximumf %48, %49 : vector<16x8xf32>
    %c0_24 = arith.constant 0 : index
    %c13 = arith.constant 13 : index
    %51 = memref.load %arg5[%c0_24, %c13] : memref<4x16xf32, #tpu.memory_space<smem>>
    %52 = vector.broadcast %51 : f32 to vector<16x8xf32>
    %53 = arith.mulf %50, %52 : vector<16x8xf32>
    %54 = arith.addf %38, %53 : vector<16x8xf32>
    %c0_25 = arith.constant 0 : index
    %c2 = arith.constant 2 : index
    %55 = memref.load %arg5[%c0_25, %c2] : memref<4x16xf32, #tpu.memory_space<smem>>
    %56 = vector.broadcast %55 : f32 to vector<16x8xf32>
    %57 = arith.mulf %21, %56 : vector<16x8xf32>
    %c0_26 = arith.constant 0 : index
    %c6 = arith.constant 6 : index
    %58 = memref.load %arg5[%c0_26, %c6] : memref<4x16xf32, #tpu.memory_space<smem>>
    %59 = vector.broadcast %58 : f32 to vector<16x8xf32>
    %60 = arith.mulf %12, %59 : vector<16x8xf32>
    %61 = arith.addf %57, %60 : vector<16x8xf32>
    %c0_27 = arith.constant 0 : index
    %c10 = arith.constant 10 : index
    %62 = memref.load %arg5[%c0_27, %c10] : memref<4x16xf32, #tpu.memory_space<smem>>
    %63 = vector.broadcast %62 : f32 to vector<16x8xf32>
    %64 = arith.addf %61, %63 : vector<16x8xf32>
    %cst_28 = arith.constant 0.000000e+00 : f32
    %65 = vector.broadcast %cst_28 : f32 to vector<16x8xf32>
    %66 = arith.maximumf %64, %65 : vector<16x8xf32>
    %c0_29 = arith.constant 0 : index
    %c14 = arith.constant 14 : index
    %67 = memref.load %arg5[%c0_29, %c14] : memref<4x16xf32, #tpu.memory_space<smem>>
    %68 = vector.broadcast %67 : f32 to vector<16x8xf32>
    %69 = arith.mulf %66, %68 : vector<16x8xf32>
    %70 = arith.addf %54, %69 : vector<16x8xf32>
    %c0_30 = arith.constant 0 : index
    %c3 = arith.constant 3 : index
    %71 = memref.load %arg5[%c0_30, %c3] : memref<4x16xf32, #tpu.memory_space<smem>>
    %72 = vector.broadcast %71 : f32 to vector<16x8xf32>
    %73 = arith.mulf %21, %72 : vector<16x8xf32>
    %c0_31 = arith.constant 0 : index
    %c7 = arith.constant 7 : index
    %74 = memref.load %arg5[%c0_31, %c7] : memref<4x16xf32, #tpu.memory_space<smem>>
    %75 = vector.broadcast %74 : f32 to vector<16x8xf32>
    %76 = arith.mulf %12, %75 : vector<16x8xf32>
    %77 = arith.addf %73, %76 : vector<16x8xf32>
    %c0_32 = arith.constant 0 : index
    %c11 = arith.constant 11 : index
    %78 = memref.load %arg5[%c0_32, %c11] : memref<4x16xf32, #tpu.memory_space<smem>>
    %79 = vector.broadcast %78 : f32 to vector<16x8xf32>
    %80 = arith.addf %77, %79 : vector<16x8xf32>
    %cst_33 = arith.constant 0.000000e+00 : f32
    %81 = vector.broadcast %cst_33 : f32 to vector<16x8xf32>
    %82 = arith.maximumf %80, %81 : vector<16x8xf32>
    %c0_34 = arith.constant 0 : index
    %c15 = arith.constant 15 : index
    %83 = memref.load %arg5[%c0_34, %c15] : memref<4x16xf32, #tpu.memory_space<smem>>
    %84 = vector.broadcast %83 : f32 to vector<16x8xf32>
    %85 = arith.mulf %82, %84 : vector<16x8xf32>
    %86 = arith.addf %70, %85 : vector<16x8xf32>
    %cst_35 = arith.constant dense<0xFF800000> : vector<16xf32>
    %87 = vector.multi_reduction <maximumf>, %86, %cst_35 [1] : vector<16x8xf32> to vector<16xf32>
    %88 = vector.shape_cast %87 : vector<16xf32> to vector<16x1xf32>
    %89 = vector.broadcast %88 : vector<16x1xf32> to vector<16x8xf32>
    %90 = arith.subf %86, %89 : vector<16x8xf32>
    %91 = math.exp %90 : vector<16x8xf32>
    %cst_36 = arith.constant dense<0.000000e+00> : vector<16xf32>
    %92 = vector.multi_reduction <add>, %91, %cst_36 [1] : vector<16x8xf32> to vector<16xf32>
    %93 = vector.shape_cast %92 : vector<16xf32> to vector<16x1xf32>
    %94 = tpu.reciprocal %93 {approx = true} : vector<16x1xf32> -> vector<16x1xf32>
    %95 = arith.mulf %93, %94 : vector<16x1xf32>
    %cst_37 = arith.constant 2.000000e+00 : f32
    %96 = vector.broadcast %cst_37 : f32 to vector<16x1xf32>
    %97 = arith.subf %96, %95 : vector<16x1xf32>
    %98 = arith.mulf %94, %97 : vector<16x1xf32>
    %99 = vector.broadcast %98 : vector<16x1xf32> to vector<16x8xf32>
    %100 = arith.mulf %91, %99 : vector<16x8xf32>
    %101 = arith.truncf %100 : vector<16x8xf32> to vector<16x8xbf16>
    %102 = vector.extract_strided_slice %18 {offsets = [0, 0], sizes = [8, 8], strides = [1, 1]} : vector<8x32xbf16> to vector<8x8xbf16>
    %cst_38 = arith.constant dense<0.000000e+00> : vector<16x8xf32>
    %103 = tpu.matmul %101, %102, %cst_38 {dimension_numbers = #tpu.dot_dimension_numbers<[1], [0], [0], [1], [0, 0, 1, 1], [], []>} : vector<16x8xbf16>, vector<8x8xbf16>, vector<16x8xf32> -> vector<16x8xf32>
    %c0_39 = arith.constant 0 : index
    %c0_40 = arith.constant 0 : index
    %104 = vector.load %arg11[%c0_39, %c0_40] : memref<16x32xf32, #tpu.memory_space<vmem>>, vector<16x8xf32>
    tpu.vector_store %arg11[%c0_39, %c0_40], %103 {strides = array<i32>} : memref<16x32xf32, #tpu.memory_space<vmem>>, vector<16x8xf32>,
    %105 = vector.extract_strided_slice %13 {offsets = [0, 8], sizes = [16, 8], strides = [1, 1]} : vector<16x32xbf16> to vector<16x8xbf16>
    %106 = vector.extract_strided_slice %16 {offsets = [8, 0], sizes = [8, 8], strides = [1, 1]} : vector<32x8xbf16> to vector<8x8xbf16>
    %cst_41 = arith.constant dense<0.000000e+00> : vector<16x8xf32>
    %107 = tpu.matmul %105, %106, %cst_41 {dimension_numbers = #tpu.dot_dimension_numbers<[1], [0], [0], [1], [0, 0, 1, 1], [], []>} : vector<16x8xbf16>, vector<8x8xbf16>, vector<16x8xf32> -> vector<16x8xf32>
    %cst_42 = arith.constant 0.000000e+00 : f32
    %108 = vector.broadcast %cst_42 : f32 to vector<16x8xf32>
    %c1_43 = arith.constant 1 : index
    %c0_44 = arith.constant 0 : index
    %109 = memref.load %arg5[%c1_43, %c0_44] : memref<4x16xf32, #tpu.memory_space<smem>>
    %110 = vector.broadcast %109 : f32 to vector<16x8xf32>
    %111 = arith.mulf %107, %110 : vector<16x8xf32>
    %c1_45 = arith.constant 1 : index
    %c4_46 = arith.constant 4 : index
    %112 = memref.load %arg5[%c1_45, %c4_46] : memref<4x16xf32, #tpu.memory_space<smem>>
    %113 = vector.broadcast %112 : f32 to vector<16x8xf32>
    %114 = arith.mulf %12, %113 : vector<16x8xf32>
    %115 = arith.addf %111, %114 : vector<16x8xf32>
    %c1_47 = arith.constant 1 : index
    %c8_48 = arith.constant 8 : index
    %116 = memref.load %arg5[%c1_47, %c8_48] : memref<4x16xf32, #tpu.memory_space<smem>>
    %117 = vector.broadcast %116 : f32 to vector<16x8xf32>
    %118 = arith.addf %115, %117 : vector<16x8xf32>
    %cst_49 = arith.constant 0.000000e+00 : f32
    %119 = vector.broadcast %cst_49 : f32 to vector<16x8xf32>
    %120 = arith.maximumf %118, %119 : vector<16x8xf32>
    %c1_50 = arith.constant 1 : index
    %c12_51 = arith.constant 12 : index
    %121 = memref.load %arg5[%c1_50, %c12_51] : memref<4x16xf32, #tpu.memory_space<smem>>
    %122 = vector.broadcast %121 : f32 to vector<16x8xf32>
    %123 = arith.mulf %120, %122 : vector<16x8xf32>
    %124 = arith.addf %108, %123 : vector<16x8xf32>
    %c1_52 = arith.constant 1 : index
    %c1_53 = arith.constant 1 : index
    %125 = memref.load %arg5[%c1_52, %c1_53] : memref<4x16xf32, #tpu.memory_space<smem>>
    %126 = vector.broadcast %125 : f32 to vector<16x8xf32>
    %127 = arith.mulf %107, %126 : vector<16x8xf32>
    %c1_54 = arith.constant 1 : index
    %c5_55 = arith.constant 5 : index
    %128 = memref.load %arg5[%c1_54, %c5_55] : memref<4x16xf32, #tpu.memory_space<smem>>
    %129 = vector.broadcast %128 : f32 to vector<16x8xf32>
    %130 = arith.mulf %12, %129 : vector<16x8xf32>
    %131 = arith.addf %127, %130 : vector<16x8xf32>
    %c1_56 = arith.constant 1 : index
    %c9_57 = arith.constant 9 : index
    %132 = memref.load %arg5[%c1_56, %c9_57] : memref<4x16xf32, #tpu.memory_space<smem>>
    %133 = vector.broadcast %132 : f32 to vector<16x8xf32>
    %134 = arith.addf %131, %133 : vector<16x8xf32>
    %cst_58 = arith.constant 0.000000e+00 : f32
    %135 = vector.broadcast %cst_58 : f32 to vector<16x8xf32>
    %136 = arith.maximumf %134, %135 : vector<16x8xf32>
    %c1_59 = arith.constant 1 : index
    %c13_60 = arith.constant 13 : index
    %137 = memref.load %arg5[%c1_59, %c13_60] : memref<4x16xf32, #tpu.memory_space<smem>>
    %138 = vector.broadcast %137 : f32 to vector<16x8xf32>
    %139 = arith.mulf %136, %138 : vector<16x8xf32>
    %140 = arith.addf %124, %139 : vector<16x8xf32>
    %c1_61 = arith.constant 1 : index
    %c2_62 = arith.constant 2 : index
    %141 = memref.load %arg5[%c1_61, %c2_62] : memref<4x16xf32, #tpu.memory_space<smem>>
    %142 = vector.broadcast %141 : f32 to vector<16x8xf32>
    %143 = arith.mulf %107, %142 : vector<16x8xf32>
    %c1_63 = arith.constant 1 : index
    %c6_64 = arith.constant 6 : index
    %144 = memref.load %arg5[%c1_63, %c6_64] : memref<4x16xf32, #tpu.memory_space<smem>>
    %145 = vector.broadcast %144 : f32 to vector<16x8xf32>
    %146 = arith.mulf %12, %145 : vector<16x8xf32>
    %147 = arith.addf %143, %146 : vector<16x8xf32>
    %c1_65 = arith.constant 1 : index
    %c10_66 = arith.constant 10 : index
    %148 = memref.load %arg5[%c1_65, %c10_66] : memref<4x16xf32, #tpu.memory_space<smem>>
    %149 = vector.broadcast %148 : f32 to vector<16x8xf32>
    %150 = arith.addf %147, %149 : vector<16x8xf32>
    %cst_67 = arith.constant 0.000000e+00 : f32
    %151 = vector.broadcast %cst_67 : f32 to vector<16x8xf32>
    %152 = arith.maximumf %150, %151 : vector<16x8xf32>
    %c1_68 = arith.constant 1 : index
    %c14_69 = arith.constant 14 : index
    %153 = memref.load %arg5[%c1_68, %c14_69] : memref<4x16xf32, #tpu.memory_space<smem>>
    %154 = vector.broadcast %153 : f32 to vector<16x8xf32>
    %155 = arith.mulf %152, %154 : vector<16x8xf32>
    %156 = arith.addf %140, %155 : vector<16x8xf32>
    %c1_70 = arith.constant 1 : index
    %c3_71 = arith.constant 3 : index
    %157 = memref.load %arg5[%c1_70, %c3_71] : memref<4x16xf32, #tpu.memory_space<smem>>
    %158 = vector.broadcast %157 : f32 to vector<16x8xf32>
    %159 = arith.mulf %107, %158 : vector<16x8xf32>
    %c1_72 = arith.constant 1 : index
    %c7_73 = arith.constant 7 : index
    %160 = memref.load %arg5[%c1_72, %c7_73] : memref<4x16xf32, #tpu.memory_space<smem>>
    %161 = vector.broadcast %160 : f32 to vector<16x8xf32>
    %162 = arith.mulf %12, %161 : vector<16x8xf32>
    %163 = arith.addf %159, %162 : vector<16x8xf32>
    %c1_74 = arith.constant 1 : index
    %c11_75 = arith.constant 11 : index
    %164 = memref.load %arg5[%c1_74, %c11_75] : memref<4x16xf32, #tpu.memory_space<smem>>
    %165 = vector.broadcast %164 : f32 to vector<16x8xf32>
    %166 = arith.addf %163, %165 : vector<16x8xf32>
    %cst_76 = arith.constant 0.000000e+00 : f32
    %167 = vector.broadcast %cst_76 : f32 to vector<16x8xf32>
    %168 = arith.maximumf %166, %167 : vector<16x8xf32>
    %c1_77 = arith.constant 1 : index
    %c15_78 = arith.constant 15 : index
    %169 = memref.load %arg5[%c1_77, %c15_78] : memref<4x16xf32, #tpu.memory_space<smem>>
    %170 = vector.broadcast %169 : f32 to vector<16x8xf32>
    %171 = arith.mulf %168, %170 : vector<16x8xf32>
    %172 = arith.addf %156, %171 : vector<16x8xf32>
    %cst_79 = arith.constant dense<0xFF800000> : vector<16xf32>
    %173 = vector.multi_reduction <maximumf>, %172, %cst_79 [1] : vector<16x8xf32> to vector<16xf32>
    %174 = vector.shape_cast %173 : vector<16xf32> to vector<16x1xf32>
    %175 = vector.broadcast %174 : vector<16x1xf32> to vector<16x8xf32>
    %176 = arith.subf %172, %175 : vector<16x8xf32>
    %177 = math.exp %176 : vector<16x8xf32>
    %cst_80 = arith.constant dense<0.000000e+00> : vector<16xf32>
    %178 = vector.multi_reduction <add>, %177, %cst_80 [1] : vector<16x8xf32> to vector<16xf32>
    %179 = vector.shape_cast %178 : vector<16xf32> to vector<16x1xf32>
    %180 = tpu.reciprocal %179 {approx = true} : vector<16x1xf32> -> vector<16x1xf32>
    %181 = arith.mulf %179, %180 : vector<16x1xf32>
    %cst_81 = arith.constant 2.000000e+00 : f32
    %182 = vector.broadcast %cst_81 : f32 to vector<16x1xf32>
    %183 = arith.subf %182, %181 : vector<16x1xf32>
    %184 = arith.mulf %180, %183 : vector<16x1xf32>
    %185 = vector.broadcast %184 : vector<16x1xf32> to vector<16x8xf32>
    %186 = arith.mulf %177, %185 : vector<16x8xf32>
    %187 = arith.truncf %186 : vector<16x8xf32> to vector<16x8xbf16>
    %188 = vector.extract_strided_slice %18 {offsets = [0, 8], sizes = [8, 8], strides = [1, 1]} : vector<8x32xbf16> to vector<8x8xbf16>
    %cst_82 = arith.constant dense<0.000000e+00> : vector<16x8xf32>
    %189 = tpu.matmul %187, %188, %cst_82 {dimension_numbers = #tpu.dot_dimension_numbers<[1], [0], [0], [1], [0, 0, 1, 1], [], []>} : vector<16x8xbf16>, vector<8x8xbf16>, vector<16x8xf32> -> vector<16x8xf32>
    %c0_83 = arith.constant 0 : index
    %c8_84 = arith.constant 8 : index
    %190 = vector.load %arg11[%c0_83, %c8_84] : memref<16x32xf32, #tpu.memory_space<vmem>>, vector<16x8xf32>
    tpu.vector_store %arg11[%c0_83, %c8_84], %189 {strides = array<i32>} : memref<16x32xf32, #tpu.memory_space<vmem>>, vector<16x8xf32>,
    %191 = vector.extract_strided_slice %13 {offsets = [0, 16], sizes = [16, 8], strides = [1, 1]} : vector<16x32xbf16> to vector<16x8xbf16>
    %192 = vector.extract_strided_slice %16 {offsets = [16, 0], sizes = [8, 8], strides = [1, 1]} : vector<32x8xbf16> to vector<8x8xbf16>
    %cst_85 = arith.constant dense<0.000000e+00> : vector<16x8xf32>
    %193 = tpu.matmul %191, %192, %cst_85 {dimension_numbers = #tpu.dot_dimension_numbers<[1], [0], [0], [1], [0, 0, 1, 1], [], []>} : vector<16x8xbf16>, vector<8x8xbf16>, vector<16x8xf32> -> vector<16x8xf32>
    %cst_86 = arith.constant 0.000000e+00 : f32
    %194 = vector.broadcast %cst_86 : f32 to vector<16x8xf32>
    %c2_87 = arith.constant 2 : index
    %c0_88 = arith.constant 0 : index
    %195 = memref.load %arg5[%c2_87, %c0_88] : memref<4x16xf32, #tpu.memory_space<smem>>
    %196 = vector.broadcast %195 : f32 to vector<16x8xf32>
    %197 = arith.mulf %193, %196 : vector<16x8xf32>
    %c2_89 = arith.constant 2 : index
    %c4_90 = arith.constant 4 : index
    %198 = memref.load %arg5[%c2_89, %c4_90] : memref<4x16xf32, #tpu.memory_space<smem>>
    %199 = vector.broadcast %198 : f32 to vector<16x8xf32>
    %200 = arith.mulf %12, %199 : vector<16x8xf32>
    %201 = arith.addf %197, %200 : vector<16x8xf32>
    %c2_91 = arith.constant 2 : index
    %c8_92 = arith.constant 8 : index
    %202 = memref.load %arg5[%c2_91, %c8_92] : memref<4x16xf32, #tpu.memory_space<smem>>
    %203 = vector.broadcast %202 : f32 to vector<16x8xf32>
    %204 = arith.addf %201, %203 : vector<16x8xf32>
    %cst_93 = arith.constant 0.000000e+00 : f32
    %205 = vector.broadcast %cst_93 : f32 to vector<16x8xf32>
    %206 = arith.maximumf %204, %205 : vector<16x8xf32>
    %c2_94 = arith.constant 2 : index
    %c12_95 = arith.constant 12 : index
    %207 = memref.load %arg5[%c2_94, %c12_95] : memref<4x16xf32, #tpu.memory_space<smem>>
    %208 = vector.broadcast %207 : f32 to vector<16x8xf32>
    %209 = arith.mulf %206, %208 : vector<16x8xf32>
    %210 = arith.addf %194, %209 : vector<16x8xf32>
    %c2_96 = arith.constant 2 : index
    %c1_97 = arith.constant 1 : index
    %211 = memref.load %arg5[%c2_96, %c1_97] : memref<4x16xf32, #tpu.memory_space<smem>>
    %212 = vector.broadcast %211 : f32 to vector<16x8xf32>
    %213 = arith.mulf %193, %212 : vector<16x8xf32>
    %c2_98 = arith.constant 2 : index
    %c5_99 = arith.constant 5 : index
    %214 = memref.load %arg5[%c2_98, %c5_99] : memref<4x16xf32, #tpu.memory_space<smem>>
    %215 = vector.broadcast %214 : f32 to vector<16x8xf32>
    %216 = arith.mulf %12, %215 : vector<16x8xf32>
    %217 = arith.addf %213, %216 : vector<16x8xf32>
    %c2_100 = arith.constant 2 : index
    %c9_101 = arith.constant 9 : index
    %218 = memref.load %arg5[%c2_100, %c9_101] : memref<4x16xf32, #tpu.memory_space<smem>>
    %219 = vector.broadcast %218 : f32 to vector<16x8xf32>
    %220 = arith.addf %217, %219 : vector<16x8xf32>
    %cst_102 = arith.constant 0.000000e+00 : f32
    %221 = vector.broadcast %cst_102 : f32 to vector<16x8xf32>
    %222 = arith.maximumf %220, %221 : vector<16x8xf32>
    %c2_103 = arith.constant 2 : index
    %c13_104 = arith.constant 13 : index
    %223 = memref.load %arg5[%c2_103, %c13_104] : memref<4x16xf32, #tpu.memory_space<smem>>
    %224 = vector.broadcast %223 : f32 to vector<16x8xf32>
    %225 = arith.mulf %222, %224 : vector<16x8xf32>
    %226 = arith.addf %210, %225 : vector<16x8xf32>
    %c2_105 = arith.constant 2 : index
    %c2_106 = arith.constant 2 : index
    %227 = memref.load %arg5[%c2_105, %c2_106] : memref<4x16xf32, #tpu.memory_space<smem>>
    %228 = vector.broadcast %227 : f32 to vector<16x8xf32>
    %229 = arith.mulf %193, %228 : vector<16x8xf32>
    %c2_107 = arith.constant 2 : index
    %c6_108 = arith.constant 6 : index
    %230 = memref.load %arg5[%c2_107, %c6_108] : memref<4x16xf32, #tpu.memory_space<smem>>
    %231 = vector.broadcast %230 : f32 to vector<16x8xf32>
    %232 = arith.mulf %12, %231 : vector<16x8xf32>
    %233 = arith.addf %229, %232 : vector<16x8xf32>
    %c2_109 = arith.constant 2 : index
    %c10_110 = arith.constant 10 : index
    %234 = memref.load %arg5[%c2_109, %c10_110] : memref<4x16xf32, #tpu.memory_space<smem>>
    %235 = vector.broadcast %234 : f32 to vector<16x8xf32>
    %236 = arith.addf %233, %235 : vector<16x8xf32>
    %cst_111 = arith.constant 0.000000e+00 : f32
    %237 = vector.broadcast %cst_111 : f32 to vector<16x8xf32>
    %238 = arith.maximumf %236, %237 : vector<16x8xf32>
    %c2_112 = arith.constant 2 : index
    %c14_113 = arith.constant 14 : index
    %239 = memref.load %arg5[%c2_112, %c14_113] : memref<4x16xf32, #tpu.memory_space<smem>>
    %240 = vector.broadcast %239 : f32 to vector<16x8xf32>
    %241 = arith.mulf %238, %240 : vector<16x8xf32>
    %242 = arith.addf %226, %241 : vector<16x8xf32>
    %c2_114 = arith.constant 2 : index
    %c3_115 = arith.constant 3 : index
    %243 = memref.load %arg5[%c2_114, %c3_115] : memref<4x16xf32, #tpu.memory_space<smem>>
    %244 = vector.broadcast %243 : f32 to vector<16x8xf32>
    %245 = arith.mulf %193, %244 : vector<16x8xf32>
    %c2_116 = arith.constant 2 : index
    %c7_117 = arith.constant 7 : index
    %246 = memref.load %arg5[%c2_116, %c7_117] : memref<4x16xf32, #tpu.memory_space<smem>>
    %247 = vector.broadcast %246 : f32 to vector<16x8xf32>
    %248 = arith.mulf %12, %247 : vector<16x8xf32>
    %249 = arith.addf %245, %248 : vector<16x8xf32>
    %c2_118 = arith.constant 2 : index
    %c11_119 = arith.constant 11 : index
    %250 = memref.load %arg5[%c2_118, %c11_119] : memref<4x16xf32, #tpu.memory_space<smem>>
    %251 = vector.broadcast %250 : f32 to vector<16x8xf32>
    %252 = arith.addf %249, %251 : vector<16x8xf32>
    %cst_120 = arith.constant 0.000000e+00 : f32
    %253 = vector.broadcast %cst_120 : f32 to vector<16x8xf32>
    %254 = arith.maximumf %252, %253 : vector<16x8xf32>
    %c2_121 = arith.constant 2 : index
    %c15_122 = arith.constant 15 : index
    %255 = memref.load %arg5[%c2_121, %c15_122] : memref<4x16xf32, #tpu.memory_space<smem>>
    %256 = vector.broadcast %255 : f32 to vector<16x8xf32>
    %257 = arith.mulf %254, %256 : vector<16x8xf32>
    %258 = arith.addf %242, %257 : vector<16x8xf32>
    %cst_123 = arith.constant dense<0xFF800000> : vector<16xf32>
    %259 = vector.multi_reduction <maximumf>, %258, %cst_123 [1] : vector<16x8xf32> to vector<16xf32>
    %260 = vector.shape_cast %259 : vector<16xf32> to vector<16x1xf32>
    %261 = vector.broadcast %260 : vector<16x1xf32> to vector<16x8xf32>
    %262 = arith.subf %258, %261 : vector<16x8xf32>
    %263 = math.exp %262 : vector<16x8xf32>
    %cst_124 = arith.constant dense<0.000000e+00> : vector<16xf32>
    %264 = vector.multi_reduction <add>, %263, %cst_124 [1] : vector<16x8xf32> to vector<16xf32>
    %265 = vector.shape_cast %264 : vector<16xf32> to vector<16x1xf32>
    %266 = tpu.reciprocal %265 {approx = true} : vector<16x1xf32> -> vector<16x1xf32>
    %267 = arith.mulf %265, %266 : vector<16x1xf32>
    %cst_125 = arith.constant 2.000000e+00 : f32
    %268 = vector.broadcast %cst_125 : f32 to vector<16x1xf32>
    %269 = arith.subf %268, %267 : vector<16x1xf32>
    %270 = arith.mulf %266, %269 : vector<16x1xf32>
    %271 = vector.broadcast %270 : vector<16x1xf32> to vector<16x8xf32>
    %272 = arith.mulf %263, %271 : vector<16x8xf32>
    %273 = arith.truncf %272 : vector<16x8xf32> to vector<16x8xbf16>
    %274 = vector.extract_strided_slice %18 {offsets = [0, 16], sizes = [8, 8], strides = [1, 1]} : vector<8x32xbf16> to vector<8x8xbf16>
    %cst_126 = arith.constant dense<0.000000e+00> : vector<16x8xf32>
    %275 = tpu.matmul %273, %274, %cst_126 {dimension_numbers = #tpu.dot_dimension_numbers<[1], [0], [0], [1], [0, 0, 1, 1], [], []>} : vector<16x8xbf16>, vector<8x8xbf16>, vector<16x8xf32> -> vector<16x8xf32>
    %c0_127 = arith.constant 0 : index
    %c16 = arith.constant 16 : index
    %276 = vector.load %arg11[%c0_127, %c16] : memref<16x32xf32, #tpu.memory_space<vmem>>, vector<16x8xf32>
    tpu.vector_store %arg11[%c0_127, %c16], %275 {strides = array<i32>} : memref<16x32xf32, #tpu.memory_space<vmem>>, vector<16x8xf32>,
    %277 = vector.extract_strided_slice %13 {offsets = [0, 24], sizes = [16, 8], strides = [1, 1]} : vector<16x32xbf16> to vector<16x8xbf16>
    %278 = vector.extract_strided_slice %16 {offsets = [24, 0], sizes = [8, 8], strides = [1, 1]} : vector<32x8xbf16> to vector<8x8xbf16>
    %cst_128 = arith.constant dense<0.000000e+00> : vector<16x8xf32>
    %279 = tpu.matmul %277, %278, %cst_128 {dimension_numbers = #tpu.dot_dimension_numbers<[1], [0], [0], [1], [0, 0, 1, 1], [], []>} : vector<16x8xbf16>, vector<8x8xbf16>, vector<16x8xf32> -> vector<16x8xf32>
    %cst_129 = arith.constant 0.000000e+00 : f32
    %280 = vector.broadcast %cst_129 : f32 to vector<16x8xf32>
    %c3_130 = arith.constant 3 : index
    %c0_131 = arith.constant 0 : index
    %281 = memref.load %arg5[%c3_130, %c0_131] : memref<4x16xf32, #tpu.memory_space<smem>>
    %282 = vector.broadcast %281 : f32 to vector<16x8xf32>
    %283 = arith.mulf %279, %282 : vector<16x8xf32>
    %c3_132 = arith.constant 3 : index
    %c4_133 = arith.constant 4 : index
    %284 = memref.load %arg5[%c3_132, %c4_133] : memref<4x16xf32, #tpu.memory_space<smem>>
    %285 = vector.broadcast %284 : f32 to vector<16x8xf32>
    %286 = arith.mulf %12, %285 : vector<16x8xf32>
    %287 = arith.addf %283, %286 : vector<16x8xf32>
    %c3_134 = arith.constant 3 : index
    %c8_135 = arith.constant 8 : index
    %288 = memref.load %arg5[%c3_134, %c8_135] : memref<4x16xf32, #tpu.memory_space<smem>>
    %289 = vector.broadcast %288 : f32 to vector<16x8xf32>
    %290 = arith.addf %287, %289 : vector<16x8xf32>
    %cst_136 = arith.constant 0.000000e+00 : f32
    %291 = vector.broadcast %cst_136 : f32 to vector<16x8xf32>
    %292 = arith.maximumf %290, %291 : vector<16x8xf32>
    %c3_137 = arith.constant 3 : index
    %c12_138 = arith.constant 12 : index
    %293 = memref.load %arg5[%c3_137, %c12_138] : memref<4x16xf32, #tpu.memory_space<smem>>
    %294 = vector.broadcast %293 : f32 to vector<16x8xf32>
    %295 = arith.mulf %292, %294 : vector<16x8xf32>
    %296 = arith.addf %280, %295 : vector<16x8xf32>
    %c3_139 = arith.constant 3 : index
    %c1_140 = arith.constant 1 : index
    %297 = memref.load %arg5[%c3_139, %c1_140] : memref<4x16xf32, #tpu.memory_space<smem>>
    %298 = vector.broadcast %297 : f32 to vector<16x8xf32>
    %299 = arith.mulf %279, %298 : vector<16x8xf32>
    %c3_141 = arith.constant 3 : index
    %c5_142 = arith.constant 5 : index
    %300 = memref.load %arg5[%c3_141, %c5_142] : memref<4x16xf32, #tpu.memory_space<smem>>
    %301 = vector.broadcast %300 : f32 to vector<16x8xf32>
    %302 = arith.mulf %12, %301 : vector<16x8xf32>
    %303 = arith.addf %299, %302 : vector<16x8xf32>
    %c3_143 = arith.constant 3 : index
    %c9_144 = arith.constant 9 : index
    %304 = memref.load %arg5[%c3_143, %c9_144] : memref<4x16xf32, #tpu.memory_space<smem>>
    %305 = vector.broadcast %304 : f32 to vector<16x8xf32>
    %306 = arith.addf %303, %305 : vector<16x8xf32>
    %cst_145 = arith.constant 0.000000e+00 : f32
    %307 = vector.broadcast %cst_145 : f32 to vector<16x8xf32>
    %308 = arith.maximumf %306, %307 : vector<16x8xf32>
    %c3_146 = arith.constant 3 : index
    %c13_147 = arith.constant 13 : index
    %309 = memref.load %arg5[%c3_146, %c13_147] : memref<4x16xf32, #tpu.memory_space<smem>>
    %310 = vector.broadcast %309 : f32 to vector<16x8xf32>
    %311 = arith.mulf %308, %310 : vector<16x8xf32>
    %312 = arith.addf %296, %311 : vector<16x8xf32>
    %c3_148 = arith.constant 3 : index
    %c2_149 = arith.constant 2 : index
    %313 = memref.load %arg5[%c3_148, %c2_149] : memref<4x16xf32, #tpu.memory_space<smem>>
    %314 = vector.broadcast %313 : f32 to vector<16x8xf32>
    %315 = arith.mulf %279, %314 : vector<16x8xf32>
    %c3_150 = arith.constant 3 : index
    %c6_151 = arith.constant 6 : index
    %316 = memref.load %arg5[%c3_150, %c6_151] : memref<4x16xf32, #tpu.memory_space<smem>>
    %317 = vector.broadcast %316 : f32 to vector<16x8xf32>
    %318 = arith.mulf %12, %317 : vector<16x8xf32>
    %319 = arith.addf %315, %318 : vector<16x8xf32>
    %c3_152 = arith.constant 3 : index
    %c10_153 = arith.constant 10 : index
    %320 = memref.load %arg5[%c3_152, %c10_153] : memref<4x16xf32, #tpu.memory_space<smem>>
    %321 = vector.broadcast %320 : f32 to vector<16x8xf32>
    %322 = arith.addf %319, %321 : vector<16x8xf32>
    %cst_154 = arith.constant 0.000000e+00 : f32
    %323 = vector.broadcast %cst_154 : f32 to vector<16x8xf32>
    %324 = arith.maximumf %322, %323 : vector<16x8xf32>
    %c3_155 = arith.constant 3 : index
    %c14_156 = arith.constant 14 : index
    %325 = memref.load %arg5[%c3_155, %c14_156] : memref<4x16xf32, #tpu.memory_space<smem>>
    %326 = vector.broadcast %325 : f32 to vector<16x8xf32>
    %327 = arith.mulf %324, %326 : vector<16x8xf32>
    %328 = arith.addf %312, %327 : vector<16x8xf32>
    %c3_157 = arith.constant 3 : index
    %c3_158 = arith.constant 3 : index
    %329 = memref.load %arg5[%c3_157, %c3_158] : memref<4x16xf32, #tpu.memory_space<smem>>
    %330 = vector.broadcast %329 : f32 to vector<16x8xf32>
    %331 = arith.mulf %279, %330 : vector<16x8xf32>
    %c3_159 = arith.constant 3 : index
    %c7_160 = arith.constant 7 : index
    %332 = memref.load %arg5[%c3_159, %c7_160] : memref<4x16xf32, #tpu.memory_space<smem>>
    %333 = vector.broadcast %332 : f32 to vector<16x8xf32>
    %334 = arith.mulf %12, %333 : vector<16x8xf32>
    %335 = arith.addf %331, %334 : vector<16x8xf32>
    %c3_161 = arith.constant 3 : index
    %c11_162 = arith.constant 11 : index
    %336 = memref.load %arg5[%c3_161, %c11_162] : memref<4x16xf32, #tpu.memory_space<smem>>
    %337 = vector.broadcast %336 : f32 to vector<16x8xf32>
    %338 = arith.addf %335, %337 : vector<16x8xf32>
    %cst_163 = arith.constant 0.000000e+00 : f32
    %339 = vector.broadcast %cst_163 : f32 to vector<16x8xf32>
    %340 = arith.maximumf %338, %339 : vector<16x8xf32>
    %c3_164 = arith.constant 3 : index
    %c15_165 = arith.constant 15 : index
    %341 = memref.load %arg5[%c3_164, %c15_165] : memref<4x16xf32, #tpu.memory_space<smem>>
    %342 = vector.broadcast %341 : f32 to vector<16x8xf32>
    %343 = arith.mulf %340, %342 : vector<16x8xf32>
    %344 = arith.addf %328, %343 : vector<16x8xf32>
    %cst_166 = arith.constant dense<0xFF800000> : vector<16xf32>
    %345 = vector.multi_reduction <maximumf>, %344, %cst_166 [1] : vector<16x8xf32> to vector<16xf32>
    %346 = vector.shape_cast %345 : vector<16xf32> to vector<16x1xf32>
    %347 = vector.broadcast %346 : vector<16x1xf32> to vector<16x8xf32>
    %348 = arith.subf %344, %347 : vector<16x8xf32>
    %349 = math.exp %348 : vector<16x8xf32>
    %cst_167 = arith.constant dense<0.000000e+00> : vector<16xf32>
    %350 = vector.multi_reduction <add>, %349, %cst_167 [1] : vector<16x8xf32> to vector<16xf32>
    %351 = vector.shape_cast %350 : vector<16xf32> to vector<16x1xf32>
    %352 = tpu.reciprocal %351 {approx = true} : vector<16x1xf32> -> vector<16x1xf32>
    %353 = arith.mulf %351, %352 : vector<16x1xf32>
    %cst_168 = arith.constant 2.000000e+00 : f32
    %354 = vector.broadcast %cst_168 : f32 to vector<16x1xf32>
    %355 = arith.subf %354, %353 : vector<16x1xf32>
    %356 = arith.mulf %352, %355 : vector<16x1xf32>
    %357 = vector.broadcast %356 : vector<16x1xf32> to vector<16x8xf32>
    %358 = arith.mulf %349, %357 : vector<16x8xf32>
    %359 = arith.truncf %358 : vector<16x8xf32> to vector<16x8xbf16>
    %360 = vector.extract_strided_slice %18 {offsets = [0, 24], sizes = [8, 8], strides = [1, 1]} : vector<8x32xbf16> to vector<8x8xbf16>
    %cst_169 = arith.constant dense<0.000000e+00> : vector<16x8xf32>
    %361 = tpu.matmul %359, %360, %cst_169 {dimension_numbers = #tpu.dot_dimension_numbers<[1], [0], [0], [1], [0, 0, 1, 1], [], []>} : vector<16x8xbf16>, vector<8x8xbf16>, vector<16x8xf32> -> vector<16x8xf32>
    %c0_170 = arith.constant 0 : index
    %c24 = arith.constant 24 : index
    %362 = vector.load %arg11[%c0_170, %c24] : memref<16x32xf32, #tpu.memory_space<vmem>>, vector<16x8xf32>
    tpu.vector_store %arg11[%c0_170, %c24], %361 {strides = array<i32>} : memref<16x32xf32, #tpu.memory_space<vmem>>, vector<16x8xf32>,
    %c0_171 = arith.constant 0 : index
    %c0_172 = arith.constant 0 : index
    %363 = vector.load %arg8[%c0_171, %c0_172] : memref<6x32xf32, #tpu.memory_space<vmem>>, vector<1x32xf32>
    %c1_173 = arith.constant 1 : index
    %c0_174 = arith.constant 0 : index
    %364 = vector.load %arg8[%c1_173, %c0_174] : memref<6x32xf32, #tpu.memory_space<vmem>>, vector<1x32xf32>
    %c2_175 = arith.constant 2 : index
    %c0_176 = arith.constant 0 : index
    %365 = vector.load %arg8[%c2_175, %c0_176] : memref<6x32xf32, #tpu.memory_space<vmem>>, vector<1x32xf32>
    %c3_177 = arith.constant 3 : index
    %c0_178 = arith.constant 0 : index
    %366 = vector.load %arg8[%c3_177, %c0_178] : memref<6x32xf32, #tpu.memory_space<vmem>>, vector<1x32xf32>
    %c4_179 = arith.constant 4 : index
    %c0_180 = arith.constant 0 : index
    %367 = vector.load %arg8[%c4_179, %c0_180] : memref<6x32xf32, #tpu.memory_space<vmem>>, vector<1x32xf32>
    %c5_181 = arith.constant 5 : index
    %c0_182 = arith.constant 0 : index
    %368 = vector.load %arg8[%c5_181, %c0_182] : memref<6x32xf32, #tpu.memory_space<vmem>>, vector<1x32xf32>
    %c0_183 = arith.constant 0 : index
    %c0_184 = arith.constant 0 : index
    %369 = vector.load %arg11[%c0_183, %c0_184] : memref<16x32xf32, #tpu.memory_space<vmem>>, vector<16x32xf32>
    %370 = arith.truncf %369 : vector<16x32xf32> to vector<16x32xbf16>
    %c0_185 = arith.constant 0 : index
    %c0_186 = arith.constant 0 : index
    %371 = vector.load %arg6[%c0_185, %c0_186] : memref<32x96xbf16, #tpu.memory_space<vmem>>, vector<32x32xbf16>
    %cst_187 = arith.constant dense<0.000000e+00> : vector<16x32xf32>
    %372 = tpu.matmul %370, %371, %cst_187 {dimension_numbers = #tpu.dot_dimension_numbers<[1], [0], [0], [1], [0, 0, 1, 1], [], []>} : vector<16x32xbf16>, vector<32x32xbf16>, vector<16x32xf32> -> vector<16x32xf32>
    %373 = vector.broadcast %363 : vector<1x32xf32> to vector<16x32xf32>
    %374 = arith.addf %372, %373 : vector<16x32xf32>
    %375 = arith.addf %1, %374 : vector<16x32xf32>
    %376 = vector.shape_cast %375 : vector<16x32xf32> to vector<1x16x32xf32>
    %cst_188 = arith.constant dense<0.000000e+00> : vector<1x32xf32>
    %377 = vector.multi_reduction <add>, %376, %cst_188 [1] : vector<1x16x32xf32> to vector<1x32xf32>
    %378 = vector.shape_cast %377 : vector<1x32xf32> to vector<1x1x32xf32>
    %cst_189 = arith.constant 6.250000e-02 : f32
    %379 = vector.broadcast %cst_189 : f32 to vector<1x1x32xf32>
    %380 = arith.mulf %378, %379 : vector<1x1x32xf32>
    %381 = vector.broadcast %380 : vector<1x1x32xf32> to vector<1x16x32xf32>
    %382 = arith.subf %376, %381 : vector<1x16x32xf32>
    %383 = arith.mulf %382, %382 : vector<1x16x32xf32>
    %cst_190 = arith.constant dense<0.000000e+00> : vector<1x32xf32>
    %384 = vector.multi_reduction <add>, %383, %cst_190 [1] : vector<1x16x32xf32> to vector<1x32xf32>
    %385 = vector.shape_cast %384 : vector<1x32xf32> to vector<1x1x32xf32>
    %cst_191 = arith.constant 6.250000e-02 : f32
    %386 = vector.broadcast %cst_191 : f32 to vector<1x1x32xf32>
    %387 = arith.mulf %385, %386 : vector<1x1x32xf32>
    %cst_192 = arith.constant 9.99999974E-6 : f32
    %388 = vector.broadcast %cst_192 : f32 to vector<1x1x32xf32>
    %389 = arith.addf %387, %388 : vector<1x1x32xf32>
    %390 = math.rsqrt %389 : vector<1x1x32xf32>
    %391 = vector.broadcast %390 : vector<1x1x32xf32> to vector<1x16x32xf32>
    %392 = arith.mulf %382, %391 : vector<1x16x32xf32>
    %393 = vector.shape_cast %365 : vector<1x32xf32> to vector<1x1x32xf32>
    %394 = vector.broadcast %393 : vector<1x1x32xf32> to vector<1x16x32xf32>
    %395 = arith.mulf %392, %394 : vector<1x16x32xf32>
    %396 = vector.shape_cast %366 : vector<1x32xf32> to vector<1x1x32xf32>
    %397 = vector.broadcast %396 : vector<1x1x32xf32> to vector<1x16x32xf32>
    %398 = arith.addf %395, %397 : vector<1x16x32xf32>
    %399 = vector.shape_cast %398 : vector<1x16x32xf32> to vector<16x32xf32>
    %400 = arith.truncf %399 : vector<16x32xf32> to vector<16x32xbf16>
    %c0_193 = arith.constant 0 : index
    %c32_194 = arith.constant 32 : index
    %401 = vector.load %arg6[%c0_193, %c32_194] : memref<32x96xbf16, #tpu.memory_space<vmem>>, vector<32x64xbf16>
    %cst_195 = arith.constant dense<0.000000e+00> : vector<16x64xf32>
    %402 = tpu.matmul %400, %401, %cst_195 {dimension_numbers = #tpu.dot_dimension_numbers<[1], [0], [0], [1], [0, 0, 1, 1], [], []>} : vector<16x32xbf16>, vector<32x64xbf16>, vector<16x64xf32> -> vector<16x64xf32>
    %c0_196 = arith.constant 0 : index
    %c0_197 = arith.constant 0 : index
    %403 = vector.load %arg9[%c0_196, %c0_197] : memref<1x64xf32, #tpu.memory_space<vmem>>, vector<1x64xf32>
    %404 = vector.broadcast %403 : vector<1x64xf32> to vector<16x64xf32>
    %405 = arith.addf %402, %404 : vector<16x64xf32>
    %cst_198 = arith.constant 0.000000e+00 : f32
    %406 = vector.broadcast %cst_198 : f32 to vector<16x64xf32>
    %407 = arith.maximumf %405, %406 : vector<16x64xf32>
    %408 = arith.truncf %407 : vector<16x64xf32> to vector<16x64xbf16>
    %c0_199 = arith.constant 0 : index
    %c0_200 = arith.constant 0 : index
    %409 = vector.load %arg7[%c0_199, %c0_200] : memref<64x32xbf16, #tpu.memory_space<vmem>>, vector<64x32xbf16>
    %cst_201 = arith.constant dense<0.000000e+00> : vector<16x32xf32>
    %410 = tpu.matmul %408, %409, %cst_201 {dimension_numbers = #tpu.dot_dimension_numbers<[1], [0], [0], [1], [0, 0, 1, 1], [], []>} : vector<16x64xbf16>, vector<64x32xbf16>, vector<16x32xf32> -> vector<16x32xf32>
    %411 = vector.broadcast %364 : vector<1x32xf32> to vector<16x32xf32>
    %412 = arith.addf %410, %411 : vector<16x32xf32>
    %413 = arith.addf %399, %412 : vector<16x32xf32>
    %414 = vector.shape_cast %413 : vector<16x32xf32> to vector<1x16x32xf32>
    %cst_202 = arith.constant dense<0.000000e+00> : vector<1x32xf32>
    %415 = vector.multi_reduction <add>, %414, %cst_202 [1] : vector<1x16x32xf32> to vector<1x32xf32>
    %416 = vector.shape_cast %415 : vector<1x32xf32> to vector<1x1x32xf32>
    %cst_203 = arith.constant 6.250000e-02 : f32
    %417 = vector.broadcast %cst_203 : f32 to vector<1x1x32xf32>
    %418 = arith.mulf %416, %417 : vector<1x1x32xf32>
    %419 = vector.broadcast %418 : vector<1x1x32xf32> to vector<1x16x32xf32>
    %420 = arith.subf %414, %419 : vector<1x16x32xf32>
    %421 = arith.mulf %420, %420 : vector<1x16x32xf32>
    %cst_204 = arith.constant dense<0.000000e+00> : vector<1x32xf32>
    %422 = vector.multi_reduction <add>, %421, %cst_204 [1] : vector<1x16x32xf32> to vector<1x32xf32>
    %423 = vector.shape_cast %422 : vector<1x32xf32> to vector<1x1x32xf32>
    %cst_205 = arith.constant 6.250000e-02 : f32
    %424 = vector.broadcast %cst_205 : f32 to vector<1x1x32xf32>
    %425 = arith.mulf %423, %424 : vector<1x1x32xf32>
    %cst_206 = arith.constant 9.99999974E-6 : f32
    %426 = vector.broadcast %cst_206 : f32 to vector<1x1x32xf32>
    %427 = arith.addf %425, %426 : vector<1x1x32xf32>
    %428 = math.rsqrt %427 : vector<1x1x32xf32>
    %429 = vector.broadcast %428 : vector<1x1x32xf32> to vector<1x16x32xf32>
    %430 = arith.mulf %420, %429 : vector<1x16x32xf32>
    %431 = vector.shape_cast %367 : vector<1x32xf32> to vector<1x1x32xf32>
    %432 = vector.broadcast %431 : vector<1x1x32xf32> to vector<1x16x32xf32>
    %433 = arith.mulf %430, %432 : vector<1x16x32xf32>
    %434 = vector.shape_cast %368 : vector<1x32xf32> to vector<1x1x32xf32>
    %435 = vector.broadcast %434 : vector<1x1x32xf32> to vector<1x16x32xf32>
    %436 = arith.addf %433, %435 : vector<1x16x32xf32>
    %c0_207 = arith.constant 0 : index
    %c0_208 = arith.constant 0 : index
    %c0_209 = arith.constant 0 : index
    %437 = vector.load %arg10[%c0_207, %c0_208, %c0_209] : memref<1x16x32xf32, #tpu.memory_space<vmem>>, vector<1x16x32xf32>
    tpu.vector_store %arg10[%c0_207, %c0_208, %c0_209], %436 {strides = array<i32>} : memref<1x16x32xf32, #tpu.memory_space<vmem>>, vector<1x16x32xf32>,
    return
  }
  func.func @transform_0(%arg0: i32) -> (i32, i32, i32) {
    %c0_i32 = arith.constant 0 : i32
    %c0_i32_0 = arith.constant 0 : i32
    %c0_i32_1 = arith.constant 0 : i32
    return %arg0, %c0_i32, %c0_i32_0 : i32, i32, i32
  }
  func.func @transform_1(%arg0: i32) -> (i32, i32, i32) {
    %c0_i32 = arith.constant 0 : i32
    %c0_i32_0 = arith.constant 0 : i32
    %c0_i32_1 = arith.constant 0 : i32
    return %arg0, %c0_i32, %c0_i32_0 : i32, i32, i32
  }
  func.func @transform_2(%arg0: i32) -> (i32, i32, i32) {
    %c0_i32 = arith.constant 0 : i32
    %c0_i32_0 = arith.constant 0 : i32
    %c0_i32_1 = arith.constant 0 : i32
    return %arg0, %c0_i32, %c0_i32_0 : i32, i32, i32
  }
  func.func @transform_3(%arg0: i32) -> (i32, i32) {
    %c0_i32 = arith.constant 0 : i32
    %c0_i32_0 = arith.constant 0 : i32
    %c0_i32_1 = arith.constant 0 : i32
    return %c0_i32, %c0_i32_0 : i32, i32
  }
  func.func @transform_4(%arg0: i32) -> (i32, i32) {
    %c0_i32 = arith.constant 0 : i32
    %c0_i32_0 = arith.constant 0 : i32
    %c0_i32_1 = arith.constant 0 : i32
    return %c0_i32, %c0_i32_0 : i32, i32
  }
  func.func @transform_5(%arg0: i32) -> (i32, i32) {
    %c0_i32 = arith.constant 0 : i32
    %c0_i32_0 = arith.constant 0 : i32
    %c0_i32_1 = arith.constant 0 : i32
    return %c0_i32, %c0_i32_0 : i32, i32
  }
  func.func @transform_6(%arg0: i32) -> (i32, i32) {
    %c0_i32 = arith.constant 0 : i32
    %c0_i32_0 = arith.constant 0 : i32
    %c0_i32_1 = arith.constant 0 : i32
    return %c0_i32, %c0_i32_0 : i32, i32
  }
  func.func @transform_7(%arg0: i32) -> (i32, i32) {
    %c0_i32 = arith.constant 0 : i32
    %c0_i32_0 = arith.constant 0 : i32
    %c0_i32_1 = arith.constant 0 : i32
    return %c0_i32, %c0_i32_0 : i32, i32
  }
  func.func @transform_8(%arg0: i32) -> (i32, i32) {
    %c0_i32 = arith.constant 0 : i32
    %c0_i32_0 = arith.constant 0 : i32
    %c0_i32_1 = arith.constant 0 : i32
    return %c0_i32, %c0_i32_0 : i32, i32
  }
  func.func @transform_9(%arg0: i32) -> (i32, i32, i32) {
    %c0_i32 = arith.constant 0 : i32
    %c0_i32_0 = arith.constant 0 : i32
    %c0_i32_1 = arith.constant 0 : i32
    return %arg0, %c0_i32, %c0_i32_0 : i32, i32, i32
  }
}

</mosaic_0001>

<llo_original>
// kernel: matnet_layer_forward.2
$region0: #{matnet_layer_forward.2}
  #allocation0 [shape = 'u32[]', space=smem, size = 0x4, offset = 0x4, fixed_abs, tag = 'smem constant byte address 0x4 - core index']
  #allocation1 [shape = 'u32[144,128]{1,0:T(1,128)}', space=vmem, size = 0x12000, scoped, tag = 'internal scratch']
  #allocation2 [shape = 'f32[8,32]{1,0:T(8,128)}', space=vmem, size = 0x1000, scoped, tag = 'scratch operand']
  %s0 = inlined_call_operand.vmem [shape: f32[2,8,32], index: 0, kind: input, shape index: {}]
  %s1 = inlined_call_operand.vmem [shape: f32[2,16,32], index: 1, kind: input, shape index: {}]
  %s2 = inlined_call_operand.vmem [shape: f32[2,8,16], index: 2, kind: input, shape index: {}]
  %s3 = inlined_call_operand.vmem [shape: bf16[32,96], index: 3, kind: input, shape index: {}]
  %s4 = inlined_call_operand.vmem [shape: f32[4,16], index: 4, kind: input, shape index: {}]
  %s5 = inlined_call_operand.vmem [shape: bf16[32,96], index: 5, kind: input, shape index: {}]
  %s6 = inlined_call_operand.vmem [shape: bf16[64,32], index: 6, kind: input, shape index: {}]
  %s7 = inlined_call_operand.vmem [shape: f32[6,32], index: 7, kind: input, shape index: {}]
  %s8 = inlined_call_operand.vmem [shape: f32[1,64], index: 8, kind: input, shape index: {}]
  %s9 = inlined_call_operand.hbm [shape: f32[2,8,32], index: 9, kind: output, shape index: {}]
  %s10 = sld [smem:[#allocation0]]
  $region73: #{matnet_layer_forward.2} parent=0
    _
  %s12 = ssub.s32 1, %s10
  %s13 = scalar_select 0, %s12, %s10
  $region1: #{matnet_layer_forward.2} parent=0
    #allocation3 [shape = 'u8[2048]{0}', space=smem, size = 0x800, scoped, tag = 'input window, operand 4, single buffered']
    #allocation4 [shape = 's32[2]{0}', space=sflag, size = 0x8, scoped, tag = 'scoped memory for matnet_layer_forward.2']
    #allocation5 [shape = 's32[2]{0}', space=sflag, size = 0x8, scoped, tag = 'scoped memory for matnet_layer_forward.2']
    #allocation6 [shape = 'u8[8192]{0}', space=vmem, size = 0x2000, scoped, tag = 'output window, operand 0']
    %14 = vsyncpa [#allocation5], 0
    %15 = vsyncpa [#allocation4], 0
    %s16 = scalar_lea.sflag [#allocation4], 1
    %17 = vsyncpa %s16, 0
    loop: start=0, step=1, limit=4
    $region2: #{matnet_layer_forward.2} parent=1 // loop_pre_header
      _
    $region3: #{matnet_layer_forward.2} parent=1 // loop_header
      %s19 = sphi 0, %s23
      %p20 = scmp.ge.s32.totalorder %s19, 4
      %s29 = sphi 0, %s31
      %s32 = sphi 0, %s29
      %s33 = sphi 0, %s32
      %s49 = sphi 0, %s33
      %s55 = sphi 0, %s57
      %s58 = sphi 0, %s55
      %s59 = sphi 0, %s58
      %s75 = sphi 0, %s59
      %s81 = sphi 0, %s83
      %s84 = sphi 0, %s81
      %s85 = sphi 0, %s84
      %s101 = sphi 0, %s85
      %s105 = sphi 0, %s105
      %s107 = sphi 0, %s105
      %s108 = sphi 0, %s107
      %s122 = sphi 0, %s108
      %s126 = sphi 0, %s126
      %s128 = sphi 0, %s126
      %s129 = sphi 0, %s128
      %s143 = sphi 0, %s129
      %s147 = sphi 0, %s147
      %s149 = sphi 0, %s147
      %s150 = sphi 0, %s149
      %s164 = sphi 0, %s150
      %s168 = sphi 0, %s168
      %s170 = sphi 0, %s168
      %s171 = sphi 0, %s170
      %s185 = sphi 0, %s171
      %s189 = sphi 0, %s189
      %s191 = sphi 0, %s189
      %s192 = sphi 0, %s191
      %s206 = sphi 0, %s192
      %s210 = sphi 0, %s210
      %s212 = sphi 0, %s210
      %s213 = sphi 0, %s212
      %s227 = sphi 0, %s213
      %s233 = sphi 0, %s235
      %s236 = sphi 0, %s233
      %s237 = sphi 0, %s236
      %s253 = sphi 0, %s237
    $region4: #{matnet_layer_forward.2} parent=1 // loop_header_branch
      %22 = sbr.rel (%p20) target = $region8
    $region5: #{matnet_layer_forward.2} parent=1 // loop_body
      %s24 = ssub.s32 %s19, 1
      %s25 = ssub.s32 %s19, 2
      %s26 = sadd.s32 %s19, 1
      %s27 = ssub.s32 %s19, %s26
      %p28 = scmp.eq.s32.totalorder %s27, 0
      %s30 = sadd.s32 %s29, 1
      %s31 = scalar_select %p28, %s29, %s30
      %p34 = pneg %p28
      %p35 = scmp.eq.s32.totalorder %s19, 1
      %p36 = por %p34, %p35
      %p37 = scmp.ne.s32.totalorder %s29, %s32
      %p38 = scmp.eq.s32.totalorder %s19, 0
      %p39 = por %p37, %p38
      %p40 = scmp.ne.s32.totalorder %s29, %s32
      %p41 = scmp.eq.s32.totalorder %s24, 1
      %p42 = por %p40, %p41
      %p43 = scmp.ne.s32.totalorder %s32, %s33
      %p44 = scmp.eq.s32.totalorder %s24, 0
      %p45 = por %p43, %p44
      %p46 = scmp.ne.s32.totalorder %s32, %s33
      %p47 = scmp.eq.s32.totalorder %s25, 1
      %p48 = por %p46, %p47
      %p50 = scmp.ne.s32.totalorder %s33, %s49
      %p51 = scmp.eq.s32.totalorder %s25, 0
      %p52 = por %p50, %p51
      %s53 = ssub.s32 %s19, %s26
      %p54 = scmp.eq.s32.totalorder %s53, 0
      %s56 = sadd.s32 %s55, 1
      %s57 = scalar_select %p54, %s55, %s56
      %p60 = pneg %p54
      %p61 = scmp.eq.s32.totalorder %s19, 1
      %p62 = por %p60, %p61
      %p63 = scmp.ne.s32.totalorder %s55, %s58
      %p64 = scmp.eq.s32.totalorder %s19, 0
      %p65 = por %p63, %p64
      %p66 = scmp.ne.s32.totalorder %s55, %s58
      %p67 = scmp.eq.s32.totalorder %s24, 1
      %p68 = por %p66, %p67
      %p69 = scmp.ne.s32.totalorder %s58, %s59
      %p70 = scmp.eq.s32.totalorder %s24, 0
      %p71 = por %p69, %p70
      %p72 = scmp.ne.s32.totalorder %s58, %s59
      %p73 = scmp.eq.s32.totalorder %s25, 1
      %p74 = por %p72, %p73
      %p76 = scmp.ne.s32.totalorder %s59, %s75
      %p77 = scmp.eq.s32.totalorder %s25, 0
      %p78 = por %p76, %p77
      %s79 = ssub.s32 %s19, %s26
      %p80 = scmp.eq.s32.totalorder %s79, 0
      %s82 = sadd.s32 %s81, 1
      %s83 = scalar_select %p80, %s81, %s82
      %p86 = pneg %p80
      %p87 = scmp.eq.s32.totalorder %s19, 1
      %p88 = por %p86, %p87
      %p89 = scmp.ne.s32.totalorder %s81, %s84
      %p90 = scmp.eq.s32.totalorder %s19, 0
      %p91 = por %p89, %p90
      %p92 = scmp.ne.s32.totalorder %s81, %s84
      %p93 = scmp.eq.s32.totalorder %s24, 1
      %p94 = por %p92, %p93
      %p95 = scmp.ne.s32.totalorder %s84, %s85
      %p96 = scmp.eq.s32.totalorder %s24, 0
      %p97 = por %p95, %p96
      %p98 = scmp.ne.s32.totalorder %s84, %s85
      %p99 = scmp.eq.s32.totalorder %s25, 1
      %p100 = por %p98, %p99
      %p102 = scmp.ne.s32.totalorder %s85, %s101
      %p103 = scmp.eq.s32.totalorder %s25, 0
      %p104 = por %p102, %p103
      %s106 = sadd.s32 %s105, 1
      %p109 = scmp.eq.s32.totalorder %s19, 1
      %p110 = scmp.ne.s32.totalorder %s105, %s107
      %p111 = scmp.eq.s32.totalorder %s19, 0
      %p112 = por %p110, %p111
      %p113 = scmp.ne.s32.totalorder %s105, %s107
      %p114 = scmp.eq.s32.totalorder %s24, 1
      %p115 = por %p113, %p114
      %p116 = scmp.ne.s32.totalorder %s107, %s108
      %p117 = scmp.eq.s32.totalorder %s24, 0
      %p118 = por %p116, %p117
      %p119 = scmp.ne.s32.totalorder %s107, %s108
      %p120 = scmp.eq.s32.totalorder %s25, 1
      %p121 = por %p119, %p120
      %p123 = scmp.ne.s32.totalorder %s108, %s122
      %p124 = scmp.eq.s32.totalorder %s25, 0
      %p125 = por %p123, %p124
      %s127 = sadd.s32 %s126, 1
      %p130 = scmp.eq.s32.totalorder %s19, 1
      %p131 = scmp.ne.s32.totalorder %s126, %s128
      %p132 = scmp.eq.s32.totalorder %s19, 0
      %p133 = por %p131, %p132
      %p134 = scmp.ne.s32.totalorder %s126, %s128
      %p135 = scmp.eq.s32.totalorder %s24, 1
      %p136 = por %p134, %p135
      %p137 = scmp.ne.s32.totalorder %s128, %s129
      %p138 = scmp.eq.s32.totalorder %s24, 0
      %p139 = por %p137, %p138
      %p140 = scmp.ne.s32.totalorder %s128, %s129
      %p141 = scmp.eq.s32.totalorder %s25, 1
      %p142 = por %p140, %p141
      %p144 = scmp.ne.s32.totalorder %s129, %s143
      %p145 = scmp.eq.s32.totalorder %s25, 0
      %p146 = por %p144, %p145
      %s148 = sadd.s32 %s147, 1
      %p151 = scmp.eq.s32.totalorder %s19, 1
      %p152 = scmp.ne.s32.totalorder %s147, %s149
      %p153 = scmp.eq.s32.totalorder %s19, 0
      %p154 = por %p152, %p153
      %p155 = scmp.ne.s32.totalorder %s147, %s149
      %p156 = scmp.eq.s32.totalorder %s24, 1
      %p157 = por %p155, %p156
      %p158 = scmp.ne.s32.totalorder %s149, %s150
      %p159 = scmp.eq.s32.totalorder %s24, 0
      %p160 = por %p158, %p159
      %p161 = scmp.ne.s32.totalorder %s149, %s150
      %p162 = scmp.eq.s32.totalorder %s25, 1
      %p163 = por %p161, %p162
      %p165 = scmp.ne.s32.totalorder %s150, %s164
      %p166 = scmp.eq.s32.totalorder %s25, 0
      %p167 = por %p165, %p166
      %s169 = sadd.s32 %s168, 1
      %p172 = scmp.eq.s32.totalorder %s19, 1
      %p173 = scmp.ne.s32.totalorder %s168, %s170
      %p174 = scmp.eq.s32.totalorder %s19, 0
      %p175 = por %p173, %p174
      %p176 = scmp.ne.s32.totalorder %s168, %s170
      %p177 = scmp.eq.s32.totalorder %s24, 1
      %p178 = por %p176, %p177
      %p179 = scmp.ne.s32.totalorder %s170, %s171
      %p180 = scmp.eq.s32.totalorder %s24, 0
      %p181 = por %p179, %p180
      %p182 = scmp.ne.s32.totalorder %s170, %s171
      %p183 = scmp.eq.s32.totalorder %s25, 1
      %p184 = por %p182, %p183
      %p186 = scmp.ne.s32.totalorder %s171, %s185
      %p187 = scmp.eq.s32.totalorder %s25, 0
      %p188 = por %p186, %p187
      %s190 = sadd.s32 %s189, 1
      %p193 = scmp.eq.s32.totalorder %s19, 1
      %p194 = scmp.ne.s32.totalorder %s189, %s191
      %p195 = scmp.eq.s32.totalorder %s19, 0
      %p196 = por %p194, %p195
      %p197 = scmp.ne.s32.totalorder %s189, %s191
      %p198 = scmp.eq.s32.totalorder %s24, 1
      %p199 = por %p197, %p198
      %p200 = scmp.ne.s32.totalorder %s191, %s192
      %p201 = scmp.eq.s32.totalorder %s24, 0
      %p202 = por %p200, %p201
      %p203 = scmp.ne.s32.totalorder %s191, %s192
      %p204 = scmp.eq.s32.totalorder %s25, 1
      %p205 = por %p203, %p204
      %p207 = scmp.ne.s32.totalorder %s192, %s206
      %p208 = scmp.eq.s32.totalorder %s25, 0
      %p209 = por %p207, %p208
      %s211 = sadd.s32 %s210, 1
      %p214 = scmp.eq.s32.totalorder %s19, 1
      %p215 = scmp.ne.s32.totalorder %s210, %s212
      %p216 = scmp.eq.s32.totalorder %s19, 0
      %p217 = por %p215, %p216
      %p218 = scmp.ne.s32.totalorder %s210, %s212
      %p219 = scmp.eq.s32.totalorder %s24, 1
      %p220 = por %p218, %p219
      %p221 = scmp.ne.s32.totalorder %s212, %s213
      %p222 = scmp.eq.s32.totalorder %s24, 0
      %p223 = por %p221, %p222
      %p224 = scmp.ne.s32.totalorder %s212, %s213
      %p225 = scmp.eq.s32.totalorder %s25, 1
      %p226 = por %p224, %p225
      %p228 = scmp.ne.s32.totalorder %s213, %s227
      %p229 = scmp.eq.s32.totalorder %s25, 0
      %p230 = por %p228, %p229
      %s231 = ssub.s32 %s19, %s26
      %p232 = scmp.eq.s32.totalorder %s231, 0
      %s234 = sadd.s32 %s233, 1
      %s235 = scalar_select %p232, %s233, %s234
      %p238 = pneg %p232
      %p239 = scmp.eq.s32.totalorder %s19, 1
      %p240 = por %p238, %p239
      %p241 = scmp.ne.s32.totalorder %s233, %s236
      %p242 = scmp.eq.s32.totalorder %s19, 0
      %p243 = por %p241, %p242
      %p244 = scmp.ne.s32.totalorder %s233, %s236
      %p245 = scmp.eq.s32.totalorder %s24, 1
      %p246 = por %p244, %p245
      %p247 = scmp.ne.s32.totalorder %s236, %s237
      %p248 = scmp.eq.s32.totalorder %s24, 0
      %p249 = por %p247, %p248
      %p250 = scmp.ne.s32.totalorder %s236, %s237
      %p251 = scmp.eq.s32.totalorder %s25, 1
      %p252 = por %p250, %p251
      %p254 = scmp.ne.s32.totalorder %s237, %s253
      %p255 = scmp.eq.s32.totalorder %s25, 0
      %p256 = por %p254, %p255
      %p257 = scmp.le.s32.totalorder 1, %s19
      %p258 = scmp.lt.s32.totalorder %s19, 3
      %p259 = pnand %p257, %p258
      %p260 = pneg %p259
      // Predicated region
      $region9: #{matnet_layer_forward.2} parent=5 // pred_check
        _
      $region10: #{matnet_layer_forward.2} parent=5 // pred_check_branch
        %262 = sbr.rel (%p259) target = $region12
      $region11: #{matnet_layer_forward.2} parent=5 // pred_region
        %s263 = ssub.s32 %s19, 1
        // Predicated region
        $region13: #{matnet_layer_forward.2} parent=11 // pred_check
          %p264 = pneg %p118
        $region14: #{matnet_layer_forward.2} parent=11 // pred_check_branch
          %266 = sbr.rel (%p264) target = $region16
        $region15: #{matnet_layer_forward.2} parent=11 // pred_region
          _
        $region16: #{matnet_layer_forward.2} parent=11 // pred_fallthru
          _
        // Predicated region
        $region17: #{matnet_layer_forward.2} parent=11 // pred_check
          %p267 = pneg %p139
        $region18: #{matnet_layer_forward.2} parent=11 // pred_check_branch
          %269 = sbr.rel (%p267) target = $region20
        $region19: #{matnet_layer_forward.2} parent=11 // pred_region
          %s271 = ssub.s32 64, 64
          %272 = vsyncadd [#allocation5], %s271
          %s274 = sshll.u32 %s4, 4
          %s275 = int_to_ptr.vmem [resolvable:$true] %s274
          %277 = dma.vmem_to_smem %s275, 64, [#allocation3], [#allocation5]
        $region20: #{matnet_layer_forward.2} parent=11 // pred_fallthru
          _
        // Predicated region
        $region21: #{matnet_layer_forward.2} parent=11 // pred_check
          %p278 = pneg %p160
        $region22: #{matnet_layer_forward.2} parent=11 // pred_check_branch
          %280 = sbr.rel (%p278) target = $region24
        $region23: #{matnet_layer_forward.2} parent=11 // pred_region
          _
        $region24: #{matnet_layer_forward.2} parent=11 // pred_fallthru
          _
        // Predicated region
        $region25: #{matnet_layer_forward.2} parent=11 // pred_check
          %p281 = pneg %p181
        $region26: #{matnet_layer_forward.2} parent=11 // pred_check_branch
          %283 = sbr.rel (%p281) target = $region28
        $region27: #{matnet_layer_forward.2} parent=11 // pred_region
          _
        $region28: #{matnet_layer_forward.2} parent=11 // pred_fallthru
          _
        // Predicated region
        $region29: #{matnet_layer_forward.2} parent=11 // pred_check
          %p284 = pneg %p202
        $region30: #{matnet_layer_forward.2} parent=11 // pred_check_branch
          %286 = sbr.rel (%p284) target = $region32
        $region31: #{matnet_layer_forward.2} parent=11 // pred_region
          _
        $region32: #{matnet_layer_forward.2} parent=11 // pred_fallthru
          _
        // Predicated region
        $region33: #{matnet_layer_forward.2} parent=11 // pred_check
          %p287 = pneg %p223
        $region34: #{matnet_layer_forward.2} parent=11 // pred_check_branch
          %289 = sbr.rel (%p287) target = $region36
        $region35: #{matnet_layer_forward.2} parent=11 // pred_region
          _
        $region36: #{matnet_layer_forward.2} parent=11 // pred_fallthru
          _
      $region12: #{matnet_layer_forward.2} parent=5 // pred_fallthru
        _
      %p290 = scmp.lt.s32.totalorder %s19, 2
      // Predicated region
      $region37: #{matnet_layer_forward.2} parent=5 // pred_check
        %p291 = pneg %p290
      $region38: #{matnet_layer_forward.2} parent=5 // pred_check_branch
        %293 = sbr.rel (%p291) target = $region40
      $region39: #{matnet_layer_forward.2} parent=5 // pred_region
        // Predicated region
        $region41: #{matnet_layer_forward.2} parent=39 // pred_check
          %p294 = pneg %p39
        $region42: #{matnet_layer_forward.2} parent=39 // pred_check_branch
          %296 = sbr.rel (%p294) target = $region44
        $region43: #{matnet_layer_forward.2} parent=39 // pred_region
          %p297 = scmp.lt.s32.totalorder %s19, 1
          %s298 = scalar_select %p297, %s19, 1
          %s299 = smul.addr %s298, 8
          %s300 = scalar_lea.vmem %s0, %s299
        $region44: #{matnet_layer_forward.2} parent=39 // pred_fallthru
          _
        // Predicated region
        $region45: #{matnet_layer_forward.2} parent=39 // pred_check
          %p301 = pneg %p65
        $region46: #{matnet_layer_forward.2} parent=39 // pred_check_branch
          %303 = sbr.rel (%p301) target = $region48
        $region47: #{matnet_layer_forward.2} parent=39 // pred_region
          %p304 = scmp.lt.s32.totalorder %s19, 1
          %s305 = scalar_select %p304, %s19, 1
          %s306 = smul.addr %s305, 2
          %s307 = smul.addr %s306, 8
          %s308 = scalar_lea.vmem %s1, %s307
        $region48: #{matnet_layer_forward.2} parent=39 // pred_fallthru
          _
        // Predicated region
        $region49: #{matnet_layer_forward.2} parent=39 // pred_check
          %p309 = pneg %p91
        $region50: #{matnet_layer_forward.2} parent=39 // pred_check_branch
          %311 = sbr.rel (%p309) target = $region52
        $region51: #{matnet_layer_forward.2} parent=39 // pred_region
          %p312 = scmp.lt.s32.totalorder %s19, 1
          %s313 = scalar_select %p312, %s19, 1
          %s314 = smul.addr %s313, 8
          %s315 = scalar_lea.vmem %s2, %s314
        $region52: #{matnet_layer_forward.2} parent=39 // pred_fallthru
          _
      $region40: #{matnet_layer_forward.2} parent=5 // pred_fallthru
        _
      %p316 = scmp.le.s32.totalorder 1, %s19
      %p317 = scmp.lt.s32.totalorder %s19, 3
      %p318 = pnand %p316, %p317
      %p319 = pneg %p318
      // Predicated region
      $region53: #{matnet_layer_forward.2} parent=5 // pred_check
        _
      $region54: #{matnet_layer_forward.2} parent=5 // pred_check_branch
        %321 = sbr.rel (%p318) target = $region56
      $region55: #{matnet_layer_forward.2} parent=5 // pred_region
        %s322 = ssub.s32 %s19, 1
        // Predicated region
        $region57: #{matnet_layer_forward.2} parent=55 // pred_check
          %p323 = pneg %p139
        $region58: #{matnet_layer_forward.2} parent=55 // pred_check_branch
          %325 = sbr.rel (%p323) target = $region60
        $region59: #{matnet_layer_forward.2} parent=55 // pred_region
          %326 = dma.done [#allocation5], 64
        $region60: #{matnet_layer_forward.2} parent=55 // pred_fallthru
          _
        %327 = sfence
        %p328 = scmp.lt.s32.totalorder %s24, 1
        %s329 = scalar_select %p328, %s24, 1
        %s330 = smul.addr %s329, 8
        %s331 = scalar_lea.vmem %s0, %s330
        %p332 = pneg %p45
        %p333 = pneg %p42
        %p334 = scmp.lt.s32.totalorder %s24, 1
        %s335 = scalar_select %p334, %s24, 1
        %s336 = smul.addr %s335, 2
        %s337 = smul.addr %s336, 8
        %s338 = scalar_lea.vmem %s1, %s337
        %p339 = pneg %p71
        %p340 = pneg %p68
        %p341 = scmp.lt.s32.totalorder %s24, 1
        %s342 = scalar_select %p341, %s24, 1
        %s343 = smul.addr %s342, 8
        %s344 = scalar_lea.vmem %s2, %s343
        %p345 = pneg %p97
        %p346 = pneg %p94
        %p347 = pneg %p118
        %p348 = pneg %p115
        %p349 = pneg %p139
        %p350 = pneg %p136
        %p351 = pneg %p160
        %p352 = pneg %p157
        %p353 = pneg %p181
        %p354 = pneg %p178
        %p355 = pneg %p202
        %p356 = pneg %p199
        %p357 = pneg %p223
        %p358 = pneg %p220
        %p359 = pneg %p249
        %p360 = pneg %p246
        %s361 = sand.u32 %s236, 1
        %s362 = scalar_lea.sflag [#allocation4], %s361
        %s363 = sand.u32 %s236, 1
        %s364 = smul.addr %s363, 8
        %s365 = scalar_lea.vmem [#allocation6], %s364
        %p366 = scmp.lt.s32.totalorder %s24, 1
        %s367 = scalar_select %p366, %s24, 1
        %s368 = smul.addr %s367, 8
        %s369 = scalar_lea.vmem %s0, %s368
        %p370 = scmp.lt.s32.totalorder %s24, 1
        %s371 = scalar_select %p370, %s24, 1
        %s372 = smul.addr %s371, 2
        %s373 = smul.addr %s372, 8
        %s374 = scalar_lea.vmem %s1, %s373
        %p375 = scmp.lt.s32.totalorder %s24, 1
        %s376 = scalar_select %p375, %s24, 1
        %s377 = smul.addr %s376, 8
        %s378 = scalar_lea.vmem %s2, %s377
        %v380 = vld [vmem:[%s369] sm:$0xff]
        %v381 = vld [vmem:[%s374] sm:$0xff]
        %v382 = vld [vmem:[%s374 + $0x8] sm:$0xff]
        %v383 = vpack.c.bf16 %v380, %v380
        %v384 = vld [vmem:[%s3] sm:$0xf]
        %v385 = vld [vmem:[%s3 + $0x4] sm:$0xf]
        %v386 = vld [vmem:[%s3 + $0x8] sm:$0xf]
        %v387 = vld [vmem:[%s3 + $0xc] sm:$0xf]
        %v392 = vunpack.c.l.b16 %v384
        %v393 = vunpack.c.l.b16 %v385
        %v394 = vunpack.c.l.b16 %v386
        %v395 = vunpack.c.l.b16 %v387
        %v396 = vpack.c.b16 %v393, %v392
        %v397 = vpack.c.b16 %v395, %v394
        %vm400 = vcmask 261120
        %v402 = vsel %vm400, %v383, 0
        %404 = vmatprep.subr.bf16.mxu0 0
        %405 = vmatpush1.bf16.msra.mxu0 %v396
        %406 = vmatprep.subr.bf16.mxu0 0
        %407 = vmatpush1.bf16.msra.mxu0 %v397
        %408 = vmatprep.subr.bf16.mxu0 0
        %409 = vmatpush1.bf16.msra.mxu0 0
        %410 = vmatprep.subr.bf16.mxu0 0
        %411 = vmatpush1.bf16.msra.mxu0 0
        %412 = vmatprep.subr.bf16.mxu0 0
        %413 = vmatpush1.bf16.msra.mxu0 0
        %414 = vmatprep.subr.bf16.mxu0 0
        %415 = vmatpush1.bf16.msra.mxu0 0
        %416 = vmatprep.subr.bf16.mxu0 0
        %417 = vmatpush1.bf16.msra.mxu0 0
        %418 = vmatprep.subr.bf16.mxu0 0
        %419 = vmatpush1.bf16.msra.mxu0 0
        %420 = vmatprep.subr.bf16.mxu0 0
        %421 = vmatpush1.bf16.msra.mxu0 0
        %422 = vmatprep.subr.bf16.mxu0 0
        %423 = vmatpush1.bf16.msra.mxu0 0
        %424 = vmatprep.subr.bf16.mxu0 0
        %425 = vmatpush1.bf16.msra.mxu0 0
        %426 = vmatprep.subr.bf16.mxu0 0
        %427 = vmatpush1.bf16.msra.mxu0 0
        %428 = vmatprep.subr.bf16.mxu0 0
        %429 = vmatpush1.bf16.msra.mxu0 0
        %430 = vmatprep.subr.bf16.mxu0 0
        %431 = vmatpush1.bf16.msra.mxu0 0
        %432 = vmatprep.subr.bf16.mxu0 0
        %433 = vmatpush1.bf16.msra.mxu0 0
        %434 = vmatprep.subr.bf16.mxu0 0
        %435 = vmatpush1.bf16.msra.mxu0 0
        %436 = vmatprep.mubr.bf16.mxu0 0
        %437 = vmatmul.mubr.bf16.gmra.mrb[0].mxu0 %v402
        %v438 = vpop.f32.mrb[0].mxu0
        %v439 = vadd.f32 0.0, %v438
        %v440 = vpop.f32.mrb[0].mxu0
        %v441 = vpop.f32.mrb[0].mxu0
        %v442 = vpop.f32.mrb[0].mxu0
        %443 = vdwg.mxu0
        %v444 = vpack.c.bf16 %v382, %v381
        %445 = vrot.lane.b32.xlu0 %v396, 96
        %v446 = vpop.permute.xlu0 %445
        %447 = vrot.lane.b32.xlu0 %v397, 96
        %v448 = vpop.permute.xlu0 %447
        %v452 = vsel %vm400, %v444, 0
        %454 = vmatprep.subr.bf16.mxu0 0
        %455 = vmatpush1.bf16.msra.mxu0 %v446
        %456 = vmatprep.subr.bf16.mxu0 0
        %457 = vmatpush1.bf16.msra.mxu0 %v448
        %458 = vmatprep.subr.bf16.mxu0 0
        %459 = vmatpush1.bf16.msra.mxu0 0
        %460 = vmatprep.subr.bf16.mxu0 0
        %461 = vmatpush1.bf16.msra.mxu0 0
        %462 = vmatprep.subr.bf16.mxu0 0
        %463 = vmatpush1.bf16.msra.mxu0 0
        %464 = vmatprep.subr.bf16.mxu0 0
        %465 = vmatpush1.bf16.msra.mxu0 0
        %466 = vmatprep.subr.bf16.mxu0 0
        %467 = vmatpush1.bf16.msra.mxu0 0
        %468 = vmatprep.subr.bf16.mxu0 0
        %469 = vmatpush1.bf16.msra.mxu0 0
        %470 = vmatprep.subr.bf16.mxu0 0
        %471 = vmatpush1.bf16.msra.mxu0 0
        %472 = vmatprep.subr.bf16.mxu0 0
        %473 = vmatpush1.bf16.msra.mxu0 0
        %474 = vmatprep.subr.bf16.mxu0 0
        %475 = vmatpush1.bf16.msra.mxu0 0
        %476 = vmatprep.subr.bf16.mxu0 0
        %477 = vmatpush1.bf16.msra.mxu0 0
        %478 = vmatprep.subr.bf16.mxu0 0
        %479 = vmatpush1.bf16.msra.mxu0 0
        %480 = vmatprep.subr.bf16.mxu0 0
        %481 = vmatpush1.bf16.msra.mxu0 0
        %482 = vmatprep.subr.bf16.mxu0 0
        %483 = vmatpush1.bf16.msra.mxu0 0
        %484 = vmatprep.subr.bf16.mxu0 0
        %485 = vmatpush1.bf16.msra.mxu0 0
        %486 = vmatprep.mubr.bf16.mxu0 0
        %487 = vmatmul.mubr.bf16.gmra.mrb[0].mxu0 %v452
        %v488 = vpop.f32.mrb[0].mxu0
        %v489 = vadd.f32 0.0, %v488
        %v490 = vpop.f32.mrb[0].mxu0
        %v491 = vpop.f32.mrb[0].mxu0
        %v492 = vadd.f32 0.0, %v491
        %v493 = vpop.f32.mrb[0].mxu0
        %494 = vdwg.mxu0
        %v495 = vld [vmem:[%s378] sm:$0xff]
        %v496 = vpack.c.bf16 %v439, %v439
        %497 = vxpose.xlu0.b32.start [1/16] %v489, 128
        %498 = vxpose.xlu0.b32.cont [2/16] %v492, 128
        %499 = vxpose.xlu0.b32.cont [3/16] 0.0, 128
        %500 = vxpose.xlu0.b32.cont [4/16] 0.0, 128
        %501 = vxpose.xlu0.b32.cont [5/16] 0.0, 128
        %502 = vxpose.xlu0.b32.cont [6/16] 0.0, 128
        %503 = vxpose.xlu0.b32.cont [7/16] 0.0, 128
        %504 = vxpose.xlu0.b32.cont [8/16] 0.0, 128
        %505 = vxpose.xlu0.b32.cont [9/16] 0.0, 128
        %506 = vxpose.xlu0.b32.cont [10/16] 0.0, 128
        %507 = vxpose.xlu0.b32.cont [11/16] 0.0, 128
        %508 = vxpose.xlu0.b32.cont [12/16] 0.0, 128
        %509 = vxpose.xlu0.b32.cont [13/16] 0.0, 128
        %510 = vxpose.xlu0.b32.cont [14/16] 0.0, 128
        %511 = vxpose.xlu0.b32.cont [15/16] 0.0, 128
        %512 = vxpose.xlu0.b32.end [16/16] 0.0, 128
        %v513 = vpop.trf.xlu0
        %v514 = vpop.trf.xlu0
        %v515 = vpop.trf.xlu0
        %v516 = vpop.trf.xlu0
        %v517 = vpop.trf.xlu0
        %v518 = vpop.trf.xlu0
        %v519 = vpop.trf.xlu0
        %v520 = vpop.trf.xlu0
        %v521 = vpop.trf.xlu0
        %v522 = vpop.trf.xlu0
        %v523 = vpop.trf.xlu0
        %v524 = vpop.trf.xlu0
        %v525 = vpop.trf.xlu0
        %v526 = vpop.trf.xlu0
        %v527 = vpop.trf.xlu0
        %v528 = vpop.trf.xlu0
        %v529 = vpack.c.bf16 %v514, %v513
        %v530 = vpack.c.bf16 %v516, %v515
        %v531 = vpack.c.bf16 %v492, %v489
        %vm532 = vcmask 64512
        %v534 = vsel %vm532, %v496, 0
        %vm536 = vcmask 1043456
        %v538 = vsel %vm536, %v529, 0
        %540 = vmatprep.subr.bf16.mxu0 0
        %541 = vmatpush1.bf16.msra.mxu0 %v538
        %542 = vmatprep.subr.bf16.mxu0 0
        %543 = vmatpush1.bf16.msra.mxu0 0
        %544 = vmatprep.subr.bf16.mxu0 0
        %545 = vmatpush1.bf16.msra.mxu0 0
        %546 = vmatprep.subr.bf16.mxu0 0
        %547 = vmatpush1.bf16.msra.mxu0 0
        %548 = vmatprep.subr.bf16.mxu0 0
        %549 = vmatpush1.bf16.msra.mxu0 0
        %550 = vmatprep.subr.bf16.mxu0 0
        %551 = vmatpush1.bf16.msra.mxu0 0
        %552 = vmatprep.subr.bf16.mxu0 0
        %553 = vmatpush1.bf16.msra.mxu0 0
        %554 = vmatprep.subr.bf16.mxu0 0
        %555 = vmatpush1.bf16.msra.mxu0 0
        %556 = vmatprep.subr.bf16.mxu0 0
        %557 = vmatpush1.bf16.msra.mxu0 0
        %558 = vmatprep.subr.bf16.mxu0 0
        %559 = vmatpush1.bf16.msra.mxu0 0
        %560 = vmatprep.subr.bf16.mxu0 0
        %561 = vmatpush1.bf16.msra.mxu0 0
        %562 = vmatprep.subr.bf16.mxu0 0
        %563 = vmatpush1.bf16.msra.mxu0 0
        %564 = vmatprep.subr.bf16.mxu0 0
        %565 = vmatpush1.bf16.msra.mxu0 0
        %566 = vmatprep.subr.bf16.mxu0 0
        %567 = vmatpush1.bf16.msra.mxu0 0
        %568 = vmatprep.subr.bf16.mxu0 0
        %569 = vmatpush1.bf16.msra.mxu0 0
        %570 = vmatprep.subr.bf16.mxu0 0
        %571 = vmatpush1.bf16.msra.mxu0 0
        %572 = vmatprep.mubr.bf16.mxu0 0
        %573 = vmatmul.mubr.bf16.gmra.mrb[0].mxu0 %v534
        %v574 = vpop.f32.mrb[0].mxu0
        %v575 = vadd.f32 0.0, %v574
        %v576 = vpop.f32.mrb[0].mxu0
        %v577 = vpop.f32.mrb[0].mxu0
        %v578 = vpop.f32.mrb[0].mxu0
        %579 = vdwg.mxu0
        %s580 = sld [smem:[#allocation3]]
        %v581 = vstv %s580
        %v582 = vmul.f32 %v575, %v581
        %s583 = sld [smem:[#allocation3 + $0x4]]
        %v584 = vstv %s583
        %v585 = vmul.f32 %v495, %v584
        %v586 = vadd.f32 %v582, %v585
        %s587 = sld [smem:[#allocation3 + $0x8]]
        %v588 = vstv %s587
        %v589 = vadd.f32 %v586, %v588
        %v590 = vmax.f32 %v589, 0.0
        %s591 = sld [smem:[#allocation3 + $0xc]]
        %v592 = vstv %s591
        %v593 = vmul.f32 %v590, %v592
        %v594 = vadd.f32 %v593, 0.0
        %s595 = sld [smem:[#allocation3 + $0x1]]
        %v596 = vstv %s595
        %v597 = vmul.f32 %v575, %v596
        %s598 = sld [smem:[#allocation3 + $0x5]]
        %v599 = vstv %s598
        %v600 = vmul.f32 %v495, %v599
        %v601 = vadd.f32 %v597, %v600
        %s602 = sld [smem:[#allocation3 + $0x9]]
        %v603 = vstv %s602
        %v604 = vadd.f32 %v601, %v603
        %v605 = vmax.f32 %v604, 0.0
        %s606 = sld [smem:[#allocation3 + $0xd]]
        %v607 = vstv %s606
        %v608 = vmul.f32 %v605, %v607
        %v609 = vadd.f32 %v594, %v608
        %s610 = sld [smem:[#allocation3 + $0x2]]
        %v611 = vstv %s610
        %v612 = vmul.f32 %v575, %v611
        %s613 = sld [smem:[#allocation3 + $0x6]]
        %v614 = vstv %s613
        %v615 = vmul.f32 %v495, %v614
        %v616 = vadd.f32 %v612, %v615
        %s617 = sld [smem:[#allocation3 + $0xa]]
        %v618 = vstv %s617
        %v619 = vadd.f32 %v616, %v618
        %v620 = vmax.f32 %v619, 0.0
        %s621 = sld [smem:[#allocation3 + $0xe]]
        %v622 = vstv %s621
        %v623 = vmul.f32 %v620, %v622
        %v624 = vadd.f32 %v609, %v623
        %s625 = sld [smem:[#allocation3 + $0x3]]
        %v626 = vstv %s625
        %v627 = vmul.f32 %v575, %v626
        %s628 = sld [smem:[#allocation3 + $0x7]]
        %v629 = vstv %s628
        %v630 = vmul.f32 %v495, %v629
        %v631 = vadd.f32 %v627, %v630
        %s632 = sld [smem:[#allocation3 + $0xb]]
        %v633 = vstv %s632
        %v634 = vadd.f32 %v631, %v633
        %v635 = vmax.f32 %v634, 0.0
        %s636 = sld [smem:[#allocation3 + $0xf]]
        %v637 = vstv %s636
        %v638 = vmul.f32 %v635, %v637
        %v639 = vadd.f32 %v624, %v638
        %vm640 = vcmask 130048
        %v641 = vsel %vm640, %v639, -inf
        %642 = vmax.xlane.f32.xlu0 %v641
        %v643 = vpop.xlane.xlu0 %642
        %v644 = vsub.f32 %v639, %v643
        %v645 = vmul.f32 %v644, 1.442695
        %v646 = vpow.pop %v645
        %v647 = vsel %vm640, %v646, 0.0
        %648 = vadd.xlane.f32.xlu0 %v647
        %v649 = vpop.xlane.xlu0 %648
        %v650 = vrcp.pop %v649
        %v651 = vmul.f32 %v649, %v650
        %v652 = vsub.f32 2.0, %v651
        %v653 = vmul.f32 %v650, %v652
        %v654 = vmul.f32 %v646, %v653
        %v655 = vpack.c.bf16 %v654, %v654
        %657 = vrot.lane.b32.xlu0 %v531, 96
        %v658 = vpop.permute.xlu0 %657
        %v661 = vsel %vm640, %v655, 0
        %663 = vmatprep.subr.bf16.mxu0 0
        %664 = vmatpush1.bf16.msra.mxu0 %v658
        %665 = vmatprep.subr.bf16.mxu0 0
        %666 = vmatpush1.bf16.msra.mxu0 0
        %667 = vmatprep.subr.bf16.mxu0 0
        %668 = vmatpush1.bf16.msra.mxu0 0
        %669 = vmatprep.subr.bf16.mxu0 0
        %670 = vmatpush1.bf16.msra.mxu0 0
        %671 = vmatprep.subr.bf16.mxu0 0
        %672 = vmatpush1.bf16.msra.mxu0 0
        %673 = vmatprep.subr.bf16.mxu0 0
        %674 = vmatpush1.bf16.msra.mxu0 0
        %675 = vmatprep.subr.bf16.mxu0 0
        %676 = vmatpush1.bf16.msra.mxu0 0
        %677 = vmatprep.subr.bf16.mxu0 0
        %678 = vmatpush1.bf16.msra.mxu0 0
        %679 = vmatprep.subr.bf16.mxu0 0
        %680 = vmatpush1.bf16.msra.mxu0 0
        %681 = vmatprep.subr.bf16.mxu0 0
        %682 = vmatpush1.bf16.msra.mxu0 0
        %683 = vmatprep.subr.bf16.mxu0 0
        %684 = vmatpush1.bf16.msra.mxu0 0
        %685 = vmatprep.subr.bf16.mxu0 0
        %686 = vmatpush1.bf16.msra.mxu0 0
        %687 = vmatprep.subr.bf16.mxu0 0
        %688 = vmatpush1.bf16.msra.mxu0 0
        %689 = vmatprep.subr.bf16.mxu0 0
        %690 = vmatpush1.bf16.msra.mxu0 0
        %691 = vmatprep.subr.bf16.mxu0 0
        %692 = vmatpush1.bf16.msra.mxu0 0
        %693 = vmatprep.subr.bf16.mxu0 0
        %694 = vmatpush1.bf16.msra.mxu0 0
        %695 = vmatprep.mubr.bf16.mxu0 0
        %696 = vmatmul.mubr.bf16.gmra.mrb[0].mxu0 %v661
        %v697 = vpop.f32.mrb[0].mxu0
        %v698 = vadd.f32 0.0, %v697
        %v699 = vpop.f32.mrb[0].mxu0
        %v700 = vpop.f32.mrb[0].mxu0
        %v701 = vpop.f32.mrb[0].mxu0
        %702 = vdwg.mxu0
        %703 = vst.msk [vmem:[#allocation2] sm:$0xff] %vm532, %v698
        %705 = vrot.lane.b32.xlu0 %v496, 120
        %v706 = vpop.permute.xlu0 %705
        %v708 = vrot.slane %v529, 4
        %v710 = vsel %vm532, %v706, 0
        %v713 = vsel %vm536, %v708, 0
        %715 = vmatprep.subr.bf16.mxu0 0
        %716 = vmatpush1.bf16.msra.mxu0 %v713
        %717 = vmatprep.subr.bf16.mxu0 0
        %718 = vmatpush1.bf16.msra.mxu0 0
        %719 = vmatprep.subr.bf16.mxu0 0
        %720 = vmatpush1.bf16.msra.mxu0 0
        %721 = vmatprep.subr.bf16.mxu0 0
        %722 = vmatpush1.bf16.msra.mxu0 0
        %723 = vmatprep.subr.bf16.mxu0 0
        %724 = vmatpush1.bf16.msra.mxu0 0
        %725 = vmatprep.subr.bf16.mxu0 0
        %726 = vmatpush1.bf16.msra.mxu0 0
        %727 = vmatprep.subr.bf16.mxu0 0
        %728 = vmatpush1.bf16.msra.mxu0 0
        %729 = vmatprep.subr.bf16.mxu0 0
        %730 = vmatpush1.bf16.msra.mxu0 0
        %731 = vmatprep.subr.bf16.mxu0 0
        %732 = vmatpush1.bf16.msra.mxu0 0
        %733 = vmatprep.subr.bf16.mxu0 0
        %734 = vmatpush1.bf16.msra.mxu0 0
        %735 = vmatprep.subr.bf16.mxu0 0
        %736 = vmatpush1.bf16.msra.mxu0 0
        %737 = vmatprep.subr.bf16.mxu0 0
        %738 = vmatpush1.bf16.msra.mxu0 0
        %739 = vmatprep.subr.bf16.mxu0 0
        %740 = vmatpush1.bf16.msra.mxu0 0
        %741 = vmatprep.subr.bf16.mxu0 0
        %742 = vmatpush1.bf16.msra.mxu0 0
        %743 = vmatprep.subr.bf16.mxu0 0
        %744 = vmatpush1.bf16.msra.mxu0 0
        %745 = vmatprep.subr.bf16.mxu0 0
        %746 = vmatpush1.bf16.msra.mxu0 0
        %747 = vmatprep.mubr.bf16.mxu0 0
        %748 = vmatmul.mubr.bf16.gmra.mrb[0].mxu0 %v710
        %v749 = vpop.f32.mrb[0].mxu0
        %v750 = vadd.f32 0.0, %v749
        %v751 = vpop.f32.mrb[0].mxu0
        %v752 = vpop.f32.mrb[0].mxu0
        %v753 = vpop.f32.mrb[0].mxu0
        %754 = vdwg.mxu0
        %s755 = sld [smem:[#allocation3 + $0x80]]
        %v756 = vstv %s755
        %v757 = vmul.f32 %v750, %v756
        %s758 = sld [smem:[#allocation3 + $0x84]]
        %v759 = vstv %s758
        %v760 = vmul.f32 %v495, %v759
        %v761 = vadd.f32 %v757, %v760
        %s762 = sld [smem:[#allocation3 + $0x88]]
        %v763 = vstv %s762
        %v764 = vadd.f32 %v761, %v763
        %v765 = vmax.f32 %v764, 0.0
        %s766 = sld [smem:[#allocation3 + $0x8c]]
        %v767 = vstv %s766
        %v768 = vmul.f32 %v765, %v767
        %v769 = vadd.f32 %v768, 0.0
        %s770 = sld [smem:[#allocation3 + $0x81]]
        %v771 = vstv %s770
        %v772 = vmul.f32 %v750, %v771
        %s773 = sld [smem:[#allocation3 + $0x85]]
        %v774 = vstv %s773
        %v775 = vmul.f32 %v495, %v774
        %v776 = vadd.f32 %v772, %v775
        %s777 = sld [smem:[#allocation3 + $0x89]]
        %v778 = vstv %s777
        %v779 = vadd.f32 %v776, %v778
        %v780 = vmax.f32 %v779, 0.0
        %s781 = sld [smem:[#allocation3 + $0x8d]]
        %v782 = vstv %s781
        %v783 = vmul.f32 %v780, %v782
        %v784 = vadd.f32 %v769, %v783
        %s785 = sld [smem:[#allocation3 + $0x82]]
        %v786 = vstv %s785
        %v787 = vmul.f32 %v750, %v786
        %s788 = sld [smem:[#allocation3 + $0x86]]
        %v789 = vstv %s788
        %v790 = vmul.f32 %v495, %v789
        %v791 = vadd.f32 %v787, %v790
        %s792 = sld [smem:[#allocation3 + $0x8a]]
        %v793 = vstv %s792
        %v794 = vadd.f32 %v791, %v793
        %v795 = vmax.f32 %v794, 0.0
        %s796 = sld [smem:[#allocation3 + $0x8e]]
        %v797 = vstv %s796
        %v798 = vmul.f32 %v795, %v797
        %v799 = vadd.f32 %v784, %v798
        %s800 = sld [smem:[#allocation3 + $0x83]]
        %v801 = vstv %s800
        %v802 = vmul.f32 %v750, %v801
        %s803 = sld [smem:[#allocation3 + $0x87]]
        %v804 = vstv %s803
        %v805 = vmul.f32 %v495, %v804
        %v806 = vadd.f32 %v802, %v805
        %s807 = sld [smem:[#allocation3 + $0x8b]]
        %v808 = vstv %s807
        %v809 = vadd.f32 %v806, %v808
        %v810 = vmax.f32 %v809, 0.0
        %s811 = sld [smem:[#allocation3 + $0x8f]]
        %v812 = vstv %s811
        %v813 = vmul.f32 %v810, %v812
        %v814 = vadd.f32 %v799, %v813
        %v815 = vsel %vm640, %v814, -inf
        %816 = vmax.xlane.f32.xlu0 %v815
        %v817 = vpop.xlane.xlu0 %816
        %v818 = vsub.f32 %v814, %v817
        %v819 = vmul.f32 %v818, 1.442695
        %v820 = vpow.pop %v819
        %v821 = vsel %vm640, %v820, 0.0
        %822 = vadd.xlane.f32.xlu0 %v821
        %v823 = vpop.xlane.xlu0 %822
        %v824 = vrcp.pop %v823
        %v825 = vmul.f32 %v823, %v824
        %v826 = vsub.f32 2.0, %v825
        %v827 = vmul.f32 %v824, %v826
        %v828 = vmul.f32 %v820, %v827
        %v829 = vpack.c.bf16 %v828, %v828
        %830 = vrot.lane.b32.xlu0 %v531, 88
        %v831 = vpop.permute.xlu0 %830
        %v834 = vsel %vm640, %v829, 0
        %836 = vmatprep.subr.bf16.mxu0 0
        %837 = vmatpush1.bf16.msra.mxu0 %v831
        %838 = vmatprep.subr.bf16.mxu0 0
        %839 = vmatpush1.bf16.msra.mxu0 0
        %840 = vmatprep.subr.bf16.mxu0 0
        %841 = vmatpush1.bf16.msra.mxu0 0
        %842 = vmatprep.subr.bf16.mxu0 0
        %843 = vmatpush1.bf16.msra.mxu0 0
        %844 = vmatprep.subr.bf16.mxu0 0
        %845 = vmatpush1.bf16.msra.mxu0 0
        %846 = vmatprep.subr.bf16.mxu0 0
        %847 = vmatpush1.bf16.msra.mxu0 0
        %848 = vmatprep.subr.bf16.mxu0 0
        %849 = vmatpush1.bf16.msra.mxu0 0
        %850 = vmatprep.subr.bf16.mxu0 0
        %851 = vmatpush1.bf16.msra.mxu0 0
        %852 = vmatprep.subr.bf16.mxu0 0
        %853 = vmatpush1.bf16.msra.mxu0 0
        %854 = vmatprep.subr.bf16.mxu0 0
        %855 = vmatpush1.bf16.msra.mxu0 0
        %856 = vmatprep.subr.bf16.mxu0 0
        %857 = vmatpush1.bf16.msra.mxu0 0
        %858 = vmatprep.subr.bf16.mxu0 0
        %859 = vmatpush1.bf16.msra.mxu0 0
        %860 = vmatprep.subr.bf16.mxu0 0
        %861 = vmatpush1.bf16.msra.mxu0 0
        %862 = vmatprep.subr.bf16.mxu0 0
        %863 = vmatpush1.bf16.msra.mxu0 0
        %864 = vmatprep.subr.bf16.mxu0 0
        %865 = vmatpush1.bf16.msra.mxu0 0
        %866 = vmatprep.subr.bf16.mxu0 0
        %867 = vmatpush1.bf16.msra.mxu0 0
        %868 = vmatprep.mubr.bf16.mxu0 0
        %869 = vmatmul.mubr.bf16.gmra.mrb[0].mxu0 %v834
        %v870 = vpop.f32.mrb[0].mxu0
        %v871 = vadd.f32 0.0, %v870
        %v872 = vpop.f32.mrb[0].mxu0
        %v873 = vpop.f32.mrb[0].mxu0
        %v874 = vpop.f32.mrb[0].mxu0
        %875 = vdwg.mxu0
        %877 = vrot.lane.b32.xlu0 %v871, 8
        %v878 = vpop.permute.xlu0 %877
        %vm880 = vcmask 130112
        %881 = vst.msk [vmem:[#allocation2] sm:$0xff] %vm880, %v878
        %882 = vrot.lane.b32.xlu0 %v496, 112
        %v883 = vpop.permute.xlu0 %882
        %v885 = vsel %vm532, %v883, 0
        %v888 = vsel %vm536, %v530, 0
        %890 = vmatprep.subr.bf16.mxu0 0
        %891 = vmatpush1.bf16.msra.mxu0 %v888
        %892 = vmatprep.subr.bf16.mxu0 0
        %893 = vmatpush1.bf16.msra.mxu0 0
        %894 = vmatprep.subr.bf16.mxu0 0
        %895 = vmatpush1.bf16.msra.mxu0 0
        %896 = vmatprep.subr.bf16.mxu0 0
        %897 = vmatpush1.bf16.msra.mxu0 0
        %898 = vmatprep.subr.bf16.mxu0 0
        %899 = vmatpush1.bf16.msra.mxu0 0
        %900 = vmatprep.subr.bf16.mxu0 0
        %901 = vmatpush1.bf16.msra.mxu0 0
        %902 = vmatprep.subr.bf16.mxu0 0
        %903 = vmatpush1.bf16.msra.mxu0 0
        %904 = vmatprep.subr.bf16.mxu0 0
        %905 = vmatpush1.bf16.msra.mxu0 0
        %906 = vmatprep.subr.bf16.mxu0 0
        %907 = vmatpush1.bf16.msra.mxu0 0
        %908 = vmatprep.subr.bf16.mxu0 0
        %909 = vmatpush1.bf16.msra.mxu0 0
        %910 = vmatprep.subr.bf16.mxu0 0
        %911 = vmatpush1.bf16.msra.mxu0 0
        %912 = vmatprep.subr.bf16.mxu0 0
        %913 = vmatpush1.bf16.msra.mxu0 0
        %914 = vmatprep.subr.bf16.mxu0 0
        %915 = vmatpush1.bf16.msra.mxu0 0
        %916 = vmatprep.subr.bf16.mxu0 0
        %917 = vmatpush1.bf16.msra.mxu0 0
        %918 = vmatprep.subr.bf16.mxu0 0
        %919 = vmatpush1.bf16.msra.mxu0 0
        %920 = vmatprep.subr.bf16.mxu0 0
        %921 = vmatpush1.bf16.msra.mxu0 0
        %922 = vmatprep.mubr.bf16.mxu0 0
        %923 = vmatmul.mubr.bf16.gmra.mrb[0].mxu0 %v885
        %v924 = vpop.f32.mrb[0].mxu0
        %v925 = vadd.f32 0.0, %v924
        %v926 = vpop.f32.mrb[0].mxu0
        %v927 = vpop.f32.mrb[0].mxu0
        %v928 = vpop.f32.mrb[0].mxu0
        %929 = vdwg.mxu0
        %s930 = sld [smem:[#allocation3 + $0x100]]
        %v931 = vstv %s930
        %v932 = vmul.f32 %v925, %v931
        %s933 = sld [smem:[#allocation3 + $0x104]]
        %v934 = vstv %s933
        %v935 = vmul.f32 %v495, %v934
        %v936 = vadd.f32 %v932, %v935
        %s937 = sld [smem:[#allocation3 + $0x108]]
        %v938 = vstv %s937
        %v939 = vadd.f32 %v936, %v938
        %v940 = vmax.f32 %v939, 0.0
        %s941 = sld [smem:[#allocation3 + $0x10c]]
        %v942 = vstv %s941
        %v943 = vmul.f32 %v940, %v942
        %v944 = vadd.f32 %v943, 0.0
        %s945 = sld [smem:[#allocation3 + $0x101]]
        %v946 = vstv %s945
        %v947 = vmul.f32 %v925, %v946
        %s948 = sld [smem:[#allocation3 + $0x105]]
        %v949 = vstv %s948
        %v950 = vmul.f32 %v495, %v949
        %v951 = vadd.f32 %v947, %v950
        %s952 = sld [smem:[#allocation3 + $0x109]]
        %v953 = vstv %s952
        %v954 = vadd.f32 %v951, %v953
        %v955 = vmax.f32 %v954, 0.0
        %s956 = sld [smem:[#allocation3 + $0x10d]]
        %v957 = vstv %s956
        %v958 = vmul.f32 %v955, %v957
        %v959 = vadd.f32 %v944, %v958
        %s960 = sld [smem:[#allocation3 + $0x102]]
        %v961 = vstv %s960
        %v962 = vmul.f32 %v925, %v961
        %s963 = sld [smem:[#allocation3 + $0x106]]
        %v964 = vstv %s963
        %v965 = vmul.f32 %v495, %v964
        %v966 = vadd.f32 %v962, %v965
        %s967 = sld [smem:[#allocation3 + $0x10a]]
        %v968 = vstv %s967
        %v969 = vadd.f32 %v966, %v968
        %v970 = vmax.f32 %v969, 0.0
        %s971 = sld [smem:[#allocation3 + $0x10e]]
        %v972 = vstv %s971
        %v973 = vmul.f32 %v970, %v972
        %v974 = vadd.f32 %v959, %v973
        %s975 = sld [smem:[#allocation3 + $0x103]]
        %v976 = vstv %s975
        %v977 = vmul.f32 %v925, %v976
        %s978 = sld [smem:[#allocation3 + $0x107]]
        %v979 = vstv %s978
        %v980 = vmul.f32 %v495, %v979
        %v981 = vadd.f32 %v977, %v980
        %s982 = sld [smem:[#allocation3 + $0x10b]]
        %v983 = vstv %s982
        %v984 = vadd.f32 %v981, %v983
        %v985 = vmax.f32 %v984, 0.0
        %s986 = sld [smem:[#allocation3 + $0x10f]]
        %v987 = vstv %s986
        %v988 = vmul.f32 %v985, %v987
        %v989 = vadd.f32 %v974, %v988
        %v990 = vsel %vm640, %v989, -inf
        %991 = vmax.xlane.f32.xlu0 %v990
        %v992 = vpop.xlane.xlu0 %991
        %v993 = vsub.f32 %v989, %v992
        %v994 = vmul.f32 %v993, 1.442695
        %v995 = vpow.pop %v994
        %v996 = vsel %vm640, %v995, 0.0
        %997 = vadd.xlane.f32.xlu0 %v996
        %v998 = vpop.xlane.xlu0 %997
        %v999 = vrcp.pop %v998
        %v1000 = vmul.f32 %v998, %v999
        %v1001 = vsub.f32 2.0, %v1000
        %v1002 = vmul.f32 %v999, %v1001
        %v1003 = vmul.f32 %v995, %v1002
        %v1004 = vpack.c.bf16 %v1003, %v1003
        %1005 = vrot.lane.b32.xlu0 %v531, 80
        %v1006 = vpop.permute.xlu0 %1005
        %v1009 = vsel %vm640, %v1004, 0
        %1011 = vmatprep.subr.bf16.mxu0 0
        %1012 = vmatpush1.bf16.msra.mxu0 %v1006
        %1013 = vmatprep.subr.bf16.mxu0 0
        %1014 = vmatpush1.bf16.msra.mxu0 0
        %1015 = vmatprep.subr.bf16.mxu0 0
        %1016 = vmatpush1.bf16.msra.mxu0 0
        %1017 = vmatprep.subr.bf16.mxu0 0
        %1018 = vmatpush1.bf16.msra.mxu0 0
        %1019 = vmatprep.subr.bf16.mxu0 0
        %1020 = vmatpush1.bf16.msra.mxu0 0
        %1021 = vmatprep.subr.bf16.mxu0 0
        %1022 = vmatpush1.bf16.msra.mxu0 0
        %1023 = vmatprep.subr.bf16.mxu0 0
        %1024 = vmatpush1.bf16.msra.mxu0 0
        %1025 = vmatprep.subr.bf16.mxu0 0
        %1026 = vmatpush1.bf16.msra.mxu0 0
        %1027 = vmatprep.subr.bf16.mxu0 0
        %1028 = vmatpush1.bf16.msra.mxu0 0
        %1029 = vmatprep.subr.bf16.mxu0 0
        %1030 = vmatpush1.bf16.msra.mxu0 0
        %1031 = vmatprep.subr.bf16.mxu0 0
        %1032 = vmatpush1.bf16.msra.mxu0 0
        %1033 = vmatprep.subr.bf16.mxu0 0
        %1034 = vmatpush1.bf16.msra.mxu0 0
        %1035 = vmatprep.subr.bf16.mxu0 0
        %1036 = vmatpush1.bf16.msra.mxu0 0
        %1037 = vmatprep.subr.bf16.mxu0 0
        %1038 = vmatpush1.bf16.msra.mxu0 0
        %1039 = vmatprep.subr.bf16.mxu0 0
        %1040 = vmatpush1.bf16.msra.mxu0 0
        %1041 = vmatprep.subr.bf16.mxu0 0
        %1042 = vmatpush1.bf16.msra.mxu0 0
        %1043 = vmatprep.mubr.bf16.mxu0 0
        %1044 = vmatmul.mubr.bf16.gmra.mrb[0].mxu0 %v1009
        %v1045 = vpop.f32.mrb[0].mxu0
        %v1046 = vadd.f32 0.0, %v1045
        %v1047 = vpop.f32.mrb[0].mxu0
        %v1048 = vpop.f32.mrb[0].mxu0
        %v1049 = vpop.f32.mrb[0].mxu0
        %1050 = vdwg.mxu0
        %1052 = vrot.lane.b32.xlu0 %v1046, 16
        %v1053 = vpop.permute.xlu0 %1052
        %vm1055 = vcmask 195712
        %1056 = vst.msk [vmem:[#allocation2] sm:$0xff] %vm1055, %v1053
        %1057 = vrot.lane.b32.xlu0 %v496, 104
        %v1058 = vpop.permute.xlu0 %1057
        %v1060 = vrot.slane %v530, 4
        %v1062 = vsel %vm532, %v1058, 0
        %v1065 = vsel %vm536, %v1060, 0
        %1067 = vmatprep.subr.bf16.mxu0 0
        %1068 = vmatpush1.bf16.msra.mxu0 %v1065
        %1069 = vmatprep.subr.bf16.mxu0 0
        %1070 = vmatpush1.bf16.msra.mxu0 0
        %1071 = vmatprep.subr.bf16.mxu0 0
        %1072 = vmatpush1.bf16.msra.mxu0 0
        %1073 = vmatprep.subr.bf16.mxu0 0
        %1074 = vmatpush1.bf16.msra.mxu0 0
        %1075 = vmatprep.subr.bf16.mxu0 0
        %1076 = vmatpush1.bf16.msra.mxu0 0
        %1077 = vmatprep.subr.bf16.mxu0 0
        %1078 = vmatpush1.bf16.msra.mxu0 0
        %1079 = vmatprep.subr.bf16.mxu0 0
        %1080 = vmatpush1.bf16.msra.mxu0 0
        %1081 = vmatprep.subr.bf16.mxu0 0
        %1082 = vmatpush1.bf16.msra.mxu0 0
        %1083 = vmatprep.subr.bf16.mxu0 0
        %1084 = vmatpush1.bf16.msra.mxu0 0
        %1085 = vmatprep.subr.bf16.mxu0 0
        %1086 = vmatpush1.bf16.msra.mxu0 0
        %1087 = vmatprep.subr.bf16.mxu0 0
        %1088 = vmatpush1.bf16.msra.mxu0 0
        %1089 = vmatprep.subr.bf16.mxu0 0
        %1090 = vmatpush1.bf16.msra.mxu0 0
        %1091 = vmatprep.subr.bf16.mxu0 0
        %1092 = vmatpush1.bf16.msra.mxu0 0
        %1093 = vmatprep.subr.bf16.mxu0 0
        %1094 = vmatpush1.bf16.msra.mxu0 0
        %1095 = vmatprep.subr.bf16.mxu0 0
        %1096 = vmatpush1.bf16.msra.mxu0 0
        %1097 = vmatprep.subr.bf16.mxu0 0
        %1098 = vmatpush1.bf16.msra.mxu0 0
        %1099 = vmatprep.mubr.bf16.mxu0 0
        %1100 = vmatmul.mubr.bf16.gmra.mrb[0].mxu0 %v1062
        %v1101 = vpop.f32.mrb[0].mxu0
        %v1102 = vadd.f32 0.0, %v1101
        %v1103 = vpop.f32.mrb[0].mxu0
        %v1104 = vpop.f32.mrb[0].mxu0
        %v1105 = vpop.f32.mrb[0].mxu0
        %1106 = vdwg.mxu0
        %s1107 = sld [smem:[#allocation3 + $0x180]]
        %v1108 = vstv %s1107
        %v1109 = vmul.f32 %v1102, %v1108
        %s1110 = sld [smem:[#allocation3 + $0x184]]
        %v1111 = vstv %s1110
        %v1112 = vmul.f32 %v495, %v1111
        %v1113 = vadd.f32 %v1109, %v1112
        %s1114 = sld [smem:[#allocation3 + $0x188]]
        %v1115 = vstv %s1114
        %v1116 = vadd.f32 %v1113, %v1115
        %v1117 = vmax.f32 %v1116, 0.0
        %s1118 = sld [smem:[#allocation3 + $0x18c]]
        %v1119 = vstv %s1118
        %v1120 = vmul.f32 %v1117, %v1119
        %v1121 = vadd.f32 %v1120, 0.0
        %s1122 = sld [smem:[#allocation3 + $0x181]]
        %v1123 = vstv %s1122
        %v1124 = vmul.f32 %v1102, %v1123
        %s1125 = sld [smem:[#allocation3 + $0x185]]
        %v1126 = vstv %s1125
        %v1127 = vmul.f32 %v495, %v1126
        %v1128 = vadd.f32 %v1124, %v1127
        %s1129 = sld [smem:[#allocation3 + $0x189]]
        %v1130 = vstv %s1129
        %v1131 = vadd.f32 %v1128, %v1130
        %v1132 = vmax.f32 %v1131, 0.0
        %s1133 = sld [smem:[#allocation3 + $0x18d]]
        %v1134 = vstv %s1133
        %v1135 = vmul.f32 %v1132, %v1134
        %v1136 = vadd.f32 %v1121, %v1135
        %s1137 = sld [smem:[#allocation3 + $0x182]]
        %v1138 = vstv %s1137
        %v1139 = vmul.f32 %v1102, %v1138
        %s1140 = sld [smem:[#allocation3 + $0x186]]
        %v1141 = vstv %s1140
        %v1142 = vmul.f32 %v495, %v1141
        %v1143 = vadd.f32 %v1139, %v1142
        %s1144 = sld [smem:[#allocation3 + $0x18a]]
        %v1145 = vstv %s1144
        %v1146 = vadd.f32 %v1143, %v1145
        %v1147 = vmax.f32 %v1146, 0.0
        %s1148 = sld [smem:[#allocation3 + $0x18e]]
        %v1149 = vstv %s1148
        %v1150 = vmul.f32 %v1147, %v1149
        %v1151 = vadd.f32 %v1136, %v1150
        %s1152 = sld [smem:[#allocation3 + $0x183]]
        %v1153 = vstv %s1152
        %v1154 = vmul.f32 %v1102, %v1153
        %s1155 = sld [smem:[#allocation3 + $0x187]]
        %v1156 = vstv %s1155
        %v1157 = vmul.f32 %v495, %v1156
        %v1158 = vadd.f32 %v1154, %v1157
        %s1159 = sld [smem:[#allocation3 + $0x18b]]
        %v1160 = vstv %s1159
        %v1161 = vadd.f32 %v1158, %v1160
        %v1162 = vmax.f32 %v1161, 0.0
        %s1163 = sld [smem:[#allocation3 + $0x18f]]
        %v1164 = vstv %s1163
        %v1165 = vmul.f32 %v1162, %v1164
        %v1166 = vadd.f32 %v1151, %v1165
        %v1167 = vsel %vm640, %v1166, -inf
        %1168 = vmax.xlane.f32.xlu0 %v1167
        %v1169 = vpop.xlane.xlu0 %1168
        %v1170 = vsub.f32 %v1166, %v1169
        %v1171 = vmul.f32 %v1170, 1.442695
        %v1172 = vpow.pop %v1171
        %v1173 = vsel %vm640, %v1172, 0.0
        %1174 = vadd.xlane.f32.xlu0 %v1173
        %v1175 = vpop.xlane.xlu0 %1174
        %v1176 = vrcp.pop %v1175
        %v1177 = vmul.f32 %v1175, %v1176
        %v1178 = vsub.f32 2.0, %v1177
        %v1179 = vmul.f32 %v1176, %v1178
        %v1180 = vmul.f32 %v1172, %v1179
        %v1181 = vpack.c.bf16 %v1180, %v1180
        %1182 = vrot.lane.b32.xlu0 %v531, 72
        %v1183 = vpop.permute.xlu0 %1182
        %v1186 = vsel %vm640, %v1181, 0
        %1188 = vmatprep.subr.bf16.mxu0 0
        %1189 = vmatpush1.bf16.msra.mxu0 %v1183
        %1190 = vmatprep.subr.bf16.mxu0 0
        %1191 = vmatpush1.bf16.msra.mxu0 0
        %1192 = vmatprep.subr.bf16.mxu0 0
        %1193 = vmatpush1.bf16.msra.mxu0 0
        %1194 = vmatprep.subr.bf16.mxu0 0
        %1195 = vmatpush1.bf16.msra.mxu0 0
        %1196 = vmatprep.subr.bf16.mxu0 0
        %1197 = vmatpush1.bf16.msra.mxu0 0
        %1198 = vmatprep.subr.bf16.mxu0 0
        %1199 = vmatpush1.bf16.msra.mxu0 0
        %1200 = vmatprep.subr.bf16.mxu0 0
        %1201 = vmatpush1.bf16.msra.mxu0 0
        %1202 = vmatprep.subr.bf16.mxu0 0
        %1203 = vmatpush1.bf16.msra.mxu0 0
        %1204 = vmatprep.subr.bf16.mxu0 0
        %1205 = vmatpush1.bf16.msra.mxu0 0
        %1206 = vmatprep.subr.bf16.mxu0 0
        %1207 = vmatpush1.bf16.msra.mxu0 0
        %1208 = vmatprep.subr.bf16.mxu0 0
        %1209 = vmatpush1.bf16.msra.mxu0 0
        %1210 = vmatprep.subr.bf16.mxu0 0
        %1211 = vmatpush1.bf16.msra.mxu0 0
        %1212 = vmatprep.subr.bf16.mxu0 0
        %1213 = vmatpush1.bf16.msra.mxu0 0
        %1214 = vmatprep.subr.bf16.mxu0 0
        %1215 = vmatpush1.bf16.msra.mxu0 0
        %1216 = vmatprep.subr.bf16.mxu0 0
        %1217 = vmatpush1.bf16.msra.mxu0 0
        %1218 = vmatprep.subr.bf16.mxu0 0
        %1219 = vmatpush1.bf16.msra.mxu0 0
        %1220 = vmatprep.mubr.bf16.mxu0 0
        %1221 = vmatmul.mubr.bf16.gmra.mrb[0].mxu0 %v1186
        %v1222 = vpop.f32.mrb[0].mxu0
        %v1223 = vadd.f32 0.0, %v1222
        %v1224 = vpop.f32.mrb[0].mxu0
        %v1225 = vpop.f32.mrb[0].mxu0
        %v1226 = vpop.f32.mrb[0].mxu0
        %1227 = vdwg.mxu0
        %1229 = vrot.lane.b32.xlu0 %v1223, 24
        %v1230 = vpop.permute.xlu0 %1229
        %vm1232 = vcmask 261312
        %1233 = vst.msk [vmem:[#allocation2] sm:$0xff] %vm1232, %v1230
        %v1234 = vld [vmem:[%s7] sm:$0x1]
        %v1235 = vld [vmem:[%s7 + $0x1] sm:$0x1]
        %v1236 = vld [vmem:[%s7 + $0x2] sm:$0x1]
        %v1237 = vld [vmem:[%s7 + $0x3] sm:$0x1]
        %v1238 = vld [vmem:[%s7 + $0x4] sm:$0x1]
        %v1239 = vld [vmem:[%s7 + $0x5] sm:$0x1]
        %v1240 = vld [vmem:[#allocation2] sm:$0xff]
        %v1241 = vpack.c.bf16 %v1240, %v1240
        %v1242 = vld [vmem:[%s5] sm:$0xf]
        %v1243 = vld [vmem:[%s5 + $0x4] sm:$0xf]
        %v1244 = vld [vmem:[%s5 + $0x8] sm:$0xf]
        %v1245 = vld [vmem:[%s5 + $0xc] sm:$0xf]
        %v1246 = vlaneseq
        %v1247 = vshrl.u32 %v1246, 7
        %v1248 = vsub.s32 0, %v1247
        %v1249 = vrot.slane %v1234, %v1248
        %v1254 = vunpack.c.l.b16 %v1242
        %v1255 = vunpack.c.l.b16 %v1243
        %v1256 = vunpack.c.l.b16 %v1244
        %v1257 = vunpack.c.l.b16 %v1245
        %v1258 = vpack.c.b16 %v1255, %v1254
        %v1259 = vpack.c.b16 %v1257, %v1256
        %v1263 = vsel %vm400, %v1241, 0
        %1265 = vmatprep.subr.bf16.mxu0 0
        %1266 = vmatpush1.bf16.msra.mxu0 %v1258
        %1267 = vmatprep.subr.bf16.mxu0 0
        %1268 = vmatpush1.bf16.msra.mxu0 %v1259
        %1269 = vmatprep.subr.bf16.mxu0 0
        %1270 = vmatpush1.bf16.msra.mxu0 0
        %1271 = vmatprep.subr.bf16.mxu0 0
        %1272 = vmatpush1.bf16.msra.mxu0 0
        %1273 = vmatprep.subr.bf16.mxu0 0
        %1274 = vmatpush1.bf16.msra.mxu0 0
        %1275 = vmatprep.subr.bf16.mxu0 0
        %1276 = vmatpush1.bf16.msra.mxu0 0
        %1277 = vmatprep.subr.bf16.mxu0 0
        %1278 = vmatpush1.bf16.msra.mxu0 0
        %1279 = vmatprep.subr.bf16.mxu0 0
        %1280 = vmatpush1.bf16.msra.mxu0 0
        %1281 = vmatprep.subr.bf16.mxu0 0
        %1282 = vmatpush1.bf16.msra.mxu0 0
        %1283 = vmatprep.subr.bf16.mxu0 0
        %1284 = vmatpush1.bf16.msra.mxu0 0
        %1285 = vmatprep.subr.bf16.mxu0 0
        %1286 = vmatpush1.bf16.msra.mxu0 0
        %1287 = vmatprep.subr.bf16.mxu0 0
        %1288 = vmatpush1.bf16.msra.mxu0 0
        %1289 = vmatprep.subr.bf16.mxu0 0
        %1290 = vmatpush1.bf16.msra.mxu0 0
        %1291 = vmatprep.subr.bf16.mxu0 0
        %1292 = vmatpush1.bf16.msra.mxu0 0
        %1293 = vmatprep.subr.bf16.mxu0 0
        %1294 = vmatpush1.bf16.msra.mxu0 0
        %1295 = vmatprep.subr.bf16.mxu0 0
        %1296 = vmatpush1.bf16.msra.mxu0 0
        %1297 = vmatprep.mubr.bf16.mxu0 0
        %1298 = vmatmul.mubr.bf16.gmra.mrb[0].mxu0 %v1263
        %v1299 = vpop.f32.mrb[0].mxu0
        %v1300 = vadd.f32 %v1249, %v1299
        %v1301 = vpop.f32.mrb[0].mxu0
        %v1302 = vpop.f32.mrb[0].mxu0
        %v1303 = vpop.f32.mrb[0].mxu0
        %1304 = vdwg.mxu0
        %v1305 = vadd.f32 %v380, %v1300
        %v1306 = vsel %vm400, %v1305, 0.0
        %v1307 = vrot.slane %v1306, 4
        %v1308 = vadd.f32 %v1306, %v1307
        %v1309 = vrot.slane %v1308, 2
        %v1310 = vadd.f32 %v1308, %v1309
        %v1311 = vrot.slane %v1310, 1
        %v1312 = vadd.f32 %v1310, %v1311
        %v1313 = vmul.f32 %v1312, 0.125
        %v1314 = vsub.f32 %v1305, %v1313
        %v1315 = vmul.f32 %v1314, %v1314
        %v1316 = vsel %vm400, %v1315, 0.0
        %v1317 = vrot.slane %v1316, 4
        %v1318 = vadd.f32 %v1316, %v1317
        %v1319 = vrot.slane %v1318, 2
        %v1320 = vadd.f32 %v1318, %v1319
        %v1321 = vrot.slane %v1320, 1
        %v1322 = vadd.f32 %v1320, %v1321
        %v1323 = vmul.f32 %v1322, 0.125
        %v1324 = vadd.f32 %v1323, 1e-05
        %v1325 = vrsqrt.pop %v1324
        %v1326 = vmul.f32 %v1314, %v1325
        %v1327 = vlaneseq
        %v1328 = vshrl.u32 %v1327, 7
        %v1329 = vsub.s32 0, %v1328
        %v1330 = vrot.slane %v1236, %v1329
        %v1331 = vmul.f32 %v1326, %v1330
        %v1332 = vlaneseq
        %v1333 = vshrl.u32 %v1332, 7
        %v1334 = vsub.s32 0, %v1333
        %v1335 = vrot.slane %v1237, %v1334
        %v1336 = vadd.f32 %v1331, %v1335
        %v1337 = vpack.c.bf16 %v1336, %v1336
        %v1338 = vld [vmem:[%s8] sm:$0x1]
        %v1340 = vlaneseq
        %v1341 = vshrl.u32 %v1340, 7
        %v1342 = vsub.s32 0, %v1341
        %v1343 = vrot.slane %v1338, %v1342
        %1345 = vrot.lane.b32.xlu0 %v1258, 96
        %v1346 = vpop.permute.xlu0 %1345
        %1347 = vrot.lane.b32.xlu0 %v1259, 96
        %v1348 = vpop.permute.xlu0 %1347
        %v1352 = vsel %vm400, %v1337, 0
        %1354 = vmatprep.subr.bf16.mxu0 0
        %1355 = vmatpush1.bf16.msra.mxu0 %v1346
        %1356 = vmatprep.subr.bf16.mxu0 0
        %1357 = vmatpush1.bf16.msra.mxu0 %v1348
        %1358 = vmatprep.subr.bf16.mxu0 0
        %1359 = vmatpush1.bf16.msra.mxu0 0
        %1360 = vmatprep.subr.bf16.mxu0 0
        %1361 = vmatpush1.bf16.msra.mxu0 0
        %1362 = vmatprep.subr.bf16.mxu0 0
        %1363 = vmatpush1.bf16.msra.mxu0 0
        %1364 = vmatprep.subr.bf16.mxu0 0
        %1365 = vmatpush1.bf16.msra.mxu0 0
        %1366 = vmatprep.subr.bf16.mxu0 0
        %1367 = vmatpush1.bf16.msra.mxu0 0
        %1368 = vmatprep.subr.bf16.mxu0 0
        %1369 = vmatpush1.bf16.msra.mxu0 0
        %1370 = vmatprep.subr.bf16.mxu0 0
        %1371 = vmatpush1.bf16.msra.mxu0 0
        %1372 = vmatprep.subr.bf16.mxu0 0
        %1373 = vmatpush1.bf16.msra.mxu0 0
        %1374 = vmatprep.subr.bf16.mxu0 0
        %1375 = vmatpush1.bf16.msra.mxu0 0
        %1376 = vmatprep.subr.bf16.mxu0 0
        %1377 = vmatpush1.bf16.msra.mxu0 0
        %1378 = vmatprep.subr.bf16.mxu0 0
        %1379 = vmatpush1.bf16.msra.mxu0 0
        %1380 = vmatprep.subr.bf16.mxu0 0
        %1381 = vmatpush1.bf16.msra.mxu0 0
        %1382 = vmatprep.subr.bf16.mxu0 0
        %1383 = vmatpush1.bf16.msra.mxu0 0
        %1384 = vmatprep.subr.bf16.mxu0 0
        %1385 = vmatpush1.bf16.msra.mxu0 0
        %1386 = vmatprep.mubr.bf16.mxu0 0
        %1387 = vmatmul.mubr.bf16.gmra.mrb[0].mxu0 %v1352
        %v1388 = vpop.f32.mrb[0].mxu0
        %v1389 = vadd.f32 %v1343, %v1388
        %v1390 = vpop.f32.mrb[0].mxu0
        %v1391 = vpop.f32.mrb[0].mxu0
        %v1392 = vpop.f32.mrb[0].mxu0
        %1393 = vdwg.mxu0
        %v1394 = vmax.f32 %v1389, 0.0
        %v1395 = vpack.c.bf16 %v1394, %v1394
        %v1396 = vld [vmem:[%s6] sm:$0xf]
        %v1397 = vld [vmem:[%s6 + $0x4] sm:$0xf]
        %v1398 = vld [vmem:[%s6 + $0x8] sm:$0xf]
        %v1399 = vld [vmem:[%s6 + $0xc] sm:$0xf]
        %v1400 = vld [vmem:[%s6 + $0x10] sm:$0xf]
        %v1401 = vld [vmem:[%s6 + $0x14] sm:$0xf]
        %v1402 = vld [vmem:[%s6 + $0x18] sm:$0xf]
        %v1403 = vld [vmem:[%s6 + $0x1c] sm:$0xf]
        %v1404 = vlaneseq
        %v1405 = vshrl.u32 %v1404, 7
        %v1406 = vsub.s32 0, %v1405
        %v1407 = vrot.slane %v1235, %v1406
        %v1416 = vunpack.c.l.b16 %v1396
        %v1417 = vunpack.c.l.b16 %v1397
        %v1418 = vunpack.c.l.b16 %v1398
        %v1419 = vunpack.c.l.b16 %v1399
        %v1420 = vunpack.c.l.b16 %v1400
        %v1421 = vunpack.c.l.b16 %v1401
        %v1422 = vunpack.c.l.b16 %v1402
        %v1423 = vunpack.c.l.b16 %v1403
        %v1424 = vpack.c.b16 %v1417, %v1416
        %v1425 = vpack.c.b16 %v1419, %v1418
        %v1426 = vpack.c.b16 %v1421, %v1420
        %v1427 = vpack.c.b16 %v1423, %v1422
        %vm1432 = vcmask 523264
        %v1434 = vsel %vm1432, %v1395, 0
        %1436 = vmatprep.subr.bf16.mxu0 0
        %1437 = vmatpush1.bf16.msra.mxu0 %v1424
        %1438 = vmatprep.subr.bf16.mxu0 0
        %1439 = vmatpush1.bf16.msra.mxu0 %v1425
        %1440 = vmatprep.subr.bf16.mxu0 0
        %1441 = vmatpush1.bf16.msra.mxu0 %v1426
        %1442 = vmatprep.subr.bf16.mxu0 0
        %1443 = vmatpush1.bf16.msra.mxu0 %v1427
        %1444 = vmatprep.subr.bf16.mxu0 0
        %1445 = vmatpush1.bf16.msra.mxu0 0
        %1446 = vmatprep.subr.bf16.mxu0 0
        %1447 = vmatpush1.bf16.msra.mxu0 0
        %1448 = vmatprep.subr.bf16.mxu0 0
        %1449 = vmatpush1.bf16.msra.mxu0 0
        %1450 = vmatprep.subr.bf16.mxu0 0
        %1451 = vmatpush1.bf16.msra.mxu0 0
        %1452 = vmatprep.subr.bf16.mxu0 0
        %1453 = vmatpush1.bf16.msra.mxu0 0
        %1454 = vmatprep.subr.bf16.mxu0 0
        %1455 = vmatpush1.bf16.msra.mxu0 0
        %1456 = vmatprep.subr.bf16.mxu0 0
        %1457 = vmatpush1.bf16.msra.mxu0 0
        %1458 = vmatprep.subr.bf16.mxu0 0
        %1459 = vmatpush1.bf16.msra.mxu0 0
        %1460 = vmatprep.subr.bf16.mxu0 0
        %1461 = vmatpush1.bf16.msra.mxu0 0
        %1462 = vmatprep.subr.bf16.mxu0 0
        %1463 = vmatpush1.bf16.msra.mxu0 0
        %1464 = vmatprep.subr.bf16.mxu0 0
        %1465 = vmatpush1.bf16.msra.mxu0 0
        %1466 = vmatprep.subr.bf16.mxu0 0
        %1467 = vmatpush1.bf16.msra.mxu0 0
        %1468 = vmatprep.mubr.bf16.mxu0 0
        %1469 = vmatmul.mubr.bf16.gmra.mrb[0].mxu0 %v1434
        %v1470 = vpop.f32.mrb[0].mxu0
        %v1471 = vadd.f32 %v1407, %v1470
        %v1472 = vpop.f32.mrb[0].mxu0
        %v1473 = vpop.f32.mrb[0].mxu0
        %v1474 = vpop.f32.mrb[0].mxu0
        %1475 = vdwg.mxu0
        %v1476 = vadd.f32 %v1336, %v1471
        %v1477 = vsel %vm400, %v1476, 0.0
        %v1478 = vrot.slane %v1477, 4
        %v1479 = vadd.f32 %v1477, %v1478
        %v1480 = vrot.slane %v1479, 2
        %v1481 = vadd.f32 %v1479, %v1480
        %v1482 = vrot.slane %v1481, 1
        %v1483 = vadd.f32 %v1481, %v1482
        %v1484 = vmul.f32 %v1483, 0.125
        %v1485 = vsub.f32 %v1476, %v1484
        %v1486 = vmul.f32 %v1485, %v1485
        %v1487 = vsel %vm400, %v1486, 0.0
        %v1488 = vrot.slane %v1487, 4
        %v1489 = vadd.f32 %v1487, %v1488
        %v1490 = vrot.slane %v1489, 2
        %v1491 = vadd.f32 %v1489, %v1490
        %v1492 = vrot.slane %v1491, 1
        %v1493 = vadd.f32 %v1491, %v1492
        %v1494 = vmul.f32 %v1493, 0.125
        %v1495 = vadd.f32 %v1494, 1e-05
        %v1496 = vrsqrt.pop %v1495
        %v1497 = vmul.f32 %v1485, %v1496
        %v1498 = vlaneseq
        %v1499 = vshrl.u32 %v1498, 7
        %v1500 = vsub.s32 0, %v1499
        %v1501 = vrot.slane %v1238, %v1500
        %v1502 = vmul.f32 %v1497, %v1501
        %v1503 = vlaneseq
        %v1504 = vshrl.u32 %v1503, 7
        %v1505 = vsub.s32 0, %v1504
        %v1506 = vrot.slane %v1239, %v1505
        %v1507 = vadd.f32 %v1502, %v1506
        %1508 = vst.msk [vmem:[%s365] sm:$0xff] %vm400, %v1507
        %s1509 = sand.u32 %s236, 1
        %s1510 = scalar_lea.sflag [#allocation4], %s1509
        %s1511 = sand.u32 %s236, 1
        %s1512 = smul.addr %s1511, 8
        %s1513 = scalar_lea.vmem [#allocation6], %s1512
        // Predicated region
        $region61: #{matnet_layer_forward.2} parent=55 // pred_check
          %p1514 = pneg %p246
        $region62: #{matnet_layer_forward.2} parent=55 // pred_check_branch
          %1516 = sbr.rel (%p1514) target = $region64
        $region63: #{matnet_layer_forward.2} parent=55 // pred_region
          %s1518 = ssub.s32 128, 128
          %1519 = vsyncadd %s1510, %s1518
          %s1520 = smul.addr %s24, 128
          %s1521 = scalar_lea.hbm %s9, %s1520
          %s1523 = sshll.u32 %s1513, 4
          %s1524 = int_to_ptr.vmem [resolvable:$true] %s1523
          %1526 = dma.vmem_to_hbm [thread:$0]  %s1524, 128, %s1521, %s1510
        $region64: #{matnet_layer_forward.2} parent=55 // pred_fallthru
          _
      $region56: #{matnet_layer_forward.2} parent=5 // pred_fallthru
        _
      %p1527 = scmp.le.s32.totalorder 2, %s19
      // Predicated region
      $region65: #{matnet_layer_forward.2} parent=5 // pred_check
        %p1528 = pneg %p1527
      $region66: #{matnet_layer_forward.2} parent=5 // pred_check_branch
        %1530 = sbr.rel (%p1528) target = $region68
      $region67: #{matnet_layer_forward.2} parent=5 // pred_region
        %s1531 = ssub.s32 %s19, 2
        // Predicated region
        $region69: #{matnet_layer_forward.2} parent=67 // pred_check
          %p1532 = pneg %p252
        $region70: #{matnet_layer_forward.2} parent=67 // pred_check_branch
          %1534 = sbr.rel (%p1532) target = $region72
        $region71: #{matnet_layer_forward.2} parent=67 // pred_region
          %s1535 = sand.u32 %s237, 1
          %s1536 = scalar_lea.sflag [#allocation4], %s1535
          %s1537 = sand.u32 %s237, 1
          %s1538 = smul.addr %s1537, 8
          %s1539 = scalar_lea.vmem [#allocation6], %s1538
          %1540 = dma.done %s1536, 128
        $region72: #{matnet_layer_forward.2} parent=67 // pred_fallthru
          _
      $region68: #{matnet_layer_forward.2} parent=5 // pred_fallthru
        _
    $region6: #{matnet_layer_forward.2} parent=1 // loop_footer
      %s23 = sadd.s32 1, %s19
    $region7: #{matnet_layer_forward.2} parent=1 // loop_footer_branch
      %18 = sbr.rel target = $region3
    $region8: #{matnet_layer_forward.2} parent=1 // loop_exit
      _
    %1541 = vsyncpa [#allocation4], 1
    %s1542 = scalar_lea.sflag [#allocation4], 1
    %1543 = vsyncpa %s1542, 1
    %1544 = vsyncpa [#allocation5], 1
    %s1545 = scalar_lea.sflag [#allocation5], 1
    %1546 = vsyncpa %s1545, 1

// kernel: matnet_layer_forward.3
$region0: #{matnet_layer_forward.3}
  #allocation0 [shape = 'u32[]', space=smem, size = 0x4, offset = 0x4, fixed_abs, tag = 'smem constant byte address 0x4 - core index']
  #allocation1 [shape = 'u32[144,128]{1,0:T(1,128)}', space=vmem, size = 0x12000, scoped, tag = 'internal scratch']
  #allocation2 [shape = 'f32[16,32]{1,0:T(8,128)}', space=vmem, size = 0x2000, scoped, tag = 'scratch operand']
  %s0 = inlined_call_operand.vmem [shape: f32[2,16,32], index: 0, kind: input, shape index: {}]
  %s1 = inlined_call_operand.vmem [shape: f32[2,8,32], index: 1, kind: input, shape index: {}]
  %s2 = inlined_call_operand.vmem [shape: f32[2,8,16], index: 2, kind: input, shape index: {}]
  %s3 = inlined_call_operand.hbm [shape: bf16[32,96], index: 3, kind: input, shape index: {}]
  %s4 = inlined_call_operand.hbm [shape: f32[4,16], index: 4, kind: input, shape index: {}]
  %s5 = inlined_call_operand.hbm [shape: bf16[32,96], index: 5, kind: input, shape index: {}]
  %s6 = inlined_call_operand.vmem [shape: bf16[64,32], index: 6, kind: input, shape index: {}]
  %s7 = inlined_call_operand.hbm [shape: f32[6,32], index: 7, kind: input, shape index: {}]
  %s8 = inlined_call_operand.vmem [shape: f32[1,64], index: 8, kind: input, shape index: {}]
  %s9 = inlined_call_operand.hbm [shape: f32[2,16,32], index: 9, kind: output, shape index: {}]
  %s10 = sld [smem:[#allocation0]]
  $region85: #{matnet_layer_forward.3} parent=0
    _
  %s12 = ssub.s32 1, %s10
  %s13 = scalar_select 0, %s12, %s10
  $region1: #{matnet_layer_forward.3} parent=0
    #allocation3 [shape = 'u8[8192]{0}', space=vmem, size = 0x2000, scoped, tag = 'input window, operand 3, single buffered']
    #allocation4 [shape = 's32[2]{0}', space=sflag, size = 0x8, scoped, tag = 'scoped memory for matnet_layer_forward.3']
    #allocation5 [shape = 's32[2]{0}', space=sflag, size = 0x8, scoped, tag = 'scoped memory for matnet_layer_forward.3']
    #allocation6 [shape = 's32[2]{0}', space=sflag, size = 0x8, scoped, tag = 'scoped memory for matnet_layer_forward.3']
    #allocation7 [shape = 'u8[2048]{0}', space=smem, size = 0x800, scoped, tag = 'input window, operand 4, single buffered']
    #allocation8 [shape = 'u8[8192]{0}', space=vmem, size = 0x2000, scoped, tag = 'input window, operand 5, single buffered']
    #allocation9 [shape = 's32[1]{0}', space=sflag, size = 0x4, scoped, tag = 'scoped memory for matnet_layer_forward.3']
    #allocation10 [shape = 'u8[4096]{0}', space=vmem, size = 0x1000, scoped, tag = 'input window, operand 7, single buffered']
    #allocation11 [shape = 'u8[16384]{0}', space=vmem, size = 0x4000, scoped, tag = 'output window, operand 0']
    %14 = vsyncpa [#allocation4], 0
    %15 = vsyncpa [#allocation6], 0
    %16 = vsyncpa [#allocation9], 0
    %17 = vsyncpa [#allocation5], 0
    %s18 = scalar_lea.sflag [#allocation5], 1
    %19 = vsyncpa %s18, 0
    loop: start=0, step=1, limit=4
    $region2: #{matnet_layer_forward.3} parent=1 // loop_pre_header
      _
    $region3: #{matnet_layer_forward.3} parent=1 // loop_header
      %s21 = sphi 0, %s25
      %p22 = scmp.ge.s32.totalorder %s21, 4
      %s31 = sphi 0, %s33
      %s34 = sphi 0, %s31
      %s35 = sphi 0, %s34
      %s51 = sphi 0, %s35
      %s57 = sphi 0, %s59
      %s60 = sphi 0, %s57
      %s61 = sphi 0, %s60
      %s77 = sphi 0, %s61
      %s83 = sphi 0, %s85
      %s86 = sphi 0, %s83
      %s87 = sphi 0, %s86
      %s103 = sphi 0, %s87
      %s107 = sphi 0, %s107
      %s109 = sphi 0, %s107
      %s110 = sphi 0, %s109
      %s124 = sphi 0, %s110
      %s128 = sphi 0, %s128
      %s130 = sphi 0, %s128
      %s131 = sphi 0, %s130
      %s145 = sphi 0, %s131
      %s149 = sphi 0, %s149
      %s151 = sphi 0, %s149
      %s152 = sphi 0, %s151
      %s166 = sphi 0, %s152
      %s170 = sphi 0, %s170
      %s172 = sphi 0, %s170
      %s173 = sphi 0, %s172
      %s187 = sphi 0, %s173
      %s191 = sphi 0, %s191
      %s193 = sphi 0, %s191
      %s194 = sphi 0, %s193
      %s208 = sphi 0, %s194
      %s212 = sphi 0, %s212
      %s214 = sphi 0, %s212
      %s215 = sphi 0, %s214
      %s229 = sphi 0, %s215
      %s235 = sphi 0, %s237
      %s238 = sphi 0, %s235
      %s239 = sphi 0, %s238
      %s255 = sphi 0, %s239
    $region4: #{matnet_layer_forward.3} parent=1 // loop_header_branch
      %24 = sbr.rel (%p22) target = $region8
    $region5: #{matnet_layer_forward.3} parent=1 // loop_body
      %s26 = ssub.s32 %s21, 1
      %s27 = ssub.s32 %s21, 2
      %s28 = sadd.s32 %s21, 1
      %s29 = ssub.s32 %s21, %s28
      %p30 = scmp.eq.s32.totalorder %s29, 0
      %s32 = sadd.s32 %s31, 1
      %s33 = scalar_select %p30, %s31, %s32
      %p36 = pneg %p30
      %p37 = scmp.eq.s32.totalorder %s21, 1
      %p38 = por %p36, %p37
      %p39 = scmp.ne.s32.totalorder %s31, %s34
      %p40 = scmp.eq.s32.totalorder %s21, 0
      %p41 = por %p39, %p40
      %p42 = scmp.ne.s32.totalorder %s31, %s34
      %p43 = scmp.eq.s32.totalorder %s26, 1
      %p44 = por %p42, %p43
      %p45 = scmp.ne.s32.totalorder %s34, %s35
      %p46 = scmp.eq.s32.totalorder %s26, 0
      %p47 = por %p45, %p46
      %p48 = scmp.ne.s32.totalorder %s34, %s35
      %p49 = scmp.eq.s32.totalorder %s27, 1
      %p50 = por %p48, %p49
      %p52 = scmp.ne.s32.totalorder %s35, %s51
      %p53 = scmp.eq.s32.totalorder %s27, 0
      %p54 = por %p52, %p53
      %s55 = ssub.s32 %s21, %s28
      %p56 = scmp.eq.s32.totalorder %s55, 0
      %s58 = sadd.s32 %s57, 1
      %s59 = scalar_select %p56, %s57, %s58
      %p62 = pneg %p56
      %p63 = scmp.eq.s32.totalorder %s21, 1
      %p64 = por %p62, %p63
      %p65 = scmp.ne.s32.totalorder %s57, %s60
      %p66 = scmp.eq.s32.totalorder %s21, 0
      %p67 = por %p65, %p66
      %p68 = scmp.ne.s32.totalorder %s57, %s60
      %p69 = scmp.eq.s32.totalorder %s26, 1
      %p70 = por %p68, %p69
      %p71 = scmp.ne.s32.totalorder %s60, %s61
      %p72 = scmp.eq.s32.totalorder %s26, 0
      %p73 = por %p71, %p72
      %p74 = scmp.ne.s32.totalorder %s60, %s61
      %p75 = scmp.eq.s32.totalorder %s27, 1
      %p76 = por %p74, %p75
      %p78 = scmp.ne.s32.totalorder %s61, %s77
      %p79 = scmp.eq.s32.totalorder %s27, 0
      %p80 = por %p78, %p79
      %s81 = ssub.s32 %s21, %s28
      %p82 = scmp.eq.s32.totalorder %s81, 0
      %s84 = sadd.s32 %s83, 1
      %s85 = scalar_select %p82, %s83, %s84
      %p88 = pneg %p82
      %p89 = scmp.eq.s32.totalorder %s21, 1
      %p90 = por %p88, %p89
      %p91 = scmp.ne.s32.totalorder %s83, %s86
      %p92 = scmp.eq.s32.totalorder %s21, 0
      %p93 = por %p91, %p92
      %p94 = scmp.ne.s32.totalorder %s83, %s86
      %p95 = scmp.eq.s32.totalorder %s26, 1
      %p96 = por %p94, %p95
      %p97 = scmp.ne.s32.totalorder %s86, %s87
      %p98 = scmp.eq.s32.totalorder %s26, 0
      %p99 = por %p97, %p98
      %p100 = scmp.ne.s32.totalorder %s86, %s87
      %p101 = scmp.eq.s32.totalorder %s27, 1
      %p102 = por %p100, %p101
      %p104 = scmp.ne.s32.totalorder %s87, %s103
      %p105 = scmp.eq.s32.totalorder %s27, 0
      %p106 = por %p104, %p105
      %s108 = sadd.s32 %s107, 1
      %p111 = scmp.eq.s32.totalorder %s21, 1
      %p112 = scmp.ne.s32.totalorder %s107, %s109
      %p113 = scmp.eq.s32.totalorder %s21, 0
      %p114 = por %p112, %p113
      %p115 = scmp.ne.s32.totalorder %s107, %s109
      %p116 = scmp.eq.s32.totalorder %s26, 1
      %p117 = por %p115, %p116
      %p118 = scmp.ne.s32.totalorder %s109, %s110
      %p119 = scmp.eq.s32.totalorder %s26, 0
      %p120 = por %p118, %p119
      %p121 = scmp.ne.s32.totalorder %s109, %s110
      %p122 = scmp.eq.s32.totalorder %s27, 1
      %p123 = por %p121, %p122
      %p125 = scmp.ne.s32.totalorder %s110, %s124
      %p126 = scmp.eq.s32.totalorder %s27, 0
      %p127 = por %p125, %p126
      %s129 = sadd.s32 %s128, 1
      %p132 = scmp.eq.s32.totalorder %s21, 1
      %p133 = scmp.ne.s32.totalorder %s128, %s130
      %p134 = scmp.eq.s32.totalorder %s21, 0
      %p135 = por %p133, %p134
      %p136 = scmp.ne.s32.totalorder %s128, %s130
      %p137 = scmp.eq.s32.totalorder %s26, 1
      %p138 = por %p136, %p137
      %p139 = scmp.ne.s32.totalorder %s130, %s131
      %p140 = scmp.eq.s32.totalorder %s26, 0
      %p141 = por %p139, %p140
      %p142 = scmp.ne.s32.totalorder %s130, %s131
      %p143 = scmp.eq.s32.totalorder %s27, 1
      %p144 = por %p142, %p143
      %p146 = scmp.ne.s32.totalorder %s131, %s145
      %p147 = scmp.eq.s32.totalorder %s27, 0
      %p148 = por %p146, %p147
      %s150 = sadd.s32 %s149, 1
      %p153 = scmp.eq.s32.totalorder %s21, 1
      %p154 = scmp.ne.s32.totalorder %s149, %s151
      %p155 = scmp.eq.s32.totalorder %s21, 0
      %p156 = por %p154, %p155
      %p157 = scmp.ne.s32.totalorder %s149, %s151
      %p158 = scmp.eq.s32.totalorder %s26, 1
      %p159 = por %p157, %p158
      %p160 = scmp.ne.s32.totalorder %s151, %s152
      %p161 = scmp.eq.s32.totalorder %s26, 0
      %p162 = por %p160, %p161
      %p163 = scmp.ne.s32.totalorder %s151, %s152
      %p164 = scmp.eq.s32.totalorder %s27, 1
      %p165 = por %p163, %p164
      %p167 = scmp.ne.s32.totalorder %s152, %s166
      %p168 = scmp.eq.s32.totalorder %s27, 0
      %p169 = por %p167, %p168
      %s171 = sadd.s32 %s170, 1
      %p174 = scmp.eq.s32.totalorder %s21, 1
      %p175 = scmp.ne.s32.totalorder %s170, %s172
      %p176 = scmp.eq.s32.totalorder %s21, 0
      %p177 = por %p175, %p176
      %p178 = scmp.ne.s32.totalorder %s170, %s172
      %p179 = scmp.eq.s32.totalorder %s26, 1
      %p180 = por %p178, %p179
      %p181 = scmp.ne.s32.totalorder %s172, %s173
      %p182 = scmp.eq.s32.totalorder %s26, 0
      %p183 = por %p181, %p182
      %p184 = scmp.ne.s32.totalorder %s172, %s173
      %p185 = scmp.eq.s32.totalorder %s27, 1
      %p186 = por %p184, %p185
      %p188 = scmp.ne.s32.totalorder %s173, %s187
      %p189 = scmp.eq.s32.totalorder %s27, 0
      %p190 = por %p188, %p189
      %s192 = sadd.s32 %s191, 1
      %p195 = scmp.eq.s32.totalorder %s21, 1
      %p196 = scmp.ne.s32.totalorder %s191, %s193
      %p197 = scmp.eq.s32.totalorder %s21, 0
      %p198 = por %p196, %p197
      %p199 = scmp.ne.s32.totalorder %s191, %s193
      %p200 = scmp.eq.s32.totalorder %s26, 1
      %p201 = por %p199, %p200
      %p202 = scmp.ne.s32.totalorder %s193, %s194
      %p203 = scmp.eq.s32.totalorder %s26, 0
      %p204 = por %p202, %p203
      %p205 = scmp.ne.s32.totalorder %s193, %s194
      %p206 = scmp.eq.s32.totalorder %s27, 1
      %p207 = por %p205, %p206
      %p209 = scmp.ne.s32.totalorder %s194, %s208
      %p210 = scmp.eq.s32.totalorder %s27, 0
      %p211 = por %p209, %p210
      %s213 = sadd.s32 %s212, 1
      %p216 = scmp.eq.s32.totalorder %s21, 1
      %p217 = scmp.ne.s32.totalorder %s212, %s214
      %p218 = scmp.eq.s32.totalorder %s21, 0
      %p219 = por %p217, %p218
      %p220 = scmp.ne.s32.totalorder %s212, %s214
      %p221 = scmp.eq.s32.totalorder %s26, 1
      %p222 = por %p220, %p221
      %p223 = scmp.ne.s32.totalorder %s214, %s215
      %p224 = scmp.eq.s32.totalorder %s26, 0
      %p225 = por %p223, %p224
      %p226 = scmp.ne.s32.totalorder %s214, %s215
      %p227 = scmp.eq.s32.totalorder %s27, 1
      %p228 = por %p226, %p227
      %p230 = scmp.ne.s32.totalorder %s215, %s229
      %p231 = scmp.eq.s32.totalorder %s27, 0
      %p232 = por %p230, %p231
      %s233 = ssub.s32 %s21, %s28
      %p234 = scmp.eq.s32.totalorder %s233, 0
      %s236 = sadd.s32 %s235, 1
      %s237 = scalar_select %p234, %s235, %s236
      %p240 = pneg %p234
      %p241 = scmp.eq.s32.totalorder %s21, 1
      %p242 = por %p240, %p241
      %p243 = scmp.ne.s32.totalorder %s235, %s238
      %p244 = scmp.eq.s32.totalorder %s21, 0
      %p245 = por %p243, %p244
      %p246 = scmp.ne.s32.totalorder %s235, %s238
      %p247 = scmp.eq.s32.totalorder %s26, 1
      %p248 = por %p246, %p247
      %p249 = scmp.ne.s32.totalorder %s238, %s239
      %p250 = scmp.eq.s32.totalorder %s26, 0
      %p251 = por %p249, %p250
      %p252 = scmp.ne.s32.totalorder %s238, %s239
      %p253 = scmp.eq.s32.totalorder %s27, 1
      %p254 = por %p252, %p253
      %p256 = scmp.ne.s32.totalorder %s239, %s255
      %p257 = scmp.eq.s32.totalorder %s27, 0
      %p258 = por %p256, %p257
      %p259 = scmp.le.s32.totalorder 1, %s21
      %p260 = scmp.lt.s32.totalorder %s21, 3
      %p261 = pnand %p259, %p260
      %p262 = pneg %p261
      // Predicated region
      $region9: #{matnet_layer_forward.3} parent=5 // pred_check
        _
      $region10: #{matnet_layer_forward.3} parent=5 // pred_check_branch
        %264 = sbr.rel (%p261) target = $region12
      $region11: #{matnet_layer_forward.3} parent=5 // pred_region
        %s265 = ssub.s32 %s21, 1
        // Predicated region
        $region13: #{matnet_layer_forward.3} parent=11 // pred_check
          %p266 = pneg %p120
        $region14: #{matnet_layer_forward.3} parent=11 // pred_check_branch
          %268 = sbr.rel (%p266) target = $region16
        $region15: #{matnet_layer_forward.3} parent=11 // pred_region
          %s270 = ssub.s32 256, 256
          %271 = vsyncadd [#allocation4], %s270
          %s272 = sshll.u32 [#allocation3], 4
          %s273 = int_to_ptr.vmem [resolvable:$true] %s272
          %278 = dma.hbm_to_vmem [thread:$0]  %s3, 256, %s273, [#allocation4], 64, 64, 4
        $region16: #{matnet_layer_forward.3} parent=11 // pred_fallthru
          _
        // Predicated region
        $region17: #{matnet_layer_forward.3} parent=11 // pred_check
          %p279 = pneg %p141
        $region18: #{matnet_layer_forward.3} parent=11 // pred_check_branch
          %281 = sbr.rel (%p279) target = $region20
        $region19: #{matnet_layer_forward.3} parent=11 // pred_region
          %s283 = ssub.s32 64, 64
          %284 = vsyncadd [#allocation6], %s283
          %287 = dma.hbm_to_smem %s4, 64, [#allocation7], [#allocation6]
        $region20: #{matnet_layer_forward.3} parent=11 // pred_fallthru
          _
        // Predicated region
        $region21: #{matnet_layer_forward.3} parent=11 // pred_check
          %p288 = pneg %p162
        $region22: #{matnet_layer_forward.3} parent=11 // pred_check_branch
          %290 = sbr.rel (%p288) target = $region24
        $region23: #{matnet_layer_forward.3} parent=11 // pred_region
          %s292 = ssub.s32 256, 256
          %293 = vsyncadd [#allocation9], %s292
          %s294 = sshll.u32 [#allocation8], 4
          %s295 = int_to_ptr.vmem [resolvable:$true] %s294
          %300 = dma.hbm_to_vmem [thread:$0]  %s5, 256, %s295, [#allocation9], 64, 64, 4
        $region24: #{matnet_layer_forward.3} parent=11 // pred_fallthru
          _
        // Predicated region
        $region25: #{matnet_layer_forward.3} parent=11 // pred_check
          %p301 = pneg %p183
        $region26: #{matnet_layer_forward.3} parent=11 // pred_check_branch
          %303 = sbr.rel (%p301) target = $region28
        $region27: #{matnet_layer_forward.3} parent=11 // pred_region
          _
        $region28: #{matnet_layer_forward.3} parent=11 // pred_fallthru
          _
        // Predicated region
        $region29: #{matnet_layer_forward.3} parent=11 // pred_check
          %p304 = pneg %p204
        $region30: #{matnet_layer_forward.3} parent=11 // pred_check_branch
          %306 = sbr.rel (%p304) target = $region32
        $region31: #{matnet_layer_forward.3} parent=11 // pred_region
          %s308 = ssub.s32 128, 128
          %309 = vsyncadd [#allocation9], %s308
          %s311 = sshll.u32 [#allocation10], 4
          %s312 = int_to_ptr.vmem [resolvable:$true] %s311
          %314 = dma.hbm_to_vmem [thread:$0]  %s7, 128, %s312, [#allocation9]
        $region32: #{matnet_layer_forward.3} parent=11 // pred_fallthru
          _
        // Predicated region
        $region33: #{matnet_layer_forward.3} parent=11 // pred_check
          %p315 = pneg %p225
        $region34: #{matnet_layer_forward.3} parent=11 // pred_check_branch
          %317 = sbr.rel (%p315) target = $region36
        $region35: #{matnet_layer_forward.3} parent=11 // pred_region
          _
        $region36: #{matnet_layer_forward.3} parent=11 // pred_fallthru
          _
      $region12: #{matnet_layer_forward.3} parent=5 // pred_fallthru
        _
      %p318 = scmp.lt.s32.totalorder %s21, 2
      // Predicated region
      $region37: #{matnet_layer_forward.3} parent=5 // pred_check
        %p319 = pneg %p318
      $region38: #{matnet_layer_forward.3} parent=5 // pred_check_branch
        %321 = sbr.rel (%p319) target = $region40
      $region39: #{matnet_layer_forward.3} parent=5 // pred_region
        // Predicated region
        $region41: #{matnet_layer_forward.3} parent=39 // pred_check
          %p322 = pneg %p41
        $region42: #{matnet_layer_forward.3} parent=39 // pred_check_branch
          %324 = sbr.rel (%p322) target = $region44
        $region43: #{matnet_layer_forward.3} parent=39 // pred_region
          %p325 = scmp.lt.s32.totalorder %s21, 1
          %s326 = scalar_select %p325, %s21, 1
          %s327 = smul.addr %s326, 2
          %s328 = smul.addr %s327, 8
          %s329 = scalar_lea.vmem %s0, %s328
        $region44: #{matnet_layer_forward.3} parent=39 // pred_fallthru
          _
        // Predicated region
        $region45: #{matnet_layer_forward.3} parent=39 // pred_check
          %p330 = pneg %p67
        $region46: #{matnet_layer_forward.3} parent=39 // pred_check_branch
          %332 = sbr.rel (%p330) target = $region48
        $region47: #{matnet_layer_forward.3} parent=39 // pred_region
          %p333 = scmp.lt.s32.totalorder %s21, 1
          %s334 = scalar_select %p333, %s21, 1
          %s335 = smul.addr %s334, 8
          %s336 = scalar_lea.vmem %s1, %s335
        $region48: #{matnet_layer_forward.3} parent=39 // pred_fallthru
          _
        // Predicated region
        $region49: #{matnet_layer_forward.3} parent=39 // pred_check
          %p337 = pneg %p93
        $region50: #{matnet_layer_forward.3} parent=39 // pred_check_branch
          %339 = sbr.rel (%p337) target = $region52
        $region51: #{matnet_layer_forward.3} parent=39 // pred_region
          %p340 = scmp.lt.s32.totalorder %s21, 1
          %s341 = scalar_select %p340, %s21, 1
          %s342 = smul.addr %s341, 8
          %s343 = scalar_lea.vmem %s2, %s342
        $region52: #{matnet_layer_forward.3} parent=39 // pred_fallthru
          _
      $region40: #{matnet_layer_forward.3} parent=5 // pred_fallthru
        _
      %p344 = scmp.le.s32.totalorder 1, %s21
      %p345 = scmp.lt.s32.totalorder %s21, 3
      %p346 = pnand %p344, %p345
      %p347 = pneg %p346
      // Predicated region
      $region53: #{matnet_layer_forward.3} parent=5 // pred_check
        _
      $region54: #{matnet_layer_forward.3} parent=5 // pred_check_branch
        %349 = sbr.rel (%p346) target = $region56
      $region55: #{matnet_layer_forward.3} parent=5 // pred_region
        %s350 = ssub.s32 %s21, 1
        // Predicated region
        $region57: #{matnet_layer_forward.3} parent=55 // pred_check
          %p351 = pneg %p120
        $region58: #{matnet_layer_forward.3} parent=55 // pred_check_branch
          %353 = sbr.rel (%p351) target = $region60
        $region59: #{matnet_layer_forward.3} parent=55 // pred_region
          %354 = dma.done [#allocation4], 256
        $region60: #{matnet_layer_forward.3} parent=55 // pred_fallthru
          _
        // Predicated region
        $region61: #{matnet_layer_forward.3} parent=55 // pred_check
          %p355 = pneg %p141
        $region62: #{matnet_layer_forward.3} parent=55 // pred_check_branch
          %357 = sbr.rel (%p355) target = $region64
        $region63: #{matnet_layer_forward.3} parent=55 // pred_region
          %358 = dma.done [#allocation6], 64
        $region64: #{matnet_layer_forward.3} parent=55 // pred_fallthru
          _
        // Predicated region
        $region65: #{matnet_layer_forward.3} parent=55 // pred_check
          %p359 = pneg %p162
        $region66: #{matnet_layer_forward.3} parent=55 // pred_check_branch
          %361 = sbr.rel (%p359) target = $region68
        $region67: #{matnet_layer_forward.3} parent=55 // pred_region
          %362 = dma.done [#allocation9], 256
        $region68: #{matnet_layer_forward.3} parent=55 // pred_fallthru
          _
        // Predicated region
        $region69: #{matnet_layer_forward.3} parent=55 // pred_check
          %p363 = pneg %p204
        $region70: #{matnet_layer_forward.3} parent=55 // pred_check_branch
          %365 = sbr.rel (%p363) target = $region72
        $region71: #{matnet_layer_forward.3} parent=55 // pred_region
          %366 = dma.done [#allocation9], 128
        $region72: #{matnet_layer_forward.3} parent=55 // pred_fallthru
          _
        %367 = sfence
        %p368 = scmp.lt.s32.totalorder %s26, 1
        %s369 = scalar_select %p368, %s26, 1
        %s370 = smul.addr %s369, 2
        %s371 = smul.addr %s370, 8
        %s372 = scalar_lea.vmem %s0, %s371
        %p373 = pneg %p47
        %p374 = pneg %p44
        %p375 = scmp.lt.s32.totalorder %s26, 1
        %s376 = scalar_select %p375, %s26, 1
        %s377 = smul.addr %s376, 8
        %s378 = scalar_lea.vmem %s1, %s377
        %p379 = pneg %p73
        %p380 = pneg %p70
        %p381 = scmp.lt.s32.totalorder %s26, 1
        %s382 = scalar_select %p381, %s26, 1
        %s383 = smul.addr %s382, 8
        %s384 = scalar_lea.vmem %s2, %s383
        %p385 = pneg %p99
        %p386 = pneg %p96
        %p387 = pneg %p120
        %p388 = pneg %p117
        %p389 = pneg %p141
        %p390 = pneg %p138
        %p391 = pneg %p162
        %p392 = pneg %p159
        %p393 = pneg %p183
        %p394 = pneg %p180
        %p395 = pneg %p204
        %p396 = pneg %p201
        %p397 = pneg %p225
        %p398 = pneg %p222
        %p399 = pneg %p251
        %p400 = pneg %p248
        %s401 = sand.u32 %s238, 1
        %s402 = scalar_lea.sflag [#allocation5], %s401
        %s403 = sand.u32 %s238, 1
        %s404 = smul.addr %s403, 16
        %s405 = scalar_lea.vmem [#allocation11], %s404
        %p406 = scmp.lt.s32.totalorder %s26, 1
        %s407 = scalar_select %p406, %s26, 1
        %s408 = smul.addr %s407, 2
        %s409 = smul.addr %s408, 8
        %s410 = scalar_lea.vmem %s0, %s409
        %p411 = scmp.lt.s32.totalorder %s26, 1
        %s412 = scalar_select %p411, %s26, 1
        %s413 = smul.addr %s412, 8
        %s414 = scalar_lea.vmem %s1, %s413
        %p415 = scmp.lt.s32.totalorder %s26, 1
        %s416 = scalar_select %p415, %s26, 1
        %s417 = smul.addr %s416, 8
        %s418 = scalar_lea.vmem %s2, %s417
        %v420 = vld [vmem:[%s410] sm:$0xff]
        %v421 = vld [vmem:[%s410 + $0x8] sm:$0xff]
        %v422 = vld [vmem:[%s414] sm:$0xff]
        %v423 = vpack.c.bf16 %v421, %v420
        %v424 = vld [vmem:[#allocation3] sm:$0xf]
        %v425 = vld [vmem:[#allocation3 + $0x4] sm:$0xf]
        %v426 = vld [vmem:[#allocation3 + $0x8] sm:$0xf]
        %v427 = vld [vmem:[#allocation3 + $0xc] sm:$0xf]
        %v432 = vunpack.c.l.b16 %v424
        %v433 = vunpack.c.l.b16 %v425
        %v434 = vunpack.c.l.b16 %v426
        %v435 = vunpack.c.l.b16 %v427
        %v436 = vpack.c.b16 %v433, %v432
        %v437 = vpack.c.b16 %v435, %v434
        %vm440 = vcmask 261120
        %v442 = vsel %vm440, %v423, 0
        %444 = vmatprep.subr.bf16.mxu0 0
        %445 = vmatpush1.bf16.msra.mxu0 %v436
        %446 = vmatprep.subr.bf16.mxu0 0
        %447 = vmatpush1.bf16.msra.mxu0 %v437
        %448 = vmatprep.subr.bf16.mxu0 0
        %449 = vmatpush1.bf16.msra.mxu0 0
        %450 = vmatprep.subr.bf16.mxu0 0
        %451 = vmatpush1.bf16.msra.mxu0 0
        %452 = vmatprep.subr.bf16.mxu0 0
        %453 = vmatpush1.bf16.msra.mxu0 0
        %454 = vmatprep.subr.bf16.mxu0 0
        %455 = vmatpush1.bf16.msra.mxu0 0
        %456 = vmatprep.subr.bf16.mxu0 0
        %457 = vmatpush1.bf16.msra.mxu0 0
        %458 = vmatprep.subr.bf16.mxu0 0
        %459 = vmatpush1.bf16.msra.mxu0 0
        %460 = vmatprep.subr.bf16.mxu0 0
        %461 = vmatpush1.bf16.msra.mxu0 0
        %462 = vmatprep.subr.bf16.mxu0 0
        %463 = vmatpush1.bf16.msra.mxu0 0
        %464 = vmatprep.subr.bf16.mxu0 0
        %465 = vmatpush1.bf16.msra.mxu0 0
        %466 = vmatprep.subr.bf16.mxu0 0
        %467 = vmatpush1.bf16.msra.mxu0 0
        %468 = vmatprep.subr.bf16.mxu0 0
        %469 = vmatpush1.bf16.msra.mxu0 0
        %470 = vmatprep.subr.bf16.mxu0 0
        %471 = vmatpush1.bf16.msra.mxu0 0
        %472 = vmatprep.subr.bf16.mxu0 0
        %473 = vmatpush1.bf16.msra.mxu0 0
        %474 = vmatprep.subr.bf16.mxu0 0
        %475 = vmatpush1.bf16.msra.mxu0 0
        %476 = vmatprep.mubr.bf16.mxu0 0
        %477 = vmatmul.mubr.bf16.gmra.mrb[0].mxu0 %v442
        %v478 = vpop.f32.mrb[0].mxu0
        %v479 = vadd.f32 0.0, %v478
        %v480 = vpop.f32.mrb[0].mxu0
        %v481 = vpop.f32.mrb[0].mxu0
        %v482 = vadd.f32 0.0, %v481
        %v483 = vpop.f32.mrb[0].mxu0
        %484 = vdwg.mxu0
        %v485 = vpack.c.bf16 %v422, %v422
        %486 = vrot.lane.b32.xlu0 %v436, 96
        %v487 = vpop.permute.xlu0 %486
        %488 = vrot.lane.b32.xlu0 %v437, 96
        %v489 = vpop.permute.xlu0 %488
        %v493 = vsel %vm440, %v485, 0
        %495 = vmatprep.subr.bf16.mxu0 0
        %496 = vmatpush1.bf16.msra.mxu0 %v487
        %497 = vmatprep.subr.bf16.mxu0 0
        %498 = vmatpush1.bf16.msra.mxu0 %v489
        %499 = vmatprep.subr.bf16.mxu0 0
        %500 = vmatpush1.bf16.msra.mxu0 0
        %501 = vmatprep.subr.bf16.mxu0 0
        %502 = vmatpush1.bf16.msra.mxu0 0
        %503 = vmatprep.subr.bf16.mxu0 0
        %504 = vmatpush1.bf16.msra.mxu0 0
        %505 = vmatprep.subr.bf16.mxu0 0
        %506 = vmatpush1.bf16.msra.mxu0 0
        %507 = vmatprep.subr.bf16.mxu0 0
        %508 = vmatpush1.bf16.msra.mxu0 0
        %509 = vmatprep.subr.bf16.mxu0 0
        %510 = vmatpush1.bf16.msra.mxu0 0
        %511 = vmatprep.subr.bf16.mxu0 0
        %512 = vmatpush1.bf16.msra.mxu0 0
        %513 = vmatprep.subr.bf16.mxu0 0
        %514 = vmatpush1.bf16.msra.mxu0 0
        %515 = vmatprep.subr.bf16.mxu0 0
        %516 = vmatpush1.bf16.msra.mxu0 0
        %517 = vmatprep.subr.bf16.mxu0 0
        %518 = vmatpush1.bf16.msra.mxu0 0
        %519 = vmatprep.subr.bf16.mxu0 0
        %520 = vmatpush1.bf16.msra.mxu0 0
        %521 = vmatprep.subr.bf16.mxu0 0
        %522 = vmatpush1.bf16.msra.mxu0 0
        %523 = vmatprep.subr.bf16.mxu0 0
        %524 = vmatpush1.bf16.msra.mxu0 0
        %525 = vmatprep.subr.bf16.mxu0 0
        %526 = vmatpush1.bf16.msra.mxu0 0
        %527 = vmatprep.mubr.bf16.mxu0 0
        %528 = vmatmul.mubr.bf16.gmra.mrb[0].mxu0 %v493
        %v529 = vpop.f32.mrb[0].mxu0
        %v530 = vadd.f32 0.0, %v529
        %v531 = vpop.f32.mrb[0].mxu0
        %v532 = vpop.f32.mrb[0].mxu0
        %v533 = vpop.f32.mrb[0].mxu0
        %534 = vdwg.mxu0
        %v535 = vld [vmem:[%s418] sm:$0xff]
        %536 = vxpose.xlu0.b32.start [1/16] %v535, 128
        %537 = vxpose.xlu0.b32.cont [2/16] 0.0, 128
        %538 = vxpose.xlu0.b32.cont [3/16] 0.0, 128
        %539 = vxpose.xlu0.b32.cont [4/16] 0.0, 128
        %540 = vxpose.xlu0.b32.cont [5/16] 0.0, 128
        %541 = vxpose.xlu0.b32.cont [6/16] 0.0, 128
        %542 = vxpose.xlu0.b32.cont [7/16] 0.0, 128
        %543 = vxpose.xlu0.b32.cont [8/16] 0.0, 128
        %544 = vxpose.xlu0.b32.cont [9/16] 0.0, 128
        %545 = vxpose.xlu0.b32.cont [10/16] 0.0, 128
        %546 = vxpose.xlu0.b32.cont [11/16] 0.0, 128
        %547 = vxpose.xlu0.b32.cont [12/16] 0.0, 128
        %548 = vxpose.xlu0.b32.cont [13/16] 0.0, 128
        %549 = vxpose.xlu0.b32.cont [14/16] 0.0, 128
        %550 = vxpose.xlu0.b32.cont [15/16] 0.0, 128
        %551 = vxpose.xlu0.b32.end [16/16] 0.0, 128
        %v552 = vpop.trf.xlu0
        %v553 = vpop.trf.xlu0
        %v554 = vpop.trf.xlu0
        %v555 = vpop.trf.xlu0
        %v556 = vpop.trf.xlu0
        %v557 = vpop.trf.xlu0
        %v558 = vpop.trf.xlu0
        %v559 = vpop.trf.xlu0
        %v560 = vpop.trf.xlu0
        %v561 = vpop.trf.xlu0
        %v562 = vpop.trf.xlu0
        %v563 = vpop.trf.xlu0
        %v564 = vpop.trf.xlu0
        %v565 = vpop.trf.xlu0
        %v566 = vpop.trf.xlu0
        %v567 = vpop.trf.xlu0
        %v568 = vpack.c.bf16 %v482, %v479
        %569 = vxpose.xlu0.b32.start [1/16] %v530, 128
        %570 = vxpose.xlu0.b32.cont [2/16] 0.0, 128
        %571 = vxpose.xlu0.b32.cont [3/16] 0.0, 128
        %572 = vxpose.xlu0.b32.cont [4/16] 0.0, 128
        %573 = vxpose.xlu0.b32.cont [5/16] 0.0, 128
        %574 = vxpose.xlu0.b32.cont [6/16] 0.0, 128
        %575 = vxpose.xlu0.b32.cont [7/16] 0.0, 128
        %576 = vxpose.xlu0.b32.cont [8/16] 0.0, 128
        %577 = vxpose.xlu0.b32.cont [9/16] 0.0, 128
        %578 = vxpose.xlu0.b32.cont [10/16] 0.0, 128
        %579 = vxpose.xlu0.b32.cont [11/16] 0.0, 128
        %580 = vxpose.xlu0.b32.cont [12/16] 0.0, 128
        %581 = vxpose.xlu0.b32.cont [13/16] 0.0, 128
        %582 = vxpose.xlu0.b32.cont [14/16] 0.0, 128
        %583 = vxpose.xlu0.b32.cont [15/16] 0.0, 128
        %584 = vxpose.xlu0.b32.end [16/16] 0.0, 128
        %v585 = vpop.trf.xlu0
        %v586 = vpop.trf.xlu0
        %v587 = vpop.trf.xlu0
        %v588 = vpop.trf.xlu0
        %v589 = vpop.trf.xlu0
        %v590 = vpop.trf.xlu0
        %v591 = vpop.trf.xlu0
        %v592 = vpop.trf.xlu0
        %v593 = vpop.trf.xlu0
        %v594 = vpop.trf.xlu0
        %v595 = vpop.trf.xlu0
        %v596 = vpop.trf.xlu0
        %v597 = vpop.trf.xlu0
        %v598 = vpop.trf.xlu0
        %v599 = vpop.trf.xlu0
        %v600 = vpop.trf.xlu0
        %v601 = vpack.c.bf16 %v586, %v585
        %v602 = vpack.c.bf16 %v588, %v587
        %v603 = vpack.c.bf16 %v530, %v530
        %vm604 = vcmask 64512
        %v606 = vsel %vm604, %v568, 0
        %vm608 = vcmask 1043456
        %v610 = vsel %vm608, %v601, 0
        %612 = vmatprep.subr.bf16.mxu0 0
        %613 = vmatpush1.bf16.msra.mxu0 %v610
        %614 = vmatprep.subr.bf16.mxu0 0
        %615 = vmatpush1.bf16.msra.mxu0 0
        %616 = vmatprep.subr.bf16.mxu0 0
        %617 = vmatpush1.bf16.msra.mxu0 0
        %618 = vmatprep.subr.bf16.mxu0 0
        %619 = vmatpush1.bf16.msra.mxu0 0
        %620 = vmatprep.subr.bf16.mxu0 0
        %621 = vmatpush1.bf16.msra.mxu0 0
        %622 = vmatprep.subr.bf16.mxu0 0
        %623 = vmatpush1.bf16.msra.mxu0 0
        %624 = vmatprep.subr.bf16.mxu0 0
        %625 = vmatpush1.bf16.msra.mxu0 0
        %626 = vmatprep.subr.bf16.mxu0 0
        %627 = vmatpush1.bf16.msra.mxu0 0
        %628 = vmatprep.subr.bf16.mxu0 0
        %629 = vmatpush1.bf16.msra.mxu0 0
        %630 = vmatprep.subr.bf16.mxu0 0
        %631 = vmatpush1.bf16.msra.mxu0 0
        %632 = vmatprep.subr.bf16.mxu0 0
        %633 = vmatpush1.bf16.msra.mxu0 0
        %634 = vmatprep.subr.bf16.mxu0 0
        %635 = vmatpush1.bf16.msra.mxu0 0
        %636 = vmatprep.subr.bf16.mxu0 0
        %637 = vmatpush1.bf16.msra.mxu0 0
        %638 = vmatprep.subr.bf16.mxu0 0
        %639 = vmatpush1.bf16.msra.mxu0 0
        %640 = vmatprep.subr.bf16.mxu0 0
        %641 = vmatpush1.bf16.msra.mxu0 0
        %642 = vmatprep.subr.bf16.mxu0 0
        %643 = vmatpush1.bf16.msra.mxu0 0
        %644 = vmatprep.mubr.bf16.mxu0 0
        %645 = vmatmul.mubr.bf16.gmra.mrb[0].mxu0 %v606
        %v646 = vpop.f32.mrb[0].mxu0
        %v647 = vadd.f32 0.0, %v646
        %v648 = vpop.f32.mrb[0].mxu0
        %v649 = vpop.f32.mrb[0].mxu0
        %v650 = vadd.f32 0.0, %v649
        %v651 = vpop.f32.mrb[0].mxu0
        %652 = vdwg.mxu0
        %s653 = sld [smem:[#allocation7]]
        %v654 = vstv %s653
        %v655 = vmul.f32 %v647, %v654
        %v656 = vmul.f32 %v650, %v654
        %s657 = sld [smem:[#allocation7 + $0x4]]
        %v658 = vstv %s657
        %v659 = vmul.f32 %v552, %v658
        %v660 = vmul.f32 %v553, %v658
        %v661 = vadd.f32 %v655, %v659
        %v662 = vadd.f32 %v656, %v660
        %s663 = sld [smem:[#allocation7 + $0x8]]
        %v664 = vstv %s663
        %v665 = vadd.f32 %v661, %v664
        %v666 = vadd.f32 %v662, %v664
        %v667 = vmax.f32 %v665, 0.0
        %v668 = vmax.f32 %v666, 0.0
        %s669 = sld [smem:[#allocation7 + $0xc]]
        %v670 = vstv %s669
        %v671 = vmul.f32 %v667, %v670
        %v672 = vmul.f32 %v668, %v670
        %v673 = vadd.f32 %v671, 0.0
        %v674 = vadd.f32 %v672, 0.0
        %s675 = sld [smem:[#allocation7 + $0x1]]
        %v676 = vstv %s675
        %v677 = vmul.f32 %v647, %v676
        %v678 = vmul.f32 %v650, %v676
        %s679 = sld [smem:[#allocation7 + $0x5]]
        %v680 = vstv %s679
        %v681 = vmul.f32 %v552, %v680
        %v682 = vmul.f32 %v553, %v680
        %v683 = vadd.f32 %v677, %v681
        %v684 = vadd.f32 %v678, %v682
        %s685 = sld [smem:[#allocation7 + $0x9]]
        %v686 = vstv %s685
        %v687 = vadd.f32 %v683, %v686
        %v688 = vadd.f32 %v684, %v686
        %v689 = vmax.f32 %v687, 0.0
        %v690 = vmax.f32 %v688, 0.0
        %s691 = sld [smem:[#allocation7 + $0xd]]
        %v692 = vstv %s691
        %v693 = vmul.f32 %v689, %v692
        %v694 = vmul.f32 %v690, %v692
        %v695 = vadd.f32 %v673, %v693
        %v696 = vadd.f32 %v674, %v694
        %s697 = sld [smem:[#allocation7 + $0x2]]
        %v698 = vstv %s697
        %v699 = vmul.f32 %v647, %v698
        %v700 = vmul.f32 %v650, %v698
        %s701 = sld [smem:[#allocation7 + $0x6]]
        %v702 = vstv %s701
        %v703 = vmul.f32 %v552, %v702
        %v704 = vmul.f32 %v553, %v702
        %v705 = vadd.f32 %v699, %v703
        %v706 = vadd.f32 %v700, %v704
        %s707 = sld [smem:[#allocation7 + $0xa]]
        %v708 = vstv %s707
        %v709 = vadd.f32 %v705, %v708
        %v710 = vadd.f32 %v706, %v708
        %v711 = vmax.f32 %v709, 0.0
        %v712 = vmax.f32 %v710, 0.0
        %s713 = sld [smem:[#allocation7 + $0xe]]
        %v714 = vstv %s713
        %v715 = vmul.f32 %v711, %v714
        %v716 = vmul.f32 %v712, %v714
        %v717 = vadd.f32 %v695, %v715
        %v718 = vadd.f32 %v696, %v716
        %s719 = sld [smem:[#allocation7 + $0x3]]
        %v720 = vstv %s719
        %v721 = vmul.f32 %v647, %v720
        %v722 = vmul.f32 %v650, %v720
        %s723 = sld [smem:[#allocation7 + $0x7]]
        %v724 = vstv %s723
        %v725 = vmul.f32 %v552, %v724
        %v726 = vmul.f32 %v553, %v724
        %v727 = vadd.f32 %v721, %v725
        %v728 = vadd.f32 %v722, %v726
        %s729 = sld [smem:[#allocation7 + $0xb]]
        %v730 = vstv %s729
        %v731 = vadd.f32 %v727, %v730
        %v732 = vadd.f32 %v728, %v730
        %v733 = vmax.f32 %v731, 0.0
        %v734 = vmax.f32 %v732, 0.0
        %s735 = sld [smem:[#allocation7 + $0xf]]
        %v736 = vstv %s735
        %v737 = vmul.f32 %v733, %v736
        %v738 = vmul.f32 %v734, %v736
        %v739 = vadd.f32 %v717, %v737
        %v740 = vadd.f32 %v718, %v738
        %v741 = vsel %vm604, %v739, -inf
        %742 = vmax.xlane.f32.xlu0 %v741
        %v743 = vpop.xlane.xlu0 %742
        %v744 = vsel %vm604, %v740, -inf
        %745 = vmax.xlane.f32.xlu0 %v744
        %v746 = vpop.xlane.xlu0 %745
        %v747 = vsub.f32 %v739, %v743
        %v748 = vsub.f32 %v740, %v746
        %v749 = vmul.f32 %v747, 1.442695
        %v750 = vpow.pop %v749
        %v751 = vmul.f32 %v748, 1.442695
        %v752 = vpow.pop %v751
        %v753 = vsel %vm604, %v750, 0.0
        %754 = vadd.xlane.f32.xlu0 %v753
        %v755 = vpop.xlane.xlu0 %754
        %v756 = vsel %vm604, %v752, 0.0
        %757 = vadd.xlane.f32.xlu0 %v756
        %v758 = vpop.xlane.xlu0 %757
        %v759 = vrcp.pop %v755
        %v760 = vrcp.pop %v758
        %v761 = vmul.f32 %v755, %v759
        %v762 = vmul.f32 %v758, %v760
        %v763 = vsub.f32 2.0, %v761
        %v764 = vsub.f32 2.0, %v762
        %v765 = vmul.f32 %v759, %v763
        %v766 = vmul.f32 %v760, %v764
        %v767 = vmul.f32 %v750, %v765
        %v768 = vmul.f32 %v752, %v766
        %v769 = vpack.c.bf16 %v768, %v767
        %771 = vrot.lane.b32.xlu0 %v603, 96
        %v772 = vpop.permute.xlu0 %771
        %v774 = vsel %vm604, %v769, 0
        %v777 = vsel %vm608, %v772, 0
        %779 = vmatprep.subr.bf16.mxu0 0
        %780 = vmatpush1.bf16.msra.mxu0 %v777
        %781 = vmatprep.subr.bf16.mxu0 0
        %782 = vmatpush1.bf16.msra.mxu0 0
        %783 = vmatprep.subr.bf16.mxu0 0
        %784 = vmatpush1.bf16.msra.mxu0 0
        %785 = vmatprep.subr.bf16.mxu0 0
        %786 = vmatpush1.bf16.msra.mxu0 0
        %787 = vmatprep.subr.bf16.mxu0 0
        %788 = vmatpush1.bf16.msra.mxu0 0
        %789 = vmatprep.subr.bf16.mxu0 0
        %790 = vmatpush1.bf16.msra.mxu0 0
        %791 = vmatprep.subr.bf16.mxu0 0
        %792 = vmatpush1.bf16.msra.mxu0 0
        %793 = vmatprep.subr.bf16.mxu0 0
        %794 = vmatpush1.bf16.msra.mxu0 0
        %795 = vmatprep.subr.bf16.mxu0 0
        %796 = vmatpush1.bf16.msra.mxu0 0
        %797 = vmatprep.subr.bf16.mxu0 0
        %798 = vmatpush1.bf16.msra.mxu0 0
        %799 = vmatprep.subr.bf16.mxu0 0
        %800 = vmatpush1.bf16.msra.mxu0 0
        %801 = vmatprep.subr.bf16.mxu0 0
        %802 = vmatpush1.bf16.msra.mxu0 0
        %803 = vmatprep.subr.bf16.mxu0 0
        %804 = vmatpush1.bf16.msra.mxu0 0
        %805 = vmatprep.subr.bf16.mxu0 0
        %806 = vmatpush1.bf16.msra.mxu0 0
        %807 = vmatprep.subr.bf16.mxu0 0
        %808 = vmatpush1.bf16.msra.mxu0 0
        %809 = vmatprep.subr.bf16.mxu0 0
        %810 = vmatpush1.bf16.msra.mxu0 0
        %811 = vmatprep.mubr.bf16.mxu0 0
        %812 = vmatmul.mubr.bf16.gmra.mrb[0].mxu0 %v774
        %v813 = vpop.f32.mrb[0].mxu0
        %v814 = vadd.f32 0.0, %v813
        %v815 = vpop.f32.mrb[0].mxu0
        %v816 = vpop.f32.mrb[0].mxu0
        %v817 = vadd.f32 0.0, %v816
        %v818 = vpop.f32.mrb[0].mxu0
        %819 = vdwg.mxu0
        %820 = vst.msk [vmem:[#allocation2] sm:$0xff] %vm604, %v814
        %821 = vst.msk [vmem:[#allocation2 + $0x8] sm:$0xff] %vm604, %v817
        %823 = vrot.lane.b32.xlu0 %v568, 120
        %v824 = vpop.permute.xlu0 %823
        %v826 = vrot.slane %v601, 4
        %v828 = vsel %vm604, %v824, 0
        %v831 = vsel %vm608, %v826, 0
        %833 = vmatprep.subr.bf16.mxu0 0
        %834 = vmatpush1.bf16.msra.mxu0 %v831
        %835 = vmatprep.subr.bf16.mxu0 0
        %836 = vmatpush1.bf16.msra.mxu0 0
        %837 = vmatprep.subr.bf16.mxu0 0
        %838 = vmatpush1.bf16.msra.mxu0 0
        %839 = vmatprep.subr.bf16.mxu0 0
        %840 = vmatpush1.bf16.msra.mxu0 0
        %841 = vmatprep.subr.bf16.mxu0 0
        %842 = vmatpush1.bf16.msra.mxu0 0
        %843 = vmatprep.subr.bf16.mxu0 0
        %844 = vmatpush1.bf16.msra.mxu0 0
        %845 = vmatprep.subr.bf16.mxu0 0
        %846 = vmatpush1.bf16.msra.mxu0 0
        %847 = vmatprep.subr.bf16.mxu0 0
        %848 = vmatpush1.bf16.msra.mxu0 0
        %849 = vmatprep.subr.bf16.mxu0 0
        %850 = vmatpush1.bf16.msra.mxu0 0
        %851 = vmatprep.subr.bf16.mxu0 0
        %852 = vmatpush1.bf16.msra.mxu0 0
        %853 = vmatprep.subr.bf16.mxu0 0
        %854 = vmatpush1.bf16.msra.mxu0 0
        %855 = vmatprep.subr.bf16.mxu0 0
        %856 = vmatpush1.bf16.msra.mxu0 0
        %857 = vmatprep.subr.bf16.mxu0 0
        %858 = vmatpush1.bf16.msra.mxu0 0
        %859 = vmatprep.subr.bf16.mxu0 0
        %860 = vmatpush1.bf16.msra.mxu0 0
        %861 = vmatprep.subr.bf16.mxu0 0
        %862 = vmatpush1.bf16.msra.mxu0 0
        %863 = vmatprep.subr.bf16.mxu0 0
        %864 = vmatpush1.bf16.msra.mxu0 0
        %865 = vmatprep.mubr.bf16.mxu0 0
        %866 = vmatmul.mubr.bf16.gmra.mrb[0].mxu0 %v828
        %v867 = vpop.f32.mrb[0].mxu0
        %v868 = vadd.f32 0.0, %v867
        %v869 = vpop.f32.mrb[0].mxu0
        %v870 = vpop.f32.mrb[0].mxu0
        %v871 = vadd.f32 0.0, %v870
        %v872 = vpop.f32.mrb[0].mxu0
        %873 = vdwg.mxu0
        %s874 = sld [smem:[#allocation7 + $0x80]]
        %v875 = vstv %s874
        %v876 = vmul.f32 %v868, %v875
        %v877 = vmul.f32 %v871, %v875
        %s878 = sld [smem:[#allocation7 + $0x84]]
        %v879 = vstv %s878
        %v880 = vmul.f32 %v552, %v879
        %v881 = vmul.f32 %v553, %v879
        %v882 = vadd.f32 %v876, %v880
        %v883 = vadd.f32 %v877, %v881
        %s884 = sld [smem:[#allocation7 + $0x88]]
        %v885 = vstv %s884
        %v886 = vadd.f32 %v882, %v885
        %v887 = vadd.f32 %v883, %v885
        %v888 = vmax.f32 %v886, 0.0
        %v889 = vmax.f32 %v887, 0.0
        %s890 = sld [smem:[#allocation7 + $0x8c]]
        %v891 = vstv %s890
        %v892 = vmul.f32 %v888, %v891
        %v893 = vmul.f32 %v889, %v891
        %v894 = vadd.f32 %v892, 0.0
        %v895 = vadd.f32 %v893, 0.0
        %s896 = sld [smem:[#allocation7 + $0x81]]
        %v897 = vstv %s896
        %v898 = vmul.f32 %v868, %v897
        %v899 = vmul.f32 %v871, %v897
        %s900 = sld [smem:[#allocation7 + $0x85]]
        %v901 = vstv %s900
        %v902 = vmul.f32 %v552, %v901
        %v903 = vmul.f32 %v553, %v901
        %v904 = vadd.f32 %v898, %v902
        %v905 = vadd.f32 %v899, %v903
        %s906 = sld [smem:[#allocation7 + $0x89]]
        %v907 = vstv %s906
        %v908 = vadd.f32 %v904, %v907
        %v909 = vadd.f32 %v905, %v907
        %v910 = vmax.f32 %v908, 0.0
        %v911 = vmax.f32 %v909, 0.0
        %s912 = sld [smem:[#allocation7 + $0x8d]]
        %v913 = vstv %s912
        %v914 = vmul.f32 %v910, %v913
        %v915 = vmul.f32 %v911, %v913
        %v916 = vadd.f32 %v894, %v914
        %v917 = vadd.f32 %v895, %v915
        %s918 = sld [smem:[#allocation7 + $0x82]]
        %v919 = vstv %s918
        %v920 = vmul.f32 %v868, %v919
        %v921 = vmul.f32 %v871, %v919
        %s922 = sld [smem:[#allocation7 + $0x86]]
        %v923 = vstv %s922
        %v924 = vmul.f32 %v552, %v923
        %v925 = vmul.f32 %v553, %v923
        %v926 = vadd.f32 %v920, %v924
        %v927 = vadd.f32 %v921, %v925
        %s928 = sld [smem:[#allocation7 + $0x8a]]
        %v929 = vstv %s928
        %v930 = vadd.f32 %v926, %v929
        %v931 = vadd.f32 %v927, %v929
        %v932 = vmax.f32 %v930, 0.0
        %v933 = vmax.f32 %v931, 0.0
        %s934 = sld [smem:[#allocation7 + $0x8e]]
        %v935 = vstv %s934
        %v936 = vmul.f32 %v932, %v935
        %v937 = vmul.f32 %v933, %v935
        %v938 = vadd.f32 %v916, %v936
        %v939 = vadd.f32 %v917, %v937
        %s940 = sld [smem:[#allocation7 + $0x83]]
        %v941 = vstv %s940
        %v942 = vmul.f32 %v868, %v941
        %v943 = vmul.f32 %v871, %v941
        %s944 = sld [smem:[#allocation7 + $0x87]]
        %v945 = vstv %s944
        %v946 = vmul.f32 %v552, %v945
        %v947 = vmul.f32 %v553, %v945
        %v948 = vadd.f32 %v942, %v946
        %v949 = vadd.f32 %v943, %v947
        %s950 = sld [smem:[#allocation7 + $0x8b]]
        %v951 = vstv %s950
        %v952 = vadd.f32 %v948, %v951
        %v953 = vadd.f32 %v949, %v951
        %v954 = vmax.f32 %v952, 0.0
        %v955 = vmax.f32 %v953, 0.0
        %s956 = sld [smem:[#allocation7 + $0x8f]]
        %v957 = vstv %s956
        %v958 = vmul.f32 %v954, %v957
        %v959 = vmul.f32 %v955, %v957
        %v960 = vadd.f32 %v938, %v958
        %v961 = vadd.f32 %v939, %v959
        %v962 = vsel %vm604, %v960, -inf
        %963 = vmax.xlane.f32.xlu0 %v962
        %v964 = vpop.xlane.xlu0 %963
        %v965 = vsel %vm604, %v961, -inf
        %966 = vmax.xlane.f32.xlu0 %v965
        %v967 = vpop.xlane.xlu0 %966
        %v968 = vsub.f32 %v960, %v964
        %v969 = vsub.f32 %v961, %v967
        %v970 = vmul.f32 %v968, 1.442695
        %v971 = vpow.pop %v970
        %v972 = vmul.f32 %v969, 1.442695
        %v973 = vpow.pop %v972
        %v974 = vsel %vm604, %v971, 0.0
        %975 = vadd.xlane.f32.xlu0 %v974
        %v976 = vpop.xlane.xlu0 %975
        %v977 = vsel %vm604, %v973, 0.0
        %978 = vadd.xlane.f32.xlu0 %v977
        %v979 = vpop.xlane.xlu0 %978
        %v980 = vrcp.pop %v976
        %v981 = vrcp.pop %v979
        %v982 = vmul.f32 %v976, %v980
        %v983 = vmul.f32 %v979, %v981
        %v984 = vsub.f32 2.0, %v982
        %v985 = vsub.f32 2.0, %v983
        %v986 = vmul.f32 %v980, %v984
        %v987 = vmul.f32 %v981, %v985
        %v988 = vmul.f32 %v971, %v986
        %v989 = vmul.f32 %v973, %v987
        %v990 = vpack.c.bf16 %v989, %v988
        %991 = vrot.lane.b32.xlu0 %v603, 88
        %v992 = vpop.permute.xlu0 %991
        %v994 = vsel %vm604, %v990, 0
        %v997 = vsel %vm608, %v992, 0
        %999 = vmatprep.subr.bf16.mxu0 0
        %1000 = vmatpush1.bf16.msra.mxu0 %v997
        %1001 = vmatprep.subr.bf16.mxu0 0
        %1002 = vmatpush1.bf16.msra.mxu0 0
        %1003 = vmatprep.subr.bf16.mxu0 0
        %1004 = vmatpush1.bf16.msra.mxu0 0
        %1005 = vmatprep.subr.bf16.mxu0 0
        %1006 = vmatpush1.bf16.msra.mxu0 0
        %1007 = vmatprep.subr.bf16.mxu0 0
        %1008 = vmatpush1.bf16.msra.mxu0 0
        %1009 = vmatprep.subr.bf16.mxu0 0
        %1010 = vmatpush1.bf16.msra.mxu0 0
        %1011 = vmatprep.subr.bf16.mxu0 0
        %1012 = vmatpush1.bf16.msra.mxu0 0
        %1013 = vmatprep.subr.bf16.mxu0 0
        %1014 = vmatpush1.bf16.msra.mxu0 0
        %1015 = vmatprep.subr.bf16.mxu0 0
        %1016 = vmatpush1.bf16.msra.mxu0 0
        %1017 = vmatprep.subr.bf16.mxu0 0
        %1018 = vmatpush1.bf16.msra.mxu0 0
        %1019 = vmatprep.subr.bf16.mxu0 0
        %1020 = vmatpush1.bf16.msra.mxu0 0
        %1021 = vmatprep.subr.bf16.mxu0 0
        %1022 = vmatpush1.bf16.msra.mxu0 0
        %1023 = vmatprep.subr.bf16.mxu0 0
        %1024 = vmatpush1.bf16.msra.mxu0 0
        %1025 = vmatprep.subr.bf16.mxu0 0
        %1026 = vmatpush1.bf16.msra.mxu0 0
        %1027 = vmatprep.subr.bf16.mxu0 0
        %1028 = vmatpush1.bf16.msra.mxu0 0
        %1029 = vmatprep.subr.bf16.mxu0 0
        %1030 = vmatpush1.bf16.msra.mxu0 0
        %1031 = vmatprep.mubr.bf16.mxu0 0
        %1032 = vmatmul.mubr.bf16.gmra.mrb[0].mxu0 %v994
        %v1033 = vpop.f32.mrb[0].mxu0
        %v1034 = vadd.f32 0.0, %v1033
        %v1035 = vpop.f32.mrb[0].mxu0
        %v1036 = vpop.f32.mrb[0].mxu0
        %v1037 = vadd.f32 0.0, %v1036
        %v1038 = vpop.f32.mrb[0].mxu0
        %1039 = vdwg.mxu0
        %1042 = vrot.lane.b32.xlu0 %v1034, 8
        %v1043 = vpop.permute.xlu0 %1042
        %1044 = vrot.lane.b32.xlu0 %v1037, 8
        %v1045 = vpop.permute.xlu0 %1044
        %vm1048 = vcmask 130112
        %1049 = vst.msk [vmem:[#allocation2] sm:$0xff] %vm1048, %v1043
        %1050 = vst.msk [vmem:[#allocation2 + $0x8] sm:$0xff] %vm1048, %v1045
        %1051 = vrot.lane.b32.xlu0 %v568, 112
        %v1052 = vpop.permute.xlu0 %1051
        %v1054 = vsel %vm604, %v1052, 0
        %v1057 = vsel %vm608, %v602, 0
        %1059 = vmatprep.subr.bf16.mxu0 0
        %1060 = vmatpush1.bf16.msra.mxu0 %v1057
        %1061 = vmatprep.subr.bf16.mxu0 0
        %1062 = vmatpush1.bf16.msra.mxu0 0
        %1063 = vmatprep.subr.bf16.mxu0 0
        %1064 = vmatpush1.bf16.msra.mxu0 0
        %1065 = vmatprep.subr.bf16.mxu0 0
        %1066 = vmatpush1.bf16.msra.mxu0 0
        %1067 = vmatprep.subr.bf16.mxu0 0
        %1068 = vmatpush1.bf16.msra.mxu0 0
        %1069 = vmatprep.subr.bf16.mxu0 0
        %1070 = vmatpush1.bf16.msra.mxu0 0
        %1071 = vmatprep.subr.bf16.mxu0 0
        %1072 = vmatpush1.bf16.msra.mxu0 0
        %1073 = vmatprep.subr.bf16.mxu0 0
        %1074 = vmatpush1.bf16.msra.mxu0 0
        %1075 = vmatprep.subr.bf16.mxu0 0
        %1076 = vmatpush1.bf16.msra.mxu0 0
        %1077 = vmatprep.subr.bf16.mxu0 0
        %1078 = vmatpush1.bf16.msra.mxu0 0
        %1079 = vmatprep.subr.bf16.mxu0 0
        %1080 = vmatpush1.bf16.msra.mxu0 0
        %1081 = vmatprep.subr.bf16.mxu0 0
        %1082 = vmatpush1.bf16.msra.mxu0 0
        %1083 = vmatprep.subr.bf16.mxu0 0
        %1084 = vmatpush1.bf16.msra.mxu0 0
        %1085 = vmatprep.subr.bf16.mxu0 0
        %1086 = vmatpush1.bf16.msra.mxu0 0
        %1087 = vmatprep.subr.bf16.mxu0 0
        %1088 = vmatpush1.bf16.msra.mxu0 0
        %1089 = vmatprep.subr.bf16.mxu0 0
        %1090 = vmatpush1.bf16.msra.mxu0 0
        %1091 = vmatprep.mubr.bf16.mxu0 0
        %1092 = vmatmul.mubr.bf16.gmra.mrb[0].mxu0 %v1054
        %v1093 = vpop.f32.mrb[0].mxu0
        %v1094 = vadd.f32 0.0, %v1093
        %v1095 = vpop.f32.mrb[0].mxu0
        %v1096 = vpop.f32.mrb[0].mxu0
        %v1097 = vadd.f32 0.0, %v1096
        %v1098 = vpop.f32.mrb[0].mxu0
        %1099 = vdwg.mxu0
        %s1100 = sld [smem:[#allocation7 + $0x100]]
        %v1101 = vstv %s1100
        %v1102 = vmul.f32 %v1094, %v1101
        %v1103 = vmul.f32 %v1097, %v1101
        %s1104 = sld [smem:[#allocation7 + $0x104]]
        %v1105 = vstv %s1104
        %v1106 = vmul.f32 %v552, %v1105
        %v1107 = vmul.f32 %v553, %v1105
        %v1108 = vadd.f32 %v1102, %v1106
        %v1109 = vadd.f32 %v1103, %v1107
        %s1110 = sld [smem:[#allocation7 + $0x108]]
        %v1111 = vstv %s1110
        %v1112 = vadd.f32 %v1108, %v1111
        %v1113 = vadd.f32 %v1109, %v1111
        %v1114 = vmax.f32 %v1112, 0.0
        %v1115 = vmax.f32 %v1113, 0.0
        %s1116 = sld [smem:[#allocation7 + $0x10c]]
        %v1117 = vstv %s1116
        %v1118 = vmul.f32 %v1114, %v1117
        %v1119 = vmul.f32 %v1115, %v1117
        %v1120 = vadd.f32 %v1118, 0.0
        %v1121 = vadd.f32 %v1119, 0.0
        %s1122 = sld [smem:[#allocation7 + $0x101]]
        %v1123 = vstv %s1122
        %v1124 = vmul.f32 %v1094, %v1123
        %v1125 = vmul.f32 %v1097, %v1123
        %s1126 = sld [smem:[#allocation7 + $0x105]]
        %v1127 = vstv %s1126
        %v1128 = vmul.f32 %v552, %v1127
        %v1129 = vmul.f32 %v553, %v1127
        %v1130 = vadd.f32 %v1124, %v1128
        %v1131 = vadd.f32 %v1125, %v1129
        %s1132 = sld [smem:[#allocation7 + $0x109]]
        %v1133 = vstv %s1132
        %v1134 = vadd.f32 %v1130, %v1133
        %v1135 = vadd.f32 %v1131, %v1133
        %v1136 = vmax.f32 %v1134, 0.0
        %v1137 = vmax.f32 %v1135, 0.0
        %s1138 = sld [smem:[#allocation7 + $0x10d]]
        %v1139 = vstv %s1138
        %v1140 = vmul.f32 %v1136, %v1139
        %v1141 = vmul.f32 %v1137, %v1139
        %v1142 = vadd.f32 %v1120, %v1140
        %v1143 = vadd.f32 %v1121, %v1141
        %s1144 = sld [smem:[#allocation7 + $0x102]]
        %v1145 = vstv %s1144
        %v1146 = vmul.f32 %v1094, %v1145
        %v1147 = vmul.f32 %v1097, %v1145
        %s1148 = sld [smem:[#allocation7 + $0x106]]
        %v1149 = vstv %s1148
        %v1150 = vmul.f32 %v552, %v1149
        %v1151 = vmul.f32 %v553, %v1149
        %v1152 = vadd.f32 %v1146, %v1150
        %v1153 = vadd.f32 %v1147, %v1151
        %s1154 = sld [smem:[#allocation7 + $0x10a]]
        %v1155 = vstv %s1154
        %v1156 = vadd.f32 %v1152, %v1155
        %v1157 = vadd.f32 %v1153, %v1155
        %v1158 = vmax.f32 %v1156, 0.0
        %v1159 = vmax.f32 %v1157, 0.0
        %s1160 = sld [smem:[#allocation7 + $0x10e]]
        %v1161 = vstv %s1160
        %v1162 = vmul.f32 %v1158, %v1161
        %v1163 = vmul.f32 %v1159, %v1161
        %v1164 = vadd.f32 %v1142, %v1162
        %v1165 = vadd.f32 %v1143, %v1163
        %s1166 = sld [smem:[#allocation7 + $0x103]]
        %v1167 = vstv %s1166
        %v1168 = vmul.f32 %v1094, %v1167
        %v1169 = vmul.f32 %v1097, %v1167
        %s1170 = sld [smem:[#allocation7 + $0x107]]
        %v1171 = vstv %s1170
        %v1172 = vmul.f32 %v552, %v1171
        %v1173 = vmul.f32 %v553, %v1171
        %v1174 = vadd.f32 %v1168, %v1172
        %v1175 = vadd.f32 %v1169, %v1173
        %s1176 = sld [smem:[#allocation7 + $0x10b]]
        %v1177 = vstv %s1176
        %v1178 = vadd.f32 %v1174, %v1177
        %v1179 = vadd.f32 %v1175, %v1177
        %v1180 = vmax.f32 %v1178, 0.0
        %v1181 = vmax.f32 %v1179, 0.0
        %s1182 = sld [smem:[#allocation7 + $0x10f]]
        %v1183 = vstv %s1182
        %v1184 = vmul.f32 %v1180, %v1183
        %v1185 = vmul.f32 %v1181, %v1183
        %v1186 = vadd.f32 %v1164, %v1184
        %v1187 = vadd.f32 %v1165, %v1185
        %v1188 = vsel %vm604, %v1186, -inf
        %1189 = vmax.xlane.f32.xlu0 %v1188
        %v1190 = vpop.xlane.xlu0 %1189
        %v1191 = vsel %vm604, %v1187, -inf
        %1192 = vmax.xlane.f32.xlu0 %v1191
        %v1193 = vpop.xlane.xlu0 %1192
        %v1194 = vsub.f32 %v1186, %v1190
        %v1195 = vsub.f32 %v1187, %v1193
        %v1196 = vmul.f32 %v1194, 1.442695
        %v1197 = vpow.pop %v1196
        %v1198 = vmul.f32 %v1195, 1.442695
        %v1199 = vpow.pop %v1198
        %v1200 = vsel %vm604, %v1197, 0.0
        %1201 = vadd.xlane.f32.xlu0 %v1200
        %v1202 = vpop.xlane.xlu0 %1201
        %v1203 = vsel %vm604, %v1199, 0.0
        %1204 = vadd.xlane.f32.xlu0 %v1203
        %v1205 = vpop.xlane.xlu0 %1204
        %v1206 = vrcp.pop %v1202
        %v1207 = vrcp.pop %v1205
        %v1208 = vmul.f32 %v1202, %v1206
        %v1209 = vmul.f32 %v1205, %v1207
        %v1210 = vsub.f32 2.0, %v1208
        %v1211 = vsub.f32 2.0, %v1209
        %v1212 = vmul.f32 %v1206, %v1210
        %v1213 = vmul.f32 %v1207, %v1211
        %v1214 = vmul.f32 %v1197, %v1212
        %v1215 = vmul.f32 %v1199, %v1213
        %v1216 = vpack.c.bf16 %v1215, %v1214
        %1217 = vrot.lane.b32.xlu0 %v603, 80
        %v1218 = vpop.permute.xlu0 %1217
        %v1220 = vsel %vm604, %v1216, 0
        %v1223 = vsel %vm608, %v1218, 0
        %1225 = vmatprep.subr.bf16.mxu0 0
        %1226 = vmatpush1.bf16.msra.mxu0 %v1223
        %1227 = vmatprep.subr.bf16.mxu0 0
        %1228 = vmatpush1.bf16.msra.mxu0 0
        %1229 = vmatprep.subr.bf16.mxu0 0
        %1230 = vmatpush1.bf16.msra.mxu0 0
        %1231 = vmatprep.subr.bf16.mxu0 0
        %1232 = vmatpush1.bf16.msra.mxu0 0
        %1233 = vmatprep.subr.bf16.mxu0 0
        %1234 = vmatpush1.bf16.msra.mxu0 0
        %1235 = vmatprep.subr.bf16.mxu0 0
        %1236 = vmatpush1.bf16.msra.mxu0 0
        %1237 = vmatprep.subr.bf16.mxu0 0
        %1238 = vmatpush1.bf16.msra.mxu0 0
        %1239 = vmatprep.subr.bf16.mxu0 0
        %1240 = vmatpush1.bf16.msra.mxu0 0
        %1241 = vmatprep.subr.bf16.mxu0 0
        %1242 = vmatpush1.bf16.msra.mxu0 0
        %1243 = vmatprep.subr.bf16.mxu0 0
        %1244 = vmatpush1.bf16.msra.mxu0 0
        %1245 = vmatprep.subr.bf16.mxu0 0
        %1246 = vmatpush1.bf16.msra.mxu0 0
        %1247 = vmatprep.subr.bf16.mxu0 0
        %1248 = vmatpush1.bf16.msra.mxu0 0
        %1249 = vmatprep.subr.bf16.mxu0 0
        %1250 = vmatpush1.bf16.msra.mxu0 0
        %1251 = vmatprep.subr.bf16.mxu0 0
        %1252 = vmatpush1.bf16.msra.mxu0 0
        %1253 = vmatprep.subr.bf16.mxu0 0
        %1254 = vmatpush1.bf16.msra.mxu0 0
        %1255 = vmatprep.subr.bf16.mxu0 0
        %1256 = vmatpush1.bf16.msra.mxu0 0
        %1257 = vmatprep.mubr.bf16.mxu0 0
        %1258 = vmatmul.mubr.bf16.gmra.mrb[0].mxu0 %v1220
        %v1259 = vpop.f32.mrb[0].mxu0
        %v1260 = vadd.f32 0.0, %v1259
        %v1261 = vpop.f32.mrb[0].mxu0
        %v1262 = vpop.f32.mrb[0].mxu0
        %v1263 = vadd.f32 0.0, %v1262
        %v1264 = vpop.f32.mrb[0].mxu0
        %1265 = vdwg.mxu0
        %1268 = vrot.lane.b32.xlu0 %v1260, 16
        %v1269 = vpop.permute.xlu0 %1268
        %1270 = vrot.lane.b32.xlu0 %v1263, 16
        %v1271 = vpop.permute.xlu0 %1270
        %vm1274 = vcmask 195712
        %1275 = vst.msk [vmem:[#allocation2] sm:$0xff] %vm1274, %v1269
        %1276 = vst.msk [vmem:[#allocation2 + $0x8] sm:$0xff] %vm1274, %v1271
        %1277 = vrot.lane.b32.xlu0 %v568, 104
        %v1278 = vpop.permute.xlu0 %1277
        %v1280 = vrot.slane %v602, 4
        %v1282 = vsel %vm604, %v1278, 0
        %v1285 = vsel %vm608, %v1280, 0
        %1287 = vmatprep.subr.bf16.mxu0 0
        %1288 = vmatpush1.bf16.msra.mxu0 %v1285
        %1289 = vmatprep.subr.bf16.mxu0 0
        %1290 = vmatpush1.bf16.msra.mxu0 0
        %1291 = vmatprep.subr.bf16.mxu0 0
        %1292 = vmatpush1.bf16.msra.mxu0 0
        %1293 = vmatprep.subr.bf16.mxu0 0
        %1294 = vmatpush1.bf16.msra.mxu0 0
        %1295 = vmatprep.subr.bf16.mxu0 0
        %1296 = vmatpush1.bf16.msra.mxu0 0
        %1297 = vmatprep.subr.bf16.mxu0 0
        %1298 = vmatpush1.bf16.msra.mxu0 0
        %1299 = vmatprep.subr.bf16.mxu0 0
        %1300 = vmatpush1.bf16.msra.mxu0 0
        %1301 = vmatprep.subr.bf16.mxu0 0
        %1302 = vmatpush1.bf16.msra.mxu0 0
        %1303 = vmatprep.subr.bf16.mxu0 0
        %1304 = vmatpush1.bf16.msra.mxu0 0
        %1305 = vmatprep.subr.bf16.mxu0 0
        %1306 = vmatpush1.bf16.msra.mxu0 0
        %1307 = vmatprep.subr.bf16.mxu0 0
        %1308 = vmatpush1.bf16.msra.mxu0 0
        %1309 = vmatprep.subr.bf16.mxu0 0
        %1310 = vmatpush1.bf16.msra.mxu0 0
        %1311 = vmatprep.subr.bf16.mxu0 0
        %1312 = vmatpush1.bf16.msra.mxu0 0
        %1313 = vmatprep.subr.bf16.mxu0 0
        %1314 = vmatpush1.bf16.msra.mxu0 0
        %1315 = vmatprep.subr.bf16.mxu0 0
        %1316 = vmatpush1.bf16.msra.mxu0 0
        %1317 = vmatprep.subr.bf16.mxu0 0
        %1318 = vmatpush1.bf16.msra.mxu0 0
        %1319 = vmatprep.mubr.bf16.mxu0 0
        %1320 = vmatmul.mubr.bf16.gmra.mrb[0].mxu0 %v1282
        %v1321 = vpop.f32.mrb[0].mxu0
        %v1322 = vadd.f32 0.0, %v1321
        %v1323 = vpop.f32.mrb[0].mxu0
        %v1324 = vpop.f32.mrb[0].mxu0
        %v1325 = vadd.f32 0.0, %v1324
        %v1326 = vpop.f32.mrb[0].mxu0
        %1327 = vdwg.mxu0
        %s1328 = sld [smem:[#allocation7 + $0x180]]
        %v1329 = vstv %s1328
        %v1330 = vmul.f32 %v1322, %v1329
        %v1331 = vmul.f32 %v1325, %v1329
        %s1332 = sld [smem:[#allocation7 + $0x184]]
        %v1333 = vstv %s1332
        %v1334 = vmul.f32 %v552, %v1333
        %v1335 = vmul.f32 %v553, %v1333
        %v1336 = vadd.f32 %v1330, %v1334
        %v1337 = vadd.f32 %v1331, %v1335
        %s1338 = sld [smem:[#allocation7 + $0x188]]
        %v1339 = vstv %s1338
        %v1340 = vadd.f32 %v1336, %v1339
        %v1341 = vadd.f32 %v1337, %v1339
        %v1342 = vmax.f32 %v1340, 0.0
        %v1343 = vmax.f32 %v1341, 0.0
        %s1344 = sld [smem:[#allocation7 + $0x18c]]
        %v1345 = vstv %s1344
        %v1346 = vmul.f32 %v1342, %v1345
        %v1347 = vmul.f32 %v1343, %v1345
        %v1348 = vadd.f32 %v1346, 0.0
        %v1349 = vadd.f32 %v1347, 0.0
        %s1350 = sld [smem:[#allocation7 + $0x181]]
        %v1351 = vstv %s1350
        %v1352 = vmul.f32 %v1322, %v1351
        %v1353 = vmul.f32 %v1325, %v1351
        %s1354 = sld [smem:[#allocation7 + $0x185]]
        %v1355 = vstv %s1354
        %v1356 = vmul.f32 %v552, %v1355
        %v1357 = vmul.f32 %v553, %v1355
        %v1358 = vadd.f32 %v1352, %v1356
        %v1359 = vadd.f32 %v1353, %v1357
        %s1360 = sld [smem:[#allocation7 + $0x189]]
        %v1361 = vstv %s1360
        %v1362 = vadd.f32 %v1358, %v1361
        %v1363 = vadd.f32 %v1359, %v1361
        %v1364 = vmax.f32 %v1362, 0.0
        %v1365 = vmax.f32 %v1363, 0.0
        %s1366 = sld [smem:[#allocation7 + $0x18d]]
        %v1367 = vstv %s1366
        %v1368 = vmul.f32 %v1364, %v1367
        %v1369 = vmul.f32 %v1365, %v1367
        %v1370 = vadd.f32 %v1348, %v1368
        %v1371 = vadd.f32 %v1349, %v1369
        %s1372 = sld [smem:[#allocation7 + $0x182]]
        %v1373 = vstv %s1372
        %v1374 = vmul.f32 %v1322, %v1373
        %v1375 = vmul.f32 %v1325, %v1373
        %s1376 = sld [smem:[#allocation7 + $0x186]]
        %v1377 = vstv %s1376
        %v1378 = vmul.f32 %v552, %v1377
        %v1379 = vmul.f32 %v553, %v1377
        %v1380 = vadd.f32 %v1374, %v1378
        %v1381 = vadd.f32 %v1375, %v1379
        %s1382 = sld [smem:[#allocation7 + $0x18a]]
        %v1383 = vstv %s1382
        %v1384 = vadd.f32 %v1380, %v1383
        %v1385 = vadd.f32 %v1381, %v1383
        %v1386 = vmax.f32 %v1384, 0.0
        %v1387 = vmax.f32 %v1385, 0.0
        %s1388 = sld [smem:[#allocation7 + $0x18e]]
        %v1389 = vstv %s1388
        %v1390 = vmul.f32 %v1386, %v1389
        %v1391 = vmul.f32 %v1387, %v1389
        %v1392 = vadd.f32 %v1370, %v1390
        %v1393 = vadd.f32 %v1371, %v1391
        %s1394 = sld [smem:[#allocation7 + $0x183]]
        %v1395 = vstv %s1394
        %v1396 = vmul.f32 %v1322, %v1395
        %v1397 = vmul.f32 %v1325, %v1395
        %s1398 = sld [smem:[#allocation7 + $0x187]]
        %v1399 = vstv %s1398
        %v1400 = vmul.f32 %v552, %v1399
        %v1401 = vmul.f32 %v553, %v1399
        %v1402 = vadd.f32 %v1396, %v1400
        %v1403 = vadd.f32 %v1397, %v1401
        %s1404 = sld [smem:[#allocation7 + $0x18b]]
        %v1405 = vstv %s1404
        %v1406 = vadd.f32 %v1402, %v1405
        %v1407 = vadd.f32 %v1403, %v1405
        %v1408 = vmax.f32 %v1406, 0.0
        %v1409 = vmax.f32 %v1407, 0.0
        %s1410 = sld [smem:[#allocation7 + $0x18f]]
        %v1411 = vstv %s1410
        %v1412 = vmul.f32 %v1408, %v1411
        %v1413 = vmul.f32 %v1409, %v1411
        %v1414 = vadd.f32 %v1392, %v1412
        %v1415 = vadd.f32 %v1393, %v1413
        %v1416 = vsel %vm604, %v1414, -inf
        %1417 = vmax.xlane.f32.xlu0 %v1416
        %v1418 = vpop.xlane.xlu0 %1417
        %v1419 = vsel %vm604, %v1415, -inf
        %1420 = vmax.xlane.f32.xlu0 %v1419
        %v1421 = vpop.xlane.xlu0 %1420
        %v1422 = vsub.f32 %v1414, %v1418
        %v1423 = vsub.f32 %v1415, %v1421
        %v1424 = vmul.f32 %v1422, 1.442695
        %v1425 = vpow.pop %v1424
        %v1426 = vmul.f32 %v1423, 1.442695
        %v1427 = vpow.pop %v1426
        %v1428 = vsel %vm604, %v1425, 0.0
        %1429 = vadd.xlane.f32.xlu0 %v1428
        %v1430 = vpop.xlane.xlu0 %1429
        %v1431 = vsel %vm604, %v1427, 0.0
        %1432 = vadd.xlane.f32.xlu0 %v1431
        %v1433 = vpop.xlane.xlu0 %1432
        %v1434 = vrcp.pop %v1430
        %v1435 = vrcp.pop %v1433
        %v1436 = vmul.f32 %v1430, %v1434
        %v1437 = vmul.f32 %v1433, %v1435
        %v1438 = vsub.f32 2.0, %v1436
        %v1439 = vsub.f32 2.0, %v1437
        %v1440 = vmul.f32 %v1434, %v1438
        %v1441 = vmul.f32 %v1435, %v1439
        %v1442 = vmul.f32 %v1425, %v1440
        %v1443 = vmul.f32 %v1427, %v1441
        %v1444 = vpack.c.bf16 %v1443, %v1442
        %1445 = vrot.lane.b32.xlu0 %v603, 72
        %v1446 = vpop.permute.xlu0 %1445
        %v1448 = vsel %vm604, %v1444, 0
        %v1451 = vsel %vm608, %v1446, 0
        %1453 = vmatprep.subr.bf16.mxu0 0
        %1454 = vmatpush1.bf16.msra.mxu0 %v1451
        %1455 = vmatprep.subr.bf16.mxu0 0
        %1456 = vmatpush1.bf16.msra.mxu0 0
        %1457 = vmatprep.subr.bf16.mxu0 0
        %1458 = vmatpush1.bf16.msra.mxu0 0
        %1459 = vmatprep.subr.bf16.mxu0 0
        %1460 = vmatpush1.bf16.msra.mxu0 0
        %1461 = vmatprep.subr.bf16.mxu0 0
        %1462 = vmatpush1.bf16.msra.mxu0 0
        %1463 = vmatprep.subr.bf16.mxu0 0
        %1464 = vmatpush1.bf16.msra.mxu0 0
        %1465 = vmatprep.subr.bf16.mxu0 0
        %1466 = vmatpush1.bf16.msra.mxu0 0
        %1467 = vmatprep.subr.bf16.mxu0 0
        %1468 = vmatpush1.bf16.msra.mxu0 0
        %1469 = vmatprep.subr.bf16.mxu0 0
        %1470 = vmatpush1.bf16.msra.mxu0 0
        %1471 = vmatprep.subr.bf16.mxu0 0
        %1472 = vmatpush1.bf16.msra.mxu0 0
        %1473 = vmatprep.subr.bf16.mxu0 0
        %1474 = vmatpush1.bf16.msra.mxu0 0
        %1475 = vmatprep.subr.bf16.mxu0 0
        %1476 = vmatpush1.bf16.msra.mxu0 0
        %1477 = vmatprep.subr.bf16.mxu0 0
        %1478 = vmatpush1.bf16.msra.mxu0 0
        %1479 = vmatprep.subr.bf16.mxu0 0
        %1480 = vmatpush1.bf16.msra.mxu0 0
        %1481 = vmatprep.subr.bf16.mxu0 0
        %1482 = vmatpush1.bf16.msra.mxu0 0
        %1483 = vmatprep.subr.bf16.mxu0 0
        %1484 = vmatpush1.bf16.msra.mxu0 0
        %1485 = vmatprep.mubr.bf16.mxu0 0
        %1486 = vmatmul.mubr.bf16.gmra.mrb[0].mxu0 %v1448
        %v1487 = vpop.f32.mrb[0].mxu0
        %v1488 = vadd.f32 0.0, %v1487
        %v1489 = vpop.f32.mrb[0].mxu0
        %v1490 = vpop.f32.mrb[0].mxu0
        %v1491 = vadd.f32 0.0, %v1490
        %v1492 = vpop.f32.mrb[0].mxu0
        %1493 = vdwg.mxu0
        %1496 = vrot.lane.b32.xlu0 %v1488, 24
        %v1497 = vpop.permute.xlu0 %1496
        %1498 = vrot.lane.b32.xlu0 %v1491, 24
        %v1499 = vpop.permute.xlu0 %1498
        %vm1502 = vcmask 261312
        %1503 = vst.msk [vmem:[#allocation2] sm:$0xff] %vm1502, %v1497
        %1504 = vst.msk [vmem:[#allocation2 + $0x8] sm:$0xff] %vm1502, %v1499
        %v1505 = vld [vmem:[#allocation10] sm:$0x1]
        %v1506 = vld [vmem:[#allocation10 + $0x1] sm:$0x1]
        %v1507 = vld [vmem:[#allocation10 + $0x2] sm:$0x1]
        %v1508 = vld [vmem:[#allocation10 + $0x3] sm:$0x1]
        %v1509 = vld [vmem:[#allocation10 + $0x4] sm:$0x1]
        %v1510 = vld [vmem:[#allocation10 + $0x5] sm:$0x1]
        %v1511 = vld [vmem:[#allocation2] sm:$0xff]
        %v1512 = vld [vmem:[#allocation2 + $0x8] sm:$0xff]
        %v1513 = vpack.c.bf16 %v1512, %v1511
        %v1514 = vld [vmem:[#allocation8] sm:$0xf]
        %v1515 = vld [vmem:[#allocation8 + $0x4] sm:$0xf]
        %v1516 = vld [vmem:[#allocation8 + $0x8] sm:$0xf]
        %v1517 = vld [vmem:[#allocation8 + $0xc] sm:$0xf]
        %v1518 = vlaneseq
        %v1519 = vshrl.u32 %v1518, 7
        %v1520 = vsub.s32 0, %v1519
        %v1521 = vrot.slane %v1505, %v1520
        %v1526 = vunpack.c.l.b16 %v1514
        %v1527 = vunpack.c.l.b16 %v1515
        %v1528 = vunpack.c.l.b16 %v1516
        %v1529 = vunpack.c.l.b16 %v1517
        %v1530 = vpack.c.b16 %v1527, %v1526
        %v1531 = vpack.c.b16 %v1529, %v1528
        %v1535 = vsel %vm440, %v1513, 0
        %1537 = vmatprep.subr.bf16.mxu0 0
        %1538 = vmatpush1.bf16.msra.mxu0 %v1530
        %1539 = vmatprep.subr.bf16.mxu0 0
        %1540 = vmatpush1.bf16.msra.mxu0 %v1531
        %1541 = vmatprep.subr.bf16.mxu0 0
        %1542 = vmatpush1.bf16.msra.mxu0 0
        %1543 = vmatprep.subr.bf16.mxu0 0
        %1544 = vmatpush1.bf16.msra.mxu0 0
        %1545 = vmatprep.subr.bf16.mxu0 0
        %1546 = vmatpush1.bf16.msra.mxu0 0
        %1547 = vmatprep.subr.bf16.mxu0 0
        %1548 = vmatpush1.bf16.msra.mxu0 0
        %1549 = vmatprep.subr.bf16.mxu0 0
        %1550 = vmatpush1.bf16.msra.mxu0 0
        %1551 = vmatprep.subr.bf16.mxu0 0
        %1552 = vmatpush1.bf16.msra.mxu0 0
        %1553 = vmatprep.subr.bf16.mxu0 0
        %1554 = vmatpush1.bf16.msra.mxu0 0
        %1555 = vmatprep.subr.bf16.mxu0 0
        %1556 = vmatpush1.bf16.msra.mxu0 0
        %1557 = vmatprep.subr.bf16.mxu0 0
        %1558 = vmatpush1.bf16.msra.mxu0 0
        %1559 = vmatprep.subr.bf16.mxu0 0
        %1560 = vmatpush1.bf16.msra.mxu0 0
        %1561 = vmatprep.subr.bf16.mxu0 0
        %1562 = vmatpush1.bf16.msra.mxu0 0
        %1563 = vmatprep.subr.bf16.mxu0 0
        %1564 = vmatpush1.bf16.msra.mxu0 0
        %1565 = vmatprep.subr.bf16.mxu0 0
        %1566 = vmatpush1.bf16.msra.mxu0 0
        %1567 = vmatprep.subr.bf16.mxu0 0
        %1568 = vmatpush1.bf16.msra.mxu0 0
        %1569 = vmatprep.mubr.bf16.mxu0 0
        %1570 = vmatmul.mubr.bf16.gmra.mrb[0].mxu0 %v1535
        %v1571 = vpop.f32.mrb[0].mxu0
        %v1572 = vadd.f32 %v1521, %v1571
        %v1573 = vpop.f32.mrb[0].mxu0
        %v1574 = vpop.f32.mrb[0].mxu0
        %v1575 = vadd.f32 %v1521, %v1574
        %v1576 = vpop.f32.mrb[0].mxu0
        %1577 = vdwg.mxu0
        %v1578 = vadd.f32 %v420, %v1572
        %v1579 = vadd.f32 %v421, %v1575
        %v1580 = vsel %vm440, %v1578, 0.0
        %v1581 = vsel %vm440, %v1579, 0.0
        %v1582 = vadd.f32 %v1580, %v1581
        %v1583 = vrot.slane %v1582, 4
        %v1584 = vadd.f32 %v1582, %v1583
        %v1585 = vrot.slane %v1584, 2
        %v1586 = vadd.f32 %v1584, %v1585
        %v1587 = vrot.slane %v1586, 1
        %v1588 = vadd.f32 %v1586, %v1587
        %v1589 = vmul.f32 %v1588, 0.0625
        %v1590 = vsub.f32 %v1578, %v1589
        %v1591 = vsub.f32 %v1579, %v1589
        %v1592 = vmul.f32 %v1590, %v1590
        %v1593 = vmul.f32 %v1591, %v1591
        %v1594 = vsel %vm440, %v1592, 0.0
        %v1595 = vsel %vm440, %v1593, 0.0
        %v1596 = vadd.f32 %v1594, %v1595
        %v1597 = vrot.slane %v1596, 4
        %v1598 = vadd.f32 %v1596, %v1597
        %v1599 = vrot.slane %v1598, 2
        %v1600 = vadd.f32 %v1598, %v1599
        %v1601 = vrot.slane %v1600, 1
        %v1602 = vadd.f32 %v1600, %v1601
        %v1603 = vmul.f32 %v1602, 0.0625
        %v1604 = vadd.f32 %v1603, 1e-05
        %v1605 = vrsqrt.pop %v1604
        %v1606 = vmul.f32 %v1590, %v1605
        %v1607 = vmul.f32 %v1591, %v1605
        %v1608 = vlaneseq
        %v1609 = vshrl.u32 %v1608, 7
        %v1610 = vsub.s32 0, %v1609
        %v1611 = vrot.slane %v1507, %v1610
        %v1612 = vmul.f32 %v1606, %v1611
        %v1613 = vmul.f32 %v1607, %v1611
        %v1614 = vlaneseq
        %v1615 = vshrl.u32 %v1614, 7
        %v1616 = vsub.s32 0, %v1615
        %v1617 = vrot.slane %v1508, %v1616
        %v1618 = vadd.f32 %v1612, %v1617
        %v1619 = vadd.f32 %v1613, %v1617
        %v1620 = vpack.c.bf16 %v1619, %v1618
        %v1621 = vld [vmem:[%s8] sm:$0x1]
        %v1623 = vlaneseq
        %v1624 = vshrl.u32 %v1623, 7
        %v1625 = vsub.s32 0, %v1624
        %v1626 = vrot.slane %v1621, %v1625
        %1628 = vrot.lane.b32.xlu0 %v1530, 96
        %v1629 = vpop.permute.xlu0 %1628
        %1630 = vrot.lane.b32.xlu0 %v1531, 96
        %v1631 = vpop.permute.xlu0 %1630
        %v1635 = vsel %vm440, %v1620, 0
        %1637 = vmatprep.subr.bf16.mxu0 0
        %1638 = vmatpush1.bf16.msra.mxu0 %v1629
        %1639 = vmatprep.subr.bf16.mxu0 0
        %1640 = vmatpush1.bf16.msra.mxu0 %v1631
        %1641 = vmatprep.subr.bf16.mxu0 0
        %1642 = vmatpush1.bf16.msra.mxu0 0
        %1643 = vmatprep.subr.bf16.mxu0 0
        %1644 = vmatpush1.bf16.msra.mxu0 0
        %1645 = vmatprep.subr.bf16.mxu0 0
        %1646 = vmatpush1.bf16.msra.mxu0 0
        %1647 = vmatprep.subr.bf16.mxu0 0
        %1648 = vmatpush1.bf16.msra.mxu0 0
        %1649 = vmatprep.subr.bf16.mxu0 0
        %1650 = vmatpush1.bf16.msra.mxu0 0
        %1651 = vmatprep.subr.bf16.mxu0 0
        %1652 = vmatpush1.bf16.msra.mxu0 0
        %1653 = vmatprep.subr.bf16.mxu0 0
        %1654 = vmatpush1.bf16.msra.mxu0 0
        %1655 = vmatprep.subr.bf16.mxu0 0
        %1656 = vmatpush1.bf16.msra.mxu0 0
        %1657 = vmatprep.subr.bf16.mxu0 0
        %1658 = vmatpush1.bf16.msra.mxu0 0
        %1659 = vmatprep.subr.bf16.mxu0 0
        %1660 = vmatpush1.bf16.msra.mxu0 0
        %1661 = vmatprep.subr.bf16.mxu0 0
        %1662 = vmatpush1.bf16.msra.mxu0 0
        %1663 = vmatprep.subr.bf16.mxu0 0
        %1664 = vmatpush1.bf16.msra.mxu0 0
        %1665 = vmatprep.subr.bf16.mxu0 0
        %1666 = vmatpush1.bf16.msra.mxu0 0
        %1667 = vmatprep.subr.bf16.mxu0 0
        %1668 = vmatpush1.bf16.msra.mxu0 0
        %1669 = vmatprep.mubr.bf16.mxu0 0
        %1670 = vmatmul.mubr.bf16.gmra.mrb[0].mxu0 %v1635
        %v1671 = vpop.f32.mrb[0].mxu0
        %v1672 = vadd.f32 %v1626, %v1671
        %v1673 = vpop.f32.mrb[0].mxu0
        %v1674 = vpop.f32.mrb[0].mxu0
        %v1675 = vadd.f32 %v1626, %v1674
        %v1676 = vpop.f32.mrb[0].mxu0
        %1677 = vdwg.mxu0
        %v1678 = vmax.f32 %v1672, 0.0
        %v1679 = vmax.f32 %v1675, 0.0
        %v1680 = vpack.c.bf16 %v1679, %v1678
        %v1681 = vld [vmem:[%s6] sm:$0xf]
        %v1682 = vld [vmem:[%s6 + $0x4] sm:$0xf]
        %v1683 = vld [vmem:[%s6 + $0x8] sm:$0xf]
        %v1684 = vld [vmem:[%s6 + $0xc] sm:$0xf]
        %v1685 = vld [vmem:[%s6 + $0x10] sm:$0xf]
        %v1686 = vld [vmem:[%s6 + $0x14] sm:$0xf]
        %v1687 = vld [vmem:[%s6 + $0x18] sm:$0xf]
        %v1688 = vld [vmem:[%s6 + $0x1c] sm:$0xf]
        %v1689 = vlaneseq
        %v1690 = vshrl.u32 %v1689, 7
        %v1691 = vsub.s32 0, %v1690
        %v1692 = vrot.slane %v1506, %v1691
        %v1701 = vunpack.c.l.b16 %v1681
        %v1702 = vunpack.c.l.b16 %v1682
        %v1703 = vunpack.c.l.b16 %v1683
        %v1704 = vunpack.c.l.b16 %v1684
        %v1705 = vunpack.c.l.b16 %v1685
        %v1706 = vunpack.c.l.b16 %v1686
        %v1707 = vunpack.c.l.b16 %v1687
        %v1708 = vunpack.c.l.b16 %v1688
        %v1709 = vpack.c.b16 %v1702, %v1701
        %v1710 = vpack.c.b16 %v1704, %v1703
        %v1711 = vpack.c.b16 %v1706, %v1705
        %v1712 = vpack.c.b16 %v1708, %v1707
        %vm1717 = vcmask 523264
        %v1719 = vsel %vm1717, %v1680, 0
        %1721 = vmatprep.subr.bf16.mxu0 0
        %1722 = vmatpush1.bf16.msra.mxu0 %v1709
        %1723 = vmatprep.subr.bf16.mxu0 0
        %1724 = vmatpush1.bf16.msra.mxu0 %v1710
        %1725 = vmatprep.subr.bf16.mxu0 0
        %1726 = vmatpush1.bf16.msra.mxu0 %v1711
        %1727 = vmatprep.subr.bf16.mxu0 0
        %1728 = vmatpush1.bf16.msra.mxu0 %v1712
        %1729 = vmatprep.subr.bf16.mxu0 0
        %1730 = vmatpush1.bf16.msra.mxu0 0
        %1731 = vmatprep.subr.bf16.mxu0 0
        %1732 = vmatpush1.bf16.msra.mxu0 0
        %1733 = vmatprep.subr.bf16.mxu0 0
        %1734 = vmatpush1.bf16.msra.mxu0 0
        %1735 = vmatprep.subr.bf16.mxu0 0
        %1736 = vmatpush1.bf16.msra.mxu0 0
        %1737 = vmatprep.subr.bf16.mxu0 0
        %1738 = vmatpush1.bf16.msra.mxu0 0
        %1739 = vmatprep.subr.bf16.mxu0 0
        %1740 = vmatpush1.bf16.msra.mxu0 0
        %1741 = vmatprep.subr.bf16.mxu0 0
        %1742 = vmatpush1.bf16.msra.mxu0 0
        %1743 = vmatprep.subr.bf16.mxu0 0
        %1744 = vmatpush1.bf16.msra.mxu0 0
        %1745 = vmatprep.subr.bf16.mxu0 0
        %1746 = vmatpush1.bf16.msra.mxu0 0
        %1747 = vmatprep.subr.bf16.mxu0 0
        %1748 = vmatpush1.bf16.msra.mxu0 0
        %1749 = vmatprep.subr.bf16.mxu0 0
        %1750 = vmatpush1.bf16.msra.mxu0 0
        %1751 = vmatprep.subr.bf16.mxu0 0
        %1752 = vmatpush1.bf16.msra.mxu0 0
        %1753 = vmatprep.mubr.bf16.mxu0 0
        %1754 = vmatmul.mubr.bf16.gmra.mrb[0].mxu0 %v1719
        %v1755 = vpop.f32.mrb[0].mxu0
        %v1756 = vadd.f32 %v1692, %v1755
        %v1757 = vpop.f32.mrb[0].mxu0
        %v1758 = vpop.f32.mrb[0].mxu0
        %v1759 = vadd.f32 %v1692, %v1758
        %v1760 = vpop.f32.mrb[0].mxu0
        %1761 = vdwg.mxu0
        %v1762 = vadd.f32 %v1618, %v1756
        %v1763 = vadd.f32 %v1619, %v1759
        %v1764 = vsel %vm440, %v1762, 0.0
        %v1765 = vsel %vm440, %v1763, 0.0
        %v1766 = vadd.f32 %v1764, %v1765
        %v1767 = vrot.slane %v1766, 4
        %v1768 = vadd.f32 %v1766, %v1767
        %v1769 = vrot.slane %v1768, 2
        %v1770 = vadd.f32 %v1768, %v1769
        %v1771 = vrot.slane %v1770, 1
        %v1772 = vadd.f32 %v1770, %v1771
        %v1773 = vmul.f32 %v1772, 0.0625
        %v1774 = vsub.f32 %v1762, %v1773
        %v1775 = vsub.f32 %v1763, %v1773
        %v1776 = vmul.f32 %v1774, %v1774
        %v1777 = vmul.f32 %v1775, %v1775
        %v1778 = vsel %vm440, %v1776, 0.0
        %v1779 = vsel %vm440, %v1777, 0.0
        %v1780 = vadd.f32 %v1778, %v1779
        %v1781 = vrot.slane %v1780, 4
        %v1782 = vadd.f32 %v1780, %v1781
        %v1783 = vrot.slane %v1782, 2
        %v1784 = vadd.f32 %v1782, %v1783
        %v1785 = vrot.slane %v1784, 1
        %v1786 = vadd.f32 %v1784, %v1785
        %v1787 = vmul.f32 %v1786, 0.0625
        %v1788 = vadd.f32 %v1787, 1e-05
        %v1789 = vrsqrt.pop %v1788
        %v1790 = vmul.f32 %v1774, %v1789
        %v1791 = vmul.f32 %v1775, %v1789
        %v1792 = vlaneseq
        %v1793 = vshrl.u32 %v1792, 7
        %v1794 = vsub.s32 0, %v1793
        %v1795 = vrot.slane %v1509, %v1794
        %v1796 = vmul.f32 %v1790, %v1795
        %v1797 = vmul.f32 %v1791, %v1795
        %v1798 = vlaneseq
        %v1799 = vshrl.u32 %v1798, 7
        %v1800 = vsub.s32 0, %v1799
        %v1801 = vrot.slane %v1510, %v1800
        %v1802 = vadd.f32 %v1796, %v1801
        %v1803 = vadd.f32 %v1797, %v1801
        %1804 = vst.msk [vmem:[%s405] sm:$0xff] %vm440, %v1802
        %1805 = vst.msk [vmem:[%s405 + $0x8] sm:$0xff] %vm440, %v1803
        %s1806 = sand.u32 %s238, 1
        %s1807 = scalar_lea.sflag [#allocation5], %s1806
        %s1808 = sand.u32 %s238, 1
        %s1809 = smul.addr %s1808, 16
        %s1810 = scalar_lea.vmem [#allocation11], %s1809
        // Predicated region
        $region73: #{matnet_layer_forward.3} parent=55 // pred_check
          %p1811 = pneg %p248
        $region74: #{matnet_layer_forward.3} parent=55 // pred_check_branch
          %1813 = sbr.rel (%p1811) target = $region76
        $region75: #{matnet_layer_forward.3} parent=55 // pred_region
          %s1815 = ssub.s32 256, 256
          %1816 = vsyncadd %s1807, %s1815
          %s1817 = smul.addr %s26, 2
          %s1818 = smul.addr %s1817, 128
          %s1819 = scalar_lea.hbm %s9, %s1818
          %s1820 = sshll.u32 %s1810, 4
          %s1821 = int_to_ptr.vmem [resolvable:$true] %s1820
          %1826 = dma.vmem_to_hbm [thread:$0]  %s1821, 256, %s1819, %s1807, 128, 128, 8
        $region76: #{matnet_layer_forward.3} parent=55 // pred_fallthru
          _
      $region56: #{matnet_layer_forward.3} parent=5 // pred_fallthru
        _
      %p1827 = scmp.le.s32.totalorder 2, %s21
      // Predicated region
      $region77: #{matnet_layer_forward.3} parent=5 // pred_check
        %p1828 = pneg %p1827
      $region78: #{matnet_layer_forward.3} parent=5 // pred_check_branch
        %1830 = sbr.rel (%p1828) target = $region80
      $region79: #{matnet_layer_forward.3} parent=5 // pred_region
        %s1831 = ssub.s32 %s21, 2
        // Predicated region
        $region81: #{matnet_layer_forward.3} parent=79 // pred_check
          %p1832 = pneg %p254
        $region82: #{matnet_layer_forward.3} parent=79 // pred_check_branch
          %1834 = sbr.rel (%p1832) target = $region84
        $region83: #{matnet_layer_forward.3} parent=79 // pred_region
          %s1835 = sand.u32 %s239, 1
          %s1836 = scalar_lea.sflag [#allocation5], %s1835
          %s1837 = sand.u32 %s239, 1
          %s1838 = smul.addr %s1837, 16
          %s1839 = scalar_lea.vmem [#allocation11], %s1838
          %1840 = dma.done %s1836, 256
        $region84: #{matnet_layer_forward.3} parent=79 // pred_fallthru
          _
      $region80: #{matnet_layer_forward.3} parent=5 // pred_fallthru
        _
    $region6: #{matnet_layer_forward.3} parent=1 // loop_footer
      %s25 = sadd.s32 1, %s21
    $region7: #{matnet_layer_forward.3} parent=1 // loop_footer_branch
      %20 = sbr.rel target = $region3
    $region8: #{matnet_layer_forward.3} parent=1 // loop_exit
      _
    %1841 = vsyncpa [#allocation4], 1
    %s1842 = scalar_lea.sflag [#allocation4], 1
    %1843 = vsyncpa %s1842, 1
    %1844 = vsyncpa [#allocation9], 1
    %1845 = vsyncpa [#allocation5], 1
    %s1846 = scalar_lea.sflag [#allocation5], 1
    %1847 = vsyncpa %s1846, 1
    %1848 = vsyncpa [#allocation6], 1
    %s1849 = scalar_lea.sflag [#allocation6], 1
    %1850 = vsyncpa %s1849, 1

</llo_original>
